<compile_context>
chip_gen: v7x
topology: tpu7x:2x2x1
jax: 0.10.0
libtpu: 0.0.40
codegen_flags: <defaults>
</compile_context>

<pallas_src>
import numpy as np
import jax
import jax.numpy as jnp
from jax import lax
from jax.experimental import pallas as pl
from jax.experimental.pallas import tpu as pltpu

SELU_ALPHA = 1.6732632423543772848170429916717
SELU_SCALE = 1.0507009873554804934193349852946
BN_EPS = 1e-5


def _selu(x):
    return SELU_SCALE * jnp.where(x > 0, x, SELU_ALPHA * (jnp.exp(x) - 1.0))


# ----------------------------------------------------------------------------
# Fused Pallas kernel
# ----------------------------------------------------------------------------
def _make_fused_kernel(C, Cout, D, H2, W2):
    M = D * H2 * W2          # flattened (d, h, w) spatial extent (lane dim)

    def kernel(x_ref, e_ref, m_ref, w3_ref, w1_ref, pc_ref, po_ref, o_ref):
        pc = pc_ref[...]     # (C, 8)    per-channel params (C-sized)
        po = po_ref[...]     # (Cout, 4) per-channel params (Cout-sized)

        # Fused nearest-neighbour (1,2,2) upsample as a one-hot expansion
        # matmul: (C, D*H*W) @ (D*H*W, M) -> (C, M), lane-dense.
        # E is stored bf16 (exact 0/1); convert to f32 so the selected input
        # values are untouched.
        e = e_ref[...].astype(jnp.float32)
        a = jnp.dot(x_ref[0], e, preferred_element_type=jnp.float32)

        def conv3x3(v, li):
            """3x3 'same' conv (C -> C) on the lane-flattened (d,h,w) layout.

            All 9 taps are folded into one (C, 9C) @ (9C, M) matmul.  Shifted
            taps use a circular lane roll; the masks zero both the in-slice
            boundary taps and every wrapped element, so the result equals a
            zero-padded 'same' conv per depth slice.
            """
            taps = []
            t = 0
            for dh in (-1, 0, 1):
                for dw in (-1, 0, 1):
                    s = dh * W2 + dw
                    if s == 0:
                        xs = v
                    else:
                        xs = (pltpu.roll(v, shift=(-s) % M, axis=1)
                              * m_ref[pl.ds(t, 1), :])
                    taps.append(xs)
                    t += 1
            stacked = jnp.concatenate(taps, axis=0)          # (9C, M)
            return jnp.dot(w3_ref[li], stacked,
                           preferred_element_type=jnp.float32)

        # entry_conv (+bias) -> SELU -> bn1 -> SELU
        a = _selu(conv3x3(a, 0) + pc[:, 0:1])
        a = _selu(a * pc[:, 1:2] + pc[:, 2:3])
        # base_block conv1 -> bn2 (conv bias folded into the shift) -> SELU
        a = conv3x3(a, 1)
        a = _selu(a * pc[:, 3:4] + pc[:, 4:5])
        # base_block conv2 (+bias)
        a = conv3x3(a, 2) + pc[:, 5:6]
        # output_conv1 (+bias) -> SELU
        a = _selu(conv3x3(a, 3) + pc[:, 6:7])
        # output_conv2 (1x1, +bias) -> SELU -> final BatchNorm affine
        a = jnp.dot(w1_ref[...], a, preferred_element_type=jnp.float32)
        a = _selu(a + po[:, 0:1])
        a = a * po[:, 1:2] + po[:, 2:3]

        o_ref[0] = a

    return kernel


# ----------------------------------------------------------------------------
# Host-side constant / parameter packing (one-time)
# ----------------------------------------------------------------------------
def _upsample_onehot(D, H, W):
    """(D*H*W, D*2H*2W) one-hot matrix: x_flat @ E == nearest (1,2,2) upsample.
    Stored in bf16 (exact for 0/1) to halve HBM/VMEM traffic."""
    H2, W2 = 2 * H, 2 * W
    d = np.arange(D)[:, None, None]
    h2 = np.arange(H2)[None, :, None]
    w2 = np.arange(W2)[None, None, :]
    src = (d * (H * W) + (h2 // 2) * W + (w2 // 2)).reshape(-1)
    E = np.zeros((D * H * W, D * H2 * W2), np.float32)
    E[src, np.arange(D * H2 * W2)] = 1.0
    return jnp.asarray(E, dtype=jnp.bfloat16)


def _tap_masks(D, H2, W2):
    """(9, D*H2*W2) 0/1 masks: zero the taps whose source pixel would lie
    outside the (H2, W2) grid of the same depth slice.  These same masks also
    zero every element that a circular lane roll wraps around the flat-array
    ends (any wrapping tap necessarily points outside its slice)."""
    masks = np.zeros((9, D * H2 * W2), np.float32)
    t = 0
    for dh in (-1, 0, 1):
        for dw in (-1, 0, 1):
            m = np.zeros((D, H2, W2), np.float32)
            m[:, max(0, -dh):H2 - max(0, dh), max(0, -dw):W2 - max(0, dw)] = 1.0
            masks[t] = m.reshape(-1)
            t += 1
    return jnp.asarray(masks)


def prepare_params(p, D, H, W):
    """One-time packing of module parameters for the fused kernel."""
    C = p['we'].shape[2]
    Cout = p['wo2'].shape[1]

    def taps_mat(w):
        # (3,3,Ci,Co) HWIO -> (Co, 9*Ci): tap-major column blocks, each block
        # t holding w[kh,kw,:,:].T so that [W_0 .. W_8] @ [xs_0; ..; xs_8]
        # equals the per-tap sum of the original conv.
        t = jnp.transpose(w, (0, 1, 3, 2)).reshape(9, w.shape[3], w.shape[2])
        return jnp.transpose(t, (1, 0, 2)).reshape(w.shape[3], 9 * w.shape[2])

    w3 = jnp.stack([taps_mat(p['we']), taps_mat(p['wb1']),
                    taps_mat(p['wb2']), taps_mat(p['wo1'])])   # (4, C, 9C)
    w1 = p['wo2'].T                                            # (Cout, C)

    # fold conv1's bias into bn2's shift:  (x + b)*s + t == x*s + (b*s + t)
    bn2_shift_f = p['bn2_scale'] * p['bb1'] + p['bn2_shift']
    pc = jnp.stack([p['be'], p['bn1_scale'], p['bn1_shift'],
                    p['bn2_scale'], bn2_shift_f, p['bb2'], p['bo1'],
                    jnp.zeros_like(p['be'])], axis=1)          # (C, 8)
    po = jnp.stack([p['bo2'], p['bnf_scale'], p['bnf_shift'],
                    jnp.zeros_like(p['bo2'])], axis=1)         # (Cout, 4)

    return {
        'E': _upsample_onehot(D, H, W),
        'masks': _tap_masks(D, 2 * H, 2 * W),
        'w3': w3, 'w1': w1, 'pc': pc, 'po': po,
    }


# ----------------------------------------------------------------------------
# Forward pass (single fused pallas_call) and pure-JAX reference
# ----------------------------------------------------------------------------
@jax.jit
def upsample_conv_block3d_forward(x_ncdhw, prep):
    N, C, D, H, W = x_ncdhw.shape
    H2, W2 = 2 * H, 2 * W
    Mlo, M = D * H * W, D * H2 * W2
    Cout = prep['w1'].shape[0]

    x_flat = x_ncdhw.reshape(N, C, Mlo)          # free row-major reshape

    out = pl.pallas_call(
        _make_fused_kernel(C, Cout, D, H2, W2),
        out_shape=jax.ShapeDtypeStruct((N, Cout, M), jnp.float32),
        grid_spec=pltpu.PrefetchScalarGridSpec(
            num_scalar_prefetch=0,
            grid=(N,),
            in_specs=[
                pl.BlockSpec((1, C, Mlo), lambda n: (n, 0, 0)),      # x
                pl.BlockSpec((Mlo, M), lambda n: (0, 0)),            # E (bf16)
                pl.BlockSpec((9, M), lambda n: (0, 0)),              # masks
                pl.BlockSpec((4, C, 9 * C), lambda n: (0, 0, 0)),    # 3x3 w
                pl.BlockSpec((Cout, C), lambda n: (0, 0)),           # 1x1 w
                pl.BlockSpec((C, 8), lambda n: (0, 0)),              # pc
                pl.BlockSpec((Cout, 4), lambda n: (0, 0)),           # po
            ],
            out_specs=pl.BlockSpec((1, Cout, M), lambda n: (n, 0, 0)),
        ),
        compiler_params=pltpu.CompilerParams(
            dimension_semantics=("parallel",)),
    )(x_flat, prep['E'], prep['masks'], prep['w3'], prep['w1'],
      prep['pc'], prep['po'])

    # lane-dense (N, Cout, D*H2*W2) -> NCDHW; row-major split, free in XLA
    return out.reshape(N, Cout, D, H2, W2)


def reference_forward(x_ncdhw, p):
    N, C, D, H, W = x_ncdhw.shape
    x = jnp.repeat(jnp.repeat(x_ncdhw, 2, axis=3), 2, axis=4)
    x = jnp.transpose(x, (0, 2, 3, 4, 1)).reshape(N * D, 2 * H, 2 * W, C)

    def conv(x, w, b):
        return lax.conv_general_dilated(
            x, w, (1, 1), 'SAME',
            dimension_numbers=('NHWC', 'HWIO', 'NHWC')) + b

    y = _selu(conv(x, p['we'], p['be']))
    y = _selu(y * p['bn1_scale'] + p['bn1_shift'])
    y = conv(y, p['wb1'], p['bb1'])
    y = _selu(y * p['bn2_scale'] + p['bn2_shift'])
    y = conv(y, p['wb2'], p['bb2'])
    y = _selu(conv(y, p['wo1'], p['bo1']))
    y = _selu(jnp.einsum('bhwc,cd->bhwd', y, p['wo2']) + p['bo2'])
    y = y * p['bnf_scale'] + p['bnf_shift']
    cout = p['wo2'].shape[-1]
    return y.reshape(N, D, 2 * H, 2 * W, cout).transpose(0, 4, 1, 2, 3)


# ----------------------------------------------------------------------------
# Deterministic synthetic parameters (BatchNorm3d in eval mode)
# ----------------------------------------------------------------------------
def make_bn_affine(key, c):
    k1, k2, k3, k4 = jax.random.split(key, 4)
    gamma = 1.0 + 0.2 * jax.random.normal(k1, (c,), jnp.float32)
    beta = 0.1 * jax.random.normal(k2, (c,), jnp.float32)
    running_mean = 0.1 * jax.random.normal(k3, (c,), jnp.float32)
    running_var = 1.0 + 0.3 * jax.random.uniform(k4, (c,), jnp.float32)
    scale = gamma / jnp.sqrt(running_var + BN_EPS)
    shift = beta - running_mean * scale
    return scale, shift


def init_params(key, cin, cout):
    keys = jax.random.split(key, 16)

    def conv_w(k, ci, co, ks):
        return 0.3 * jax.random.normal(k, (ks, ks, ci, co), jnp.float32)

    def bias(k, co):
        return 0.1 * jax.random.normal(k, (co,), jnp.float32)

    p = {}
    p['we'], p['be'] = conv_w(keys[0], cin, cin, 3), bias(keys[1], cin)
    p['wb1'], p['bb1'] = conv_w(keys[2], cin, cin, 3), bias(keys[3], cin)
    p['wb2'], p['bb2'] = conv_w(keys[4], cin, cin, 3), bias(keys[5], cin)
    p['wo1'], p['bo1'] = conv_w(keys[6], cin, cin, 3), bias(keys[7], cin)
    p['wo2'] = 0.3 * jax.random.normal(keys[8], (cin, cout), jnp.float32)
    p['bo2'] = bias(keys[9], cout)
    p['bn1_scale'], p['bn1_shift'] = make_bn_affine(keys[10], cin)
    p['bn2_scale'], p['bn2_shift'] = make_bn_affine(keys[11], cin)
    p['bnf_scale'], p['bnf_shift'] = make_bn_affine(keys[12], cout)
    return p


if __name__ == "__main__":
    key = jax.random.PRNGKey(0)
    kx, kp = jax.random.split(key)

    N, CIN, COUT, D, H, W = 2, 4, 8, 3, 8, 8
    x = jax.random.normal(kx, (N, CIN, D, H, W), jnp.float32)  # NCDHW
    params = init_params(kp, CIN, COUT)
    prep = prepare_params(params, D, H, W)   # one-time packing

    out = upsample_conv_block3d_forward(x, prep)
    out = jax.block_until_ready(out)

    ref = jax.block_until_ready(reference_forward(x, params))

    assert out.shape == (N, COUT, D, 2 * H, 2 * W), out.shape
    np.testing.assert_allclose(np.asarray(out), np.asarray(ref),
                               rtol=1e-4, atol=1e-4)
    print("KERNEL_OK")
</pallas_src>

<mosaic_0001>
module attributes {stable_mosaic.version = 11 : i64} {
  func.func @kernel(%arg0: i32, %arg1: memref<1x4x192xf32, #tpu.memory_space<vmem>>, %arg2: memref<192x768xbf16, #tpu.memory_space<vmem>>, %arg3: memref<9x768xf32, #tpu.memory_space<vmem>>, %arg4: memref<4x4x36xf32, #tpu.memory_space<vmem>>, %arg5: memref<8x4xf32, #tpu.memory_space<vmem>>, %arg6: memref<4x8xf32, #tpu.memory_space<vmem>>, %arg7: memref<8x4xf32, #tpu.memory_space<vmem>>, %arg8: memref<1x8x768xf32, #tpu.memory_space<vmem>>) attributes {dimension_semantics = [#tpu.dimension_semantics<parallel>], iteration_bounds = array<i64: 2>, scalar_prefetch = 0 : i64, scratch_operands = 0 : i64, tpu.core_type = #tpu.core_type<tc>, window_params = [{transform_indices = @transform_0, window_bounds = array<i64: 1, 4, 192>}, {pipeline_mode = #tpu.pipeline_mode<synchronous>, transform_indices = @transform_1, window_bounds = array<i64: 192, 768>}, {pipeline_mode = #tpu.pipeline_mode<synchronous>, transform_indices = @transform_2, window_bounds = array<i64: 9, 768>}, {pipeline_mode = #tpu.pipeline_mode<synchronous>, transform_indices = @transform_3, window_bounds = array<i64: 4, 4, 36>}, {pipeline_mode = #tpu.pipeline_mode<synchronous>, transform_indices = @transform_4, window_bounds = array<i64: 8, 4>}, {pipeline_mode = #tpu.pipeline_mode<synchronous>, transform_indices = @transform_5, window_bounds = array<i64: 4, 8>}, {pipeline_mode = #tpu.pipeline_mode<synchronous>, transform_indices = @transform_6, window_bounds = array<i64: 8, 4>}, {transform_indices = @transform_7, window_bounds = array<i64: 1, 8, 768>}]} {
    %c0 = arith.constant 0 : index
    %c0_0 = arith.constant 0 : index
    %0 = vector.load %arg6[%c0, %c0_0] : memref<4x8xf32, #tpu.memory_space<vmem>>, vector<4x8xf32>
    %c0_1 = arith.constant 0 : index
    %c0_2 = arith.constant 0 : index
    %1 = vector.load %arg7[%c0_1, %c0_2] : memref<8x4xf32, #tpu.memory_space<vmem>>, vector<8x4xf32>
    %c0_3 = arith.constant 0 : index
    %c0_4 = arith.constant 0 : index
    %2 = vector.load %arg2[%c0_3, %c0_4] : memref<192x768xbf16, #tpu.memory_space<vmem>>, vector<192x768xbf16>
    %3 = arith.extf %2 : vector<192x768xbf16> to vector<192x768xf32>
    %c0_5 = arith.constant 0 : index
    %c0_6 = arith.constant 0 : index
    %c0_7 = arith.constant 0 : index
    %4 = vector.load %arg1[%c0_5, %c0_6, %c0_7] : memref<1x4x192xf32, #tpu.memory_space<vmem>>, vector<1x4x192xf32>
    %5 = vector.shape_cast %4 : vector<1x4x192xf32> to vector<4x192xf32>
    %cst = arith.constant dense<0.000000e+00> : vector<4x768xf32>
    %6 = tpu.matmul %5, %3, %cst {dimension_numbers = #tpu.dot_dimension_numbers<[1], [0], [0], [1], [0, 0, 1, 1], [], []>} : vector<4x192xf32>, vector<192x768xf32>, vector<4x768xf32> -> vector<4x768xf32>
    %c17_i32 = arith.constant 17 : i32
    %7 = tpu.dynamic_rotate %6 by %c17_i32 dim 1 : vector<4x768xf32>, i32 -> vector<4x768xf32>
    %c0_8 = arith.constant 0 : index
    %c0_9 = arith.constant 0 : index
    %8 = vector.load %arg3[%c0_8, %c0_9] : memref<9x768xf32, #tpu.memory_space<vmem>>, vector<1x768xf32>
    %9 = vector.broadcast %8 : vector<1x768xf32> to vector<4x768xf32>
    %10 = arith.mulf %7, %9 : vector<4x768xf32>
    %c16_i32 = arith.constant 16 : i32
    %11 = tpu.dynamic_rotate %6 by %c16_i32 dim 1 : vector<4x768xf32>, i32 -> vector<4x768xf32>
    %c1 = arith.constant 1 : index
    %c0_10 = arith.constant 0 : index
    %12 = vector.load %arg3[%c1, %c0_10] : memref<9x768xf32, #tpu.memory_space<vmem>>, vector<1x768xf32>
    %13 = vector.broadcast %12 : vector<1x768xf32> to vector<4x768xf32>
    %14 = arith.mulf %11, %13 : vector<4x768xf32>
    %c15_i32 = arith.constant 15 : i32
    %15 = tpu.dynamic_rotate %6 by %c15_i32 dim 1 : vector<4x768xf32>, i32 -> vector<4x768xf32>
    %c2 = arith.constant 2 : index
    %c0_11 = arith.constant 0 : index
    %16 = vector.load %arg3[%c2, %c0_11] : memref<9x768xf32, #tpu.memory_space<vmem>>, vector<1x768xf32>
    %17 = vector.broadcast %16 : vector<1x768xf32> to vector<4x768xf32>
    %18 = arith.mulf %15, %17 : vector<4x768xf32>
    %c1_i32 = arith.constant 1 : i32
    %19 = tpu.dynamic_rotate %6 by %c1_i32 dim 1 : vector<4x768xf32>, i32 -> vector<4x768xf32>
    %c3 = arith.constant 3 : index
    %c0_12 = arith.constant 0 : index
    %20 = vector.load %arg3[%c3, %c0_12] : memref<9x768xf32, #tpu.memory_space<vmem>>, vector<1x768xf32>
    %21 = vector.broadcast %20 : vector<1x768xf32> to vector<4x768xf32>
    %22 = arith.mulf %19, %21 : vector<4x768xf32>
    %c767_i32 = arith.constant 767 : i32
    %23 = tpu.dynamic_rotate %6 by %c767_i32 dim 1 : vector<4x768xf32>, i32 -> vector<4x768xf32>
    %c5 = arith.constant 5 : index
    %c0_13 = arith.constant 0 : index
    %24 = vector.load %arg3[%c5, %c0_13] : memref<9x768xf32, #tpu.memory_space<vmem>>, vector<1x768xf32>
    %25 = vector.broadcast %24 : vector<1x768xf32> to vector<4x768xf32>
    %26 = arith.mulf %23, %25 : vector<4x768xf32>
    %c753_i32 = arith.constant 753 : i32
    %27 = tpu.dynamic_rotate %6 by %c753_i32 dim 1 : vector<4x768xf32>, i32 -> vector<4x768xf32>
    %c6 = arith.constant 6 : index
    %c0_14 = arith.constant 0 : index
    %28 = vector.load %arg3[%c6, %c0_14] : memref<9x768xf32, #tpu.memory_space<vmem>>, vector<1x768xf32>
    %29 = vector.broadcast %28 : vector<1x768xf32> to vector<4x768xf32>
    %30 = arith.mulf %27, %29 : vector<4x768xf32>
    %c752_i32 = arith.constant 752 : i32
    %31 = tpu.dynamic_rotate %6 by %c752_i32 dim 1 : vector<4x768xf32>, i32 -> vector<4x768xf32>
    %c7 = arith.constant 7 : index
    %c0_15 = arith.constant 0 : index
    %32 = vector.load %arg3[%c7, %c0_15] : memref<9x768xf32, #tpu.memory_space<vmem>>, vector<1x768xf32>
    %33 = vector.broadcast %32 : vector<1x768xf32> to vector<4x768xf32>
    %34 = arith.mulf %31, %33 : vector<4x768xf32>
    %c751_i32 = arith.constant 751 : i32
    %35 = tpu.dynamic_rotate %6 by %c751_i32 dim 1 : vector<4x768xf32>, i32 -> vector<4x768xf32>
    %c8 = arith.constant 8 : index
    %c0_16 = arith.constant 0 : index
    %36 = vector.load %arg3[%c8, %c0_16] : memref<9x768xf32, #tpu.memory_space<vmem>>, vector<1x768xf32>
    %37 = vector.broadcast %36 : vector<1x768xf32> to vector<4x768xf32>
    %38 = arith.mulf %35, %37 : vector<4x768xf32>
    %39 = tpu.concatenate %10, %14, %18, %22, %6, %26, %30, %34, %38 in 0 : vector<4x768xf32>, vector<4x768xf32>, vector<4x768xf32>, vector<4x768xf32>, vector<4x768xf32>, vector<4x768xf32>, vector<4x768xf32>, vector<4x768xf32>, vector<4x768xf32> -> vector<36x768xf32>
    %c0_17 = arith.constant 0 : index
    %c0_18 = arith.constant 0 : index
    %c0_19 = arith.constant 0 : index
    %40 = vector.load %arg4[%c0_17, %c0_18, %c0_19] : memref<4x4x36xf32, #tpu.memory_space<vmem>>, vector<1x4x36xf32>
    %41 = vector.shape_cast %40 : vector<1x4x36xf32> to vector<4x36xf32>
    %cst_20 = arith.constant dense<0.000000e+00> : vector<4x768xf32>
    %42 = tpu.matmul %41, %39, %cst_20 {dimension_numbers = #tpu.dot_dimension_numbers<[1], [0], [0], [1], [0, 0, 1, 1], [], []>} : vector<4x36xf32>, vector<36x768xf32>, vector<4x768xf32> -> vector<4x768xf32>
    %43 = vector.extract_strided_slice %0 {offsets = [0, 0], sizes = [4, 1], strides = [1, 1]} : vector<4x8xf32> to vector<4x1xf32>
    %44 = vector.broadcast %43 : vector<4x1xf32> to vector<4x768xf32>
    %45 = arith.addf %42, %44 : vector<4x768xf32>
    %cst_21 = arith.constant 0.000000e+00 : f32
    %46 = vector.broadcast %cst_21 : f32 to vector<4x768xf32>
    %47 = arith.cmpf ogt, %45, %46 : vector<4x768xf32>
    %48 = math.exp %45 : vector<4x768xf32>
    %cst_22 = arith.constant 1.000000e+00 : f32
    %49 = vector.broadcast %cst_22 : f32 to vector<4x768xf32>
    %50 = arith.subf %48, %49 : vector<4x768xf32>
    %cst_23 = arith.constant 1.67326319 : f32
    %51 = vector.broadcast %cst_23 : f32 to vector<4x768xf32>
    %52 = arith.mulf %51, %50 : vector<4x768xf32>
    %53 = arith.select %47, %45, %52 : vector<4x768xi1>, vector<4x768xf32>
    %cst_24 = arith.constant 1.05070102 : f32
    %54 = vector.broadcast %cst_24 : f32 to vector<4x768xf32>
    %55 = arith.mulf %54, %53 : vector<4x768xf32>
    %56 = vector.extract_strided_slice %0 {offsets = [0, 1], sizes = [4, 1], strides = [1, 1]} : vector<4x8xf32> to vector<4x1xf32>
    %57 = vector.broadcast %56 : vector<4x1xf32> to vector<4x768xf32>
    %58 = arith.mulf %55, %57 : vector<4x768xf32>
    %59 = vector.extract_strided_slice %0 {offsets = [0, 2], sizes = [4, 1], strides = [1, 1]} : vector<4x8xf32> to vector<4x1xf32>
    %60 = vector.broadcast %59 : vector<4x1xf32> to vector<4x768xf32>
    %61 = arith.addf %58, %60 : vector<4x768xf32>
    %cst_25 = arith.constant 0.000000e+00 : f32
    %62 = vector.broadcast %cst_25 : f32 to vector<4x768xf32>
    %63 = arith.cmpf ogt, %61, %62 : vector<4x768xf32>
    %64 = math.exp %61 : vector<4x768xf32>
    %cst_26 = arith.constant 1.000000e+00 : f32
    %65 = vector.broadcast %cst_26 : f32 to vector<4x768xf32>
    %66 = arith.subf %64, %65 : vector<4x768xf32>
    %cst_27 = arith.constant 1.67326319 : f32
    %67 = vector.broadcast %cst_27 : f32 to vector<4x768xf32>
    %68 = arith.mulf %67, %66 : vector<4x768xf32>
    %69 = arith.select %63, %61, %68 : vector<4x768xi1>, vector<4x768xf32>
    %cst_28 = arith.constant 1.05070102 : f32
    %70 = vector.broadcast %cst_28 : f32 to vector<4x768xf32>
    %71 = arith.mulf %70, %69 : vector<4x768xf32>
    %c17_i32_29 = arith.constant 17 : i32
    %72 = tpu.dynamic_rotate %71 by %c17_i32_29 dim 1 : vector<4x768xf32>, i32 -> vector<4x768xf32>
    %c0_30 = arith.constant 0 : index
    %c0_31 = arith.constant 0 : index
    %73 = vector.load %arg3[%c0_30, %c0_31] : memref<9x768xf32, #tpu.memory_space<vmem>>, vector<1x768xf32>
    %74 = vector.broadcast %73 : vector<1x768xf32> to vector<4x768xf32>
    %75 = arith.mulf %72, %74 : vector<4x768xf32>
    %c16_i32_32 = arith.constant 16 : i32
    %76 = tpu.dynamic_rotate %71 by %c16_i32_32 dim 1 : vector<4x768xf32>, i32 -> vector<4x768xf32>
    %c1_33 = arith.constant 1 : index
    %c0_34 = arith.constant 0 : index
    %77 = vector.load %arg3[%c1_33, %c0_34] : memref<9x768xf32, #tpu.memory_space<vmem>>, vector<1x768xf32>
    %78 = vector.broadcast %77 : vector<1x768xf32> to vector<4x768xf32>
    %79 = arith.mulf %76, %78 : vector<4x768xf32>
    %c15_i32_35 = arith.constant 15 : i32
    %80 = tpu.dynamic_rotate %71 by %c15_i32_35 dim 1 : vector<4x768xf32>, i32 -> vector<4x768xf32>
    %c2_36 = arith.constant 2 : index
    %c0_37 = arith.constant 0 : index
    %81 = vector.load %arg3[%c2_36, %c0_37] : memref<9x768xf32, #tpu.memory_space<vmem>>, vector<1x768xf32>
    %82 = vector.broadcast %81 : vector<1x768xf32> to vector<4x768xf32>
    %83 = arith.mulf %80, %82 : vector<4x768xf32>
    %c1_i32_38 = arith.constant 1 : i32
    %84 = tpu.dynamic_rotate %71 by %c1_i32_38 dim 1 : vector<4x768xf32>, i32 -> vector<4x768xf32>
    %c3_39 = arith.constant 3 : index
    %c0_40 = arith.constant 0 : index
    %85 = vector.load %arg3[%c3_39, %c0_40] : memref<9x768xf32, #tpu.memory_space<vmem>>, vector<1x768xf32>
    %86 = vector.broadcast %85 : vector<1x768xf32> to vector<4x768xf32>
    %87 = arith.mulf %84, %86 : vector<4x768xf32>
    %c767_i32_41 = arith.constant 767 : i32
    %88 = tpu.dynamic_rotate %71 by %c767_i32_41 dim 1 : vector<4x768xf32>, i32 -> vector<4x768xf32>
    %c5_42 = arith.constant 5 : index
    %c0_43 = arith.constant 0 : index
    %89 = vector.load %arg3[%c5_42, %c0_43] : memref<9x768xf32, #tpu.memory_space<vmem>>, vector<1x768xf32>
    %90 = vector.broadcast %89 : vector<1x768xf32> to vector<4x768xf32>
    %91 = arith.mulf %88, %90 : vector<4x768xf32>
    %c753_i32_44 = arith.constant 753 : i32
    %92 = tpu.dynamic_rotate %71 by %c753_i32_44 dim 1 : vector<4x768xf32>, i32 -> vector<4x768xf32>
    %c6_45 = arith.constant 6 : index
    %c0_46 = arith.constant 0 : index
    %93 = vector.load %arg3[%c6_45, %c0_46] : memref<9x768xf32, #tpu.memory_space<vmem>>, vector<1x768xf32>
    %94 = vector.broadcast %93 : vector<1x768xf32> to vector<4x768xf32>
    %95 = arith.mulf %92, %94 : vector<4x768xf32>
    %c752_i32_47 = arith.constant 752 : i32
    %96 = tpu.dynamic_rotate %71 by %c752_i32_47 dim 1 : vector<4x768xf32>, i32 -> vector<4x768xf32>
    %c7_48 = arith.constant 7 : index
    %c0_49 = arith.constant 0 : index
    %97 = vector.load %arg3[%c7_48, %c0_49] : memref<9x768xf32, #tpu.memory_space<vmem>>, vector<1x768xf32>
    %98 = vector.broadcast %97 : vector<1x768xf32> to vector<4x768xf32>
    %99 = arith.mulf %96, %98 : vector<4x768xf32>
    %c751_i32_50 = arith.constant 751 : i32
    %100 = tpu.dynamic_rotate %71 by %c751_i32_50 dim 1 : vector<4x768xf32>, i32 -> vector<4x768xf32>
    %c8_51 = arith.constant 8 : index
    %c0_52 = arith.constant 0 : index
    %101 = vector.load %arg3[%c8_51, %c0_52] : memref<9x768xf32, #tpu.memory_space<vmem>>, vector<1x768xf32>
    %102 = vector.broadcast %101 : vector<1x768xf32> to vector<4x768xf32>
    %103 = arith.mulf %100, %102 : vector<4x768xf32>
    %104 = tpu.concatenate %75, %79, %83, %87, %71, %91, %95, %99, %103 in 0 : vector<4x768xf32>, vector<4x768xf32>, vector<4x768xf32>, vector<4x768xf32>, vector<4x768xf32>, vector<4x768xf32>, vector<4x768xf32>, vector<4x768xf32>, vector<4x768xf32> -> vector<36x768xf32>
    %c1_53 = arith.constant 1 : index
    %c0_54 = arith.constant 0 : index
    %c0_55 = arith.constant 0 : index
    %105 = vector.load %arg4[%c1_53, %c0_54, %c0_55] : memref<4x4x36xf32, #tpu.memory_space<vmem>>, vector<1x4x36xf32>
    %106 = vector.shape_cast %105 : vector<1x4x36xf32> to vector<4x36xf32>
    %cst_56 = arith.constant dense<0.000000e+00> : vector<4x768xf32>
    %107 = tpu.matmul %106, %104, %cst_56 {dimension_numbers = #tpu.dot_dimension_numbers<[1], [0], [0], [1], [0, 0, 1, 1], [], []>} : vector<4x36xf32>, vector<36x768xf32>, vector<4x768xf32> -> vector<4x768xf32>
    %108 = vector.extract_strided_slice %0 {offsets = [0, 3], sizes = [4, 1], strides = [1, 1]} : vector<4x8xf32> to vector<4x1xf32>
    %109 = vector.broadcast %108 : vector<4x1xf32> to vector<4x768xf32>
    %110 = arith.mulf %107, %109 : vector<4x768xf32>
    %111 = vector.extract_strided_slice %0 {offsets = [0, 4], sizes = [4, 1], strides = [1, 1]} : vector<4x8xf32> to vector<4x1xf32>
    %112 = vector.broadcast %111 : vector<4x1xf32> to vector<4x768xf32>
    %113 = arith.addf %110, %112 : vector<4x768xf32>
    %cst_57 = arith.constant 0.000000e+00 : f32
    %114 = vector.broadcast %cst_57 : f32 to vector<4x768xf32>
    %115 = arith.cmpf ogt, %113, %114 : vector<4x768xf32>
    %116 = math.exp %113 : vector<4x768xf32>
    %cst_58 = arith.constant 1.000000e+00 : f32
    %117 = vector.broadcast %cst_58 : f32 to vector<4x768xf32>
    %118 = arith.subf %116, %117 : vector<4x768xf32>
    %cst_59 = arith.constant 1.67326319 : f32
    %119 = vector.broadcast %cst_59 : f32 to vector<4x768xf32>
    %120 = arith.mulf %119, %118 : vector<4x768xf32>
    %121 = arith.select %115, %113, %120 : vector<4x768xi1>, vector<4x768xf32>
    %cst_60 = arith.constant 1.05070102 : f32
    %122 = vector.broadcast %cst_60 : f32 to vector<4x768xf32>
    %123 = arith.mulf %122, %121 : vector<4x768xf32>
    %c17_i32_61 = arith.constant 17 : i32
    %124 = tpu.dynamic_rotate %123 by %c17_i32_61 dim 1 : vector<4x768xf32>, i32 -> vector<4x768xf32>
    %c0_62 = arith.constant 0 : index
    %c0_63 = arith.constant 0 : index
    %125 = vector.load %arg3[%c0_62, %c0_63] : memref<9x768xf32, #tpu.memory_space<vmem>>, vector<1x768xf32>
    %126 = vector.broadcast %125 : vector<1x768xf32> to vector<4x768xf32>
    %127 = arith.mulf %124, %126 : vector<4x768xf32>
    %c16_i32_64 = arith.constant 16 : i32
    %128 = tpu.dynamic_rotate %123 by %c16_i32_64 dim 1 : vector<4x768xf32>, i32 -> vector<4x768xf32>
    %c1_65 = arith.constant 1 : index
    %c0_66 = arith.constant 0 : index
    %129 = vector.load %arg3[%c1_65, %c0_66] : memref<9x768xf32, #tpu.memory_space<vmem>>, vector<1x768xf32>
    %130 = vector.broadcast %129 : vector<1x768xf32> to vector<4x768xf32>
    %131 = arith.mulf %128, %130 : vector<4x768xf32>
    %c15_i32_67 = arith.constant 15 : i32
    %132 = tpu.dynamic_rotate %123 by %c15_i32_67 dim 1 : vector<4x768xf32>, i32 -> vector<4x768xf32>
    %c2_68 = arith.constant 2 : index
    %c0_69 = arith.constant 0 : index
    %133 = vector.load %arg3[%c2_68, %c0_69] : memref<9x768xf32, #tpu.memory_space<vmem>>, vector<1x768xf32>
    %134 = vector.broadcast %133 : vector<1x768xf32> to vector<4x768xf32>
    %135 = arith.mulf %132, %134 : vector<4x768xf32>
    %c1_i32_70 = arith.constant 1 : i32
    %136 = tpu.dynamic_rotate %123 by %c1_i32_70 dim 1 : vector<4x768xf32>, i32 -> vector<4x768xf32>
    %c3_71 = arith.constant 3 : index
    %c0_72 = arith.constant 0 : index
    %137 = vector.load %arg3[%c3_71, %c0_72] : memref<9x768xf32, #tpu.memory_space<vmem>>, vector<1x768xf32>
    %138 = vector.broadcast %137 : vector<1x768xf32> to vector<4x768xf32>
    %139 = arith.mulf %136, %138 : vector<4x768xf32>
    %c767_i32_73 = arith.constant 767 : i32
    %140 = tpu.dynamic_rotate %123 by %c767_i32_73 dim 1 : vector<4x768xf32>, i32 -> vector<4x768xf32>
    %c5_74 = arith.constant 5 : index
    %c0_75 = arith.constant 0 : index
    %141 = vector.load %arg3[%c5_74, %c0_75] : memref<9x768xf32, #tpu.memory_space<vmem>>, vector<1x768xf32>
    %142 = vector.broadcast %141 : vector<1x768xf32> to vector<4x768xf32>
    %143 = arith.mulf %140, %142 : vector<4x768xf32>
    %c753_i32_76 = arith.constant 753 : i32
    %144 = tpu.dynamic_rotate %123 by %c753_i32_76 dim 1 : vector<4x768xf32>, i32 -> vector<4x768xf32>
    %c6_77 = arith.constant 6 : index
    %c0_78 = arith.constant 0 : index
    %145 = vector.load %arg3[%c6_77, %c0_78] : memref<9x768xf32, #tpu.memory_space<vmem>>, vector<1x768xf32>
    %146 = vector.broadcast %145 : vector<1x768xf32> to vector<4x768xf32>
    %147 = arith.mulf %144, %146 : vector<4x768xf32>
    %c752_i32_79 = arith.constant 752 : i32
    %148 = tpu.dynamic_rotate %123 by %c752_i32_79 dim 1 : vector<4x768xf32>, i32 -> vector<4x768xf32>
    %c7_80 = arith.constant 7 : index
    %c0_81 = arith.constant 0 : index
    %149 = vector.load %arg3[%c7_80, %c0_81] : memref<9x768xf32, #tpu.memory_space<vmem>>, vector<1x768xf32>
    %150 = vector.broadcast %149 : vector<1x768xf32> to vector<4x768xf32>
    %151 = arith.mulf %148, %150 : vector<4x768xf32>
    %c751_i32_82 = arith.constant 751 : i32
    %152 = tpu.dynamic_rotate %123 by %c751_i32_82 dim 1 : vector<4x768xf32>, i32 -> vector<4x768xf32>
    %c8_83 = arith.constant 8 : index
    %c0_84 = arith.constant 0 : index
    %153 = vector.load %arg3[%c8_83, %c0_84] : memref<9x768xf32, #tpu.memory_space<vmem>>, vector<1x768xf32>
    %154 = vector.broadcast %153 : vector<1x768xf32> to vector<4x768xf32>
    %155 = arith.mulf %152, %154 : vector<4x768xf32>
    %156 = tpu.concatenate %127, %131, %135, %139, %123, %143, %147, %151, %155 in 0 : vector<4x768xf32>, vector<4x768xf32>, vector<4x768xf32>, vector<4x768xf32>, vector<4x768xf32>, vector<4x768xf32>, vector<4x768xf32>, vector<4x768xf32>, vector<4x768xf32> -> vector<36x768xf32>
    %c2_85 = arith.constant 2 : index
    %c0_86 = arith.constant 0 : index
    %c0_87 = arith.constant 0 : index
    %157 = vector.load %arg4[%c2_85, %c0_86, %c0_87] : memref<4x4x36xf32, #tpu.memory_space<vmem>>, vector<1x4x36xf32>
    %158 = vector.shape_cast %157 : vector<1x4x36xf32> to vector<4x36xf32>
    %cst_88 = arith.constant dense<0.000000e+00> : vector<4x768xf32>
    %159 = tpu.matmul %158, %156, %cst_88 {dimension_numbers = #tpu.dot_dimension_numbers<[1], [0], [0], [1], [0, 0, 1, 1], [], []>} : vector<4x36xf32>, vector<36x768xf32>, vector<4x768xf32> -> vector<4x768xf32>
    %160 = vector.extract_strided_slice %0 {offsets = [0, 5], sizes = [4, 1], strides = [1, 1]} : vector<4x8xf32> to vector<4x1xf32>
    %161 = vector.broadcast %160 : vector<4x1xf32> to vector<4x768xf32>
    %162 = arith.addf %159, %161 : vector<4x768xf32>
    %c17_i32_89 = arith.constant 17 : i32
    %163 = tpu.dynamic_rotate %162 by %c17_i32_89 dim 1 : vector<4x768xf32>, i32 -> vector<4x768xf32>
    %c0_90 = arith.constant 0 : index
    %c0_91 = arith.constant 0 : index
    %164 = vector.load %arg3[%c0_90, %c0_91] : memref<9x768xf32, #tpu.memory_space<vmem>>, vector<1x768xf32>
    %165 = vector.broadcast %164 : vector<1x768xf32> to vector<4x768xf32>
    %166 = arith.mulf %163, %165 : vector<4x768xf32>
    %c16_i32_92 = arith.constant 16 : i32
    %167 = tpu.dynamic_rotate %162 by %c16_i32_92 dim 1 : vector<4x768xf32>, i32 -> vector<4x768xf32>
    %c1_93 = arith.constant 1 : index
    %c0_94 = arith.constant 0 : index
    %168 = vector.load %arg3[%c1_93, %c0_94] : memref<9x768xf32, #tpu.memory_space<vmem>>, vector<1x768xf32>
    %169 = vector.broadcast %168 : vector<1x768xf32> to vector<4x768xf32>
    %170 = arith.mulf %167, %169 : vector<4x768xf32>
    %c15_i32_95 = arith.constant 15 : i32
    %171 = tpu.dynamic_rotate %162 by %c15_i32_95 dim 1 : vector<4x768xf32>, i32 -> vector<4x768xf32>
    %c2_96 = arith.constant 2 : index
    %c0_97 = arith.constant 0 : index
    %172 = vector.load %arg3[%c2_96, %c0_97] : memref<9x768xf32, #tpu.memory_space<vmem>>, vector<1x768xf32>
    %173 = vector.broadcast %172 : vector<1x768xf32> to vector<4x768xf32>
    %174 = arith.mulf %171, %173 : vector<4x768xf32>
    %c1_i32_98 = arith.constant 1 : i32
    %175 = tpu.dynamic_rotate %162 by %c1_i32_98 dim 1 : vector<4x768xf32>, i32 -> vector<4x768xf32>
    %c3_99 = arith.constant 3 : index
    %c0_100 = arith.constant 0 : index
    %176 = vector.load %arg3[%c3_99, %c0_100] : memref<9x768xf32, #tpu.memory_space<vmem>>, vector<1x768xf32>
    %177 = vector.broadcast %176 : vector<1x768xf32> to vector<4x768xf32>
    %178 = arith.mulf %175, %177 : vector<4x768xf32>
    %c767_i32_101 = arith.constant 767 : i32
    %179 = tpu.dynamic_rotate %162 by %c767_i32_101 dim 1 : vector<4x768xf32>, i32 -> vector<4x768xf32>
    %c5_102 = arith.constant 5 : index
    %c0_103 = arith.constant 0 : index
    %180 = vector.load %arg3[%c5_102, %c0_103] : memref<9x768xf32, #tpu.memory_space<vmem>>, vector<1x768xf32>
    %181 = vector.broadcast %180 : vector<1x768xf32> to vector<4x768xf32>
    %182 = arith.mulf %179, %181 : vector<4x768xf32>
    %c753_i32_104 = arith.constant 753 : i32
    %183 = tpu.dynamic_rotate %162 by %c753_i32_104 dim 1 : vector<4x768xf32>, i32 -> vector<4x768xf32>
    %c6_105 = arith.constant 6 : index
    %c0_106 = arith.constant 0 : index
    %184 = vector.load %arg3[%c6_105, %c0_106] : memref<9x768xf32, #tpu.memory_space<vmem>>, vector<1x768xf32>
    %185 = vector.broadcast %184 : vector<1x768xf32> to vector<4x768xf32>
    %186 = arith.mulf %183, %185 : vector<4x768xf32>
    %c752_i32_107 = arith.constant 752 : i32
    %187 = tpu.dynamic_rotate %162 by %c752_i32_107 dim 1 : vector<4x768xf32>, i32 -> vector<4x768xf32>
    %c7_108 = arith.constant 7 : index
    %c0_109 = arith.constant 0 : index
    %188 = vector.load %arg3[%c7_108, %c0_109] : memref<9x768xf32, #tpu.memory_space<vmem>>, vector<1x768xf32>
    %189 = vector.broadcast %188 : vector<1x768xf32> to vector<4x768xf32>
    %190 = arith.mulf %187, %189 : vector<4x768xf32>
    %c751_i32_110 = arith.constant 751 : i32
    %191 = tpu.dynamic_rotate %162 by %c751_i32_110 dim 1 : vector<4x768xf32>, i32 -> vector<4x768xf32>
    %c8_111 = arith.constant 8 : index
    %c0_112 = arith.constant 0 : index
    %192 = vector.load %arg3[%c8_111, %c0_112] : memref<9x768xf32, #tpu.memory_space<vmem>>, vector<1x768xf32>
    %193 = vector.broadcast %192 : vector<1x768xf32> to vector<4x768xf32>
    %194 = arith.mulf %191, %193 : vector<4x768xf32>
    %195 = tpu.concatenate %166, %170, %174, %178, %162, %182, %186, %190, %194 in 0 : vector<4x768xf32>, vector<4x768xf32>, vector<4x768xf32>, vector<4x768xf32>, vector<4x768xf32>, vector<4x768xf32>, vector<4x768xf32>, vector<4x768xf32>, vector<4x768xf32> -> vector<36x768xf32>
    %c3_113 = arith.constant 3 : index
    %c0_114 = arith.constant 0 : index
    %c0_115 = arith.constant 0 : index
    %196 = vector.load %arg4[%c3_113, %c0_114, %c0_115] : memref<4x4x36xf32, #tpu.memory_space<vmem>>, vector<1x4x36xf32>
    %197 = vector.shape_cast %196 : vector<1x4x36xf32> to vector<4x36xf32>
    %cst_116 = arith.constant dense<0.000000e+00> : vector<4x768xf32>
    %198 = tpu.matmul %197, %195, %cst_116 {dimension_numbers = #tpu.dot_dimension_numbers<[1], [0], [0], [1], [0, 0, 1, 1], [], []>} : vector<4x36xf32>, vector<36x768xf32>, vector<4x768xf32> -> vector<4x768xf32>
    %199 = vector.extract_strided_slice %0 {offsets = [0, 6], sizes = [4, 1], strides = [1, 1]} : vector<4x8xf32> to vector<4x1xf32>
    %200 = vector.broadcast %199 : vector<4x1xf32> to vector<4x768xf32>
    %201 = arith.addf %198, %200 : vector<4x768xf32>
    %cst_117 = arith.constant 0.000000e+00 : f32
    %202 = vector.broadcast %cst_117 : f32 to vector<4x768xf32>
    %203 = arith.cmpf ogt, %201, %202 : vector<4x768xf32>
    %204 = math.exp %201 : vector<4x768xf32>
    %cst_118 = arith.constant 1.000000e+00 : f32
    %205 = vector.broadcast %cst_118 : f32 to vector<4x768xf32>
    %206 = arith.subf %204, %205 : vector<4x768xf32>
    %cst_119 = arith.constant 1.67326319 : f32
    %207 = vector.broadcast %cst_119 : f32 to vector<4x768xf32>
    %208 = arith.mulf %207, %206 : vector<4x768xf32>
    %209 = arith.select %203, %201, %208 : vector<4x768xi1>, vector<4x768xf32>
    %cst_120 = arith.constant 1.05070102 : f32
    %210 = vector.broadcast %cst_120 : f32 to vector<4x768xf32>
    %211 = arith.mulf %210, %209 : vector<4x768xf32>
    %c0_121 = arith.constant 0 : index
    %c0_122 = arith.constant 0 : index
    %212 = vector.load %arg5[%c0_121, %c0_122] : memref<8x4xf32, #tpu.memory_space<vmem>>, vector<8x4xf32>
    %cst_123 = arith.constant dense<0.000000e+00> : vector<8x768xf32>
    %213 = tpu.matmul %212, %211, %cst_123 {dimension_numbers = #tpu.dot_dimension_numbers<[1], [0], [0], [1], [0, 0, 1, 1], [], []>} : vector<8x4xf32>, vector<4x768xf32>, vector<8x768xf32> -> vector<8x768xf32>
    %214 = vector.extract_strided_slice %1 {offsets = [0, 0], sizes = [8, 1], strides = [1, 1]} : vector<8x4xf32> to vector<8x1xf32>
    %215 = vector.broadcast %214 : vector<8x1xf32> to vector<8x768xf32>
    %216 = arith.addf %213, %215 : vector<8x768xf32>
    %cst_124 = arith.constant 0.000000e+00 : f32
    %217 = vector.broadcast %cst_124 : f32 to vector<8x768xf32>
    %218 = arith.cmpf ogt, %216, %217 : vector<8x768xf32>
    %219 = math.exp %216 : vector<8x768xf32>
    %cst_125 = arith.constant 1.000000e+00 : f32
    %220 = vector.broadcast %cst_125 : f32 to vector<8x768xf32>
    %221 = arith.subf %219, %220 : vector<8x768xf32>
    %cst_126 = arith.constant 1.67326319 : f32
    %222 = vector.broadcast %cst_126 : f32 to vector<8x768xf32>
    %223 = arith.mulf %222, %221 : vector<8x768xf32>
    %224 = arith.select %218, %216, %223 : vector<8x768xi1>, vector<8x768xf32>
    %cst_127 = arith.constant 1.05070102 : f32
    %225 = vector.broadcast %cst_127 : f32 to vector<8x768xf32>
    %226 = arith.mulf %225, %224 : vector<8x768xf32>
    %227 = vector.extract_strided_slice %1 {offsets = [0, 1], sizes = [8, 1], strides = [1, 1]} : vector<8x4xf32> to vector<8x1xf32>
    %228 = vector.broadcast %227 : vector<8x1xf32> to vector<8x768xf32>
    %229 = arith.mulf %226, %228 : vector<8x768xf32>
    %230 = vector.extract_strided_slice %1 {offsets = [0, 2], sizes = [8, 1], strides = [1, 1]} : vector<8x4xf32> to vector<8x1xf32>
    %231 = vector.broadcast %230 : vector<8x1xf32> to vector<8x768xf32>
    %232 = arith.addf %229, %231 : vector<8x768xf32>
    %c0_128 = arith.constant 0 : index
    %c0_129 = arith.constant 0 : index
    %c0_130 = arith.constant 0 : index
    %233 = vector.load %arg8[%c0_128, %c0_129, %c0_130] : memref<1x8x768xf32, #tpu.memory_space<vmem>>, vector<1x8x768xf32>
    %234 = vector.shape_cast %233 : vector<1x8x768xf32> to vector<8x768xf32>
    %235 = vector.shape_cast %232 : vector<8x768xf32> to vector<1x8x768xf32>
    tpu.vector_store %arg8[%c0_128, %c0_129, %c0_130], %235 {strides = array<i32>} : memref<1x8x768xf32, #tpu.memory_space<vmem>>, vector<1x8x768xf32>,
    return
  }
  func.func @transform_0(%arg0: i32) -> (i32, i32, i32) {
    %c0_i32 = arith.constant 0 : i32
    %c0_i32_0 = arith.constant 0 : i32
    %c0_i32_1 = arith.constant 0 : i32
    return %arg0, %c0_i32, %c0_i32_0 : i32, i32, i32
  }
  func.func @transform_1(%arg0: i32) -> (i32, i32) {
    %c0_i32 = arith.constant 0 : i32
    %c0_i32_0 = arith.constant 0 : i32
    %c0_i32_1 = arith.constant 0 : i32
    return %c0_i32, %c0_i32_0 : i32, i32
  }
  func.func @transform_2(%arg0: i32) -> (i32, i32) {
    %c0_i32 = arith.constant 0 : i32
    %c0_i32_0 = arith.constant 0 : i32
    %c0_i32_1 = arith.constant 0 : i32
    return %c0_i32, %c0_i32_0 : i32, i32
  }
  func.func @transform_3(%arg0: i32) -> (i32, i32, i32) {
    %c0_i32 = arith.constant 0 : i32
    %c0_i32_0 = arith.constant 0 : i32
    %c0_i32_1 = arith.constant 0 : i32
    %c0_i32_2 = arith.constant 0 : i32
    return %c0_i32, %c0_i32_0, %c0_i32_1 : i32, i32, i32
  }
  func.func @transform_4(%arg0: i32) -> (i32, i32) {
    %c0_i32 = arith.constant 0 : i32
    %c0_i32_0 = arith.constant 0 : i32
    %c0_i32_1 = arith.constant 0 : i32
    return %c0_i32, %c0_i32_0 : i32, i32
  }
  func.func @transform_5(%arg0: i32) -> (i32, i32) {
    %c0_i32 = arith.constant 0 : i32
    %c0_i32_0 = arith.constant 0 : i32
    %c0_i32_1 = arith.constant 0 : i32
    return %c0_i32, %c0_i32_0 : i32, i32
  }
  func.func @transform_6(%arg0: i32) -> (i32, i32) {
    %c0_i32 = arith.constant 0 : i32
    %c0_i32_0 = arith.constant 0 : i32
    %c0_i32_1 = arith.constant 0 : i32
    return %c0_i32, %c0_i32_0 : i32, i32
  }
  func.func @transform_7(%arg0: i32) -> (i32, i32, i32) {
    %c0_i32 = arith.constant 0 : i32
    %c0_i32_0 = arith.constant 0 : i32
    %c0_i32_1 = arith.constant 0 : i32
    return %arg0, %c0_i32, %c0_i32_0 : i32, i32, i32
  }
}

</mosaic_0001>

<llo_original>
// kernel: upsample_conv_block3d_forward.1
$region0: #{upsample_conv_block3d_forward.1}
  #allocation0 [shape = 'u32[]', space=smem, size = 0x4, offset = 0x4, fixed_abs, tag = 'smem constant byte address 0x4 - core index']
  #allocation1 [shape = 'u32[144,128]{1,0:T(1,128)}', space=vmem, size = 0x12000, scoped, tag = 'internal scratch']
  %s0 = inlined_call_operand.vmem [shape: f32[2,4,192], index: 0, kind: input, shape index: {}]
  %s1 = inlined_call_operand.hbm [shape: bf16[192,768], index: 1, kind: input, shape index: {}]
  %s2 = inlined_call_operand.vmem [shape: f32[9,768], index: 2, kind: input, shape index: {}]
  %s3 = inlined_call_operand.vmem [shape: f32[4,4,36], index: 3, kind: input, shape index: {}]
  %s4 = inlined_call_operand.vmem [shape: f32[8,4], index: 4, kind: input, shape index: {}]
  %s5 = inlined_call_operand.vmem [shape: f32[4,8], index: 5, kind: input, shape index: {}]
  %s6 = inlined_call_operand.vmem [shape: f32[8,4], index: 6, kind: input, shape index: {}]
  %s7 = inlined_call_operand.vmem [shape: f32[2,8,768], index: 7, kind: output, shape index: {}]
  %s8 = sld [smem:[#allocation0]]
  $region65: #{upsample_conv_block3d_forward.1} parent=0
    _
  %s10 = ssub.s32 1, %s8
  %s11 = scalar_select 0, %s10, %s8
  $region1: #{upsample_conv_block3d_forward.1} parent=0
    #allocation2 [shape = 'u8[294912]{0}', space=vmem, size = 0x48000, scoped, tag = 'input window, operand 1, single buffered']
    #allocation3 [shape = 's32[2]{0}', space=sflag, size = 0x8, scoped, tag = 'scoped memory for upsample_conv_block3d_forward.1']
    %12 = vsyncpa [#allocation3], 0
    loop: start=0, step=1, limit=4
    $region2: #{upsample_conv_block3d_forward.1} parent=1 // loop_pre_header
      _
    $region3: #{upsample_conv_block3d_forward.1} parent=1 // loop_header
      %s14 = sphi 0, %s18
      %p15 = scmp.ge.s32.totalorder %s14, 4
      %s24 = sphi 0, %s26
      %s27 = sphi 0, %s24
      %s28 = sphi 0, %s27
      %s44 = sphi 0, %s28
      %s48 = sphi 0, %s48
      %s50 = sphi 0, %s48
      %s51 = sphi 0, %s50
      %s65 = sphi 0, %s51
      %s69 = sphi 0, %s69
      %s71 = sphi 0, %s69
      %s72 = sphi 0, %s71
      %s86 = sphi 0, %s72
      %s90 = sphi 0, %s90
      %s92 = sphi 0, %s90
      %s93 = sphi 0, %s92
      %s107 = sphi 0, %s93
      %s111 = sphi 0, %s111
      %s113 = sphi 0, %s111
      %s114 = sphi 0, %s113
      %s128 = sphi 0, %s114
      %s132 = sphi 0, %s132
      %s134 = sphi 0, %s132
      %s135 = sphi 0, %s134
      %s149 = sphi 0, %s135
      %s153 = sphi 0, %s153
      %s155 = sphi 0, %s153
      %s156 = sphi 0, %s155
      %s170 = sphi 0, %s156
      %s176 = sphi 0, %s178
      %s179 = sphi 0, %s176
      %s180 = sphi 0, %s179
      %s196 = sphi 0, %s180
    $region4: #{upsample_conv_block3d_forward.1} parent=1 // loop_header_branch
      %17 = sbr.rel (%p15) target = $region8
    $region5: #{upsample_conv_block3d_forward.1} parent=1 // loop_body
      %s19 = ssub.s32 %s14, 1
      %s20 = ssub.s32 %s14, 2
      %s21 = sadd.s32 %s14, 1
      %s22 = ssub.s32 %s14, %s21
      %p23 = scmp.eq.s32.totalorder %s22, 0
      %s25 = sadd.s32 %s24, 1
      %s26 = scalar_select %p23, %s24, %s25
      %p29 = pneg %p23
      %p30 = scmp.eq.s32.totalorder %s14, 1
      %p31 = por %p29, %p30
      %p32 = scmp.ne.s32.totalorder %s24, %s27
      %p33 = scmp.eq.s32.totalorder %s14, 0
      %p34 = por %p32, %p33
      %p35 = scmp.ne.s32.totalorder %s24, %s27
      %p36 = scmp.eq.s32.totalorder %s19, 1
      %p37 = por %p35, %p36
      %p38 = scmp.ne.s32.totalorder %s27, %s28
      %p39 = scmp.eq.s32.totalorder %s19, 0
      %p40 = por %p38, %p39
      %p41 = scmp.ne.s32.totalorder %s27, %s28
      %p42 = scmp.eq.s32.totalorder %s20, 1
      %p43 = por %p41, %p42
      %p45 = scmp.ne.s32.totalorder %s28, %s44
      %p46 = scmp.eq.s32.totalorder %s20, 0
      %p47 = por %p45, %p46
      %s49 = sadd.s32 %s48, 1
      %p52 = scmp.eq.s32.totalorder %s14, 1
      %p53 = scmp.ne.s32.totalorder %s48, %s50
      %p54 = scmp.eq.s32.totalorder %s14, 0
      %p55 = por %p53, %p54
      %p56 = scmp.ne.s32.totalorder %s48, %s50
      %p57 = scmp.eq.s32.totalorder %s19, 1
      %p58 = por %p56, %p57
      %p59 = scmp.ne.s32.totalorder %s50, %s51
      %p60 = scmp.eq.s32.totalorder %s19, 0
      %p61 = por %p59, %p60
      %p62 = scmp.ne.s32.totalorder %s50, %s51
      %p63 = scmp.eq.s32.totalorder %s20, 1
      %p64 = por %p62, %p63
      %p66 = scmp.ne.s32.totalorder %s51, %s65
      %p67 = scmp.eq.s32.totalorder %s20, 0
      %p68 = por %p66, %p67
      %s70 = sadd.s32 %s69, 1
      %p73 = scmp.eq.s32.totalorder %s14, 1
      %p74 = scmp.ne.s32.totalorder %s69, %s71
      %p75 = scmp.eq.s32.totalorder %s14, 0
      %p76 = por %p74, %p75
      %p77 = scmp.ne.s32.totalorder %s69, %s71
      %p78 = scmp.eq.s32.totalorder %s19, 1
      %p79 = por %p77, %p78
      %p80 = scmp.ne.s32.totalorder %s71, %s72
      %p81 = scmp.eq.s32.totalorder %s19, 0
      %p82 = por %p80, %p81
      %p83 = scmp.ne.s32.totalorder %s71, %s72
      %p84 = scmp.eq.s32.totalorder %s20, 1
      %p85 = por %p83, %p84
      %p87 = scmp.ne.s32.totalorder %s72, %s86
      %p88 = scmp.eq.s32.totalorder %s20, 0
      %p89 = por %p87, %p88
      %s91 = sadd.s32 %s90, 1
      %p94 = scmp.eq.s32.totalorder %s14, 1
      %p95 = scmp.ne.s32.totalorder %s90, %s92
      %p96 = scmp.eq.s32.totalorder %s14, 0
      %p97 = por %p95, %p96
      %p98 = scmp.ne.s32.totalorder %s90, %s92
      %p99 = scmp.eq.s32.totalorder %s19, 1
      %p100 = por %p98, %p99
      %p101 = scmp.ne.s32.totalorder %s92, %s93
      %p102 = scmp.eq.s32.totalorder %s19, 0
      %p103 = por %p101, %p102
      %p104 = scmp.ne.s32.totalorder %s92, %s93
      %p105 = scmp.eq.s32.totalorder %s20, 1
      %p106 = por %p104, %p105
      %p108 = scmp.ne.s32.totalorder %s93, %s107
      %p109 = scmp.eq.s32.totalorder %s20, 0
      %p110 = por %p108, %p109
      %s112 = sadd.s32 %s111, 1
      %p115 = scmp.eq.s32.totalorder %s14, 1
      %p116 = scmp.ne.s32.totalorder %s111, %s113
      %p117 = scmp.eq.s32.totalorder %s14, 0
      %p118 = por %p116, %p117
      %p119 = scmp.ne.s32.totalorder %s111, %s113
      %p120 = scmp.eq.s32.totalorder %s19, 1
      %p121 = por %p119, %p120
      %p122 = scmp.ne.s32.totalorder %s113, %s114
      %p123 = scmp.eq.s32.totalorder %s19, 0
      %p124 = por %p122, %p123
      %p125 = scmp.ne.s32.totalorder %s113, %s114
      %p126 = scmp.eq.s32.totalorder %s20, 1
      %p127 = por %p125, %p126
      %p129 = scmp.ne.s32.totalorder %s114, %s128
      %p130 = scmp.eq.s32.totalorder %s20, 0
      %p131 = por %p129, %p130
      %s133 = sadd.s32 %s132, 1
      %p136 = scmp.eq.s32.totalorder %s14, 1
      %p137 = scmp.ne.s32.totalorder %s132, %s134
      %p138 = scmp.eq.s32.totalorder %s14, 0
      %p139 = por %p137, %p138
      %p140 = scmp.ne.s32.totalorder %s132, %s134
      %p141 = scmp.eq.s32.totalorder %s19, 1
      %p142 = por %p140, %p141
      %p143 = scmp.ne.s32.totalorder %s134, %s135
      %p144 = scmp.eq.s32.totalorder %s19, 0
      %p145 = por %p143, %p144
      %p146 = scmp.ne.s32.totalorder %s134, %s135
      %p147 = scmp.eq.s32.totalorder %s20, 1
      %p148 = por %p146, %p147
      %p150 = scmp.ne.s32.totalorder %s135, %s149
      %p151 = scmp.eq.s32.totalorder %s20, 0
      %p152 = por %p150, %p151
      %s154 = sadd.s32 %s153, 1
      %p157 = scmp.eq.s32.totalorder %s14, 1
      %p158 = scmp.ne.s32.totalorder %s153, %s155
      %p159 = scmp.eq.s32.totalorder %s14, 0
      %p160 = por %p158, %p159
      %p161 = scmp.ne.s32.totalorder %s153, %s155
      %p162 = scmp.eq.s32.totalorder %s19, 1
      %p163 = por %p161, %p162
      %p164 = scmp.ne.s32.totalorder %s155, %s156
      %p165 = scmp.eq.s32.totalorder %s19, 0
      %p166 = por %p164, %p165
      %p167 = scmp.ne.s32.totalorder %s155, %s156
      %p168 = scmp.eq.s32.totalorder %s20, 1
      %p169 = por %p167, %p168
      %p171 = scmp.ne.s32.totalorder %s156, %s170
      %p172 = scmp.eq.s32.totalorder %s20, 0
      %p173 = por %p171, %p172
      %s174 = ssub.s32 %s14, %s21
      %p175 = scmp.eq.s32.totalorder %s174, 0
      %s177 = sadd.s32 %s176, 1
      %s178 = scalar_select %p175, %s176, %s177
      %p181 = pneg %p175
      %p182 = scmp.eq.s32.totalorder %s14, 1
      %p183 = por %p181, %p182
      %p184 = scmp.ne.s32.totalorder %s176, %s179
      %p185 = scmp.eq.s32.totalorder %s14, 0
      %p186 = por %p184, %p185
      %p187 = scmp.ne.s32.totalorder %s176, %s179
      %p188 = scmp.eq.s32.totalorder %s19, 1
      %p189 = por %p187, %p188
      %p190 = scmp.ne.s32.totalorder %s179, %s180
      %p191 = scmp.eq.s32.totalorder %s19, 0
      %p192 = por %p190, %p191
      %p193 = scmp.ne.s32.totalorder %s179, %s180
      %p194 = scmp.eq.s32.totalorder %s20, 1
      %p195 = por %p193, %p194
      %p197 = scmp.ne.s32.totalorder %s180, %s196
      %p198 = scmp.eq.s32.totalorder %s20, 0
      %p199 = por %p197, %p198
      %p200 = scmp.le.s32.totalorder 1, %s14
      %p201 = scmp.lt.s32.totalorder %s14, 3
      %p202 = pnand %p200, %p201
      %p203 = pneg %p202
      // Predicated region
      $region9: #{upsample_conv_block3d_forward.1} parent=5 // pred_check
        _
      $region10: #{upsample_conv_block3d_forward.1} parent=5 // pred_check_branch
        %205 = sbr.rel (%p202) target = $region12
      $region11: #{upsample_conv_block3d_forward.1} parent=5 // pred_region
        %s206 = ssub.s32 %s14, 1
        // Predicated region
        $region13: #{upsample_conv_block3d_forward.1} parent=11 // pred_check
          %p207 = pneg %p61
        $region14: #{upsample_conv_block3d_forward.1} parent=11 // pred_check_branch
          %209 = sbr.rel (%p207) target = $region16
        $region15: #{upsample_conv_block3d_forward.1} parent=11 // pred_region
          %s211 = ssub.s32 9216, 9216
          %212 = vsyncadd [#allocation3], %s211
          %s213 = sshll.u32 [#allocation2], 4
          %s214 = int_to_ptr.vmem [resolvable:$true] %s213
          %219 = dma.hbm_to_vmem [thread:$0]  %s1, 9216, %s214, [#allocation3], 384, 384, 24
        $region16: #{upsample_conv_block3d_forward.1} parent=11 // pred_fallthru
          _
        // Predicated region
        $region17: #{upsample_conv_block3d_forward.1} parent=11 // pred_check
          %p220 = pneg %p82
        $region18: #{upsample_conv_block3d_forward.1} parent=11 // pred_check_branch
          %222 = sbr.rel (%p220) target = $region20
        $region19: #{upsample_conv_block3d_forward.1} parent=11 // pred_region
          _
        $region20: #{upsample_conv_block3d_forward.1} parent=11 // pred_fallthru
          _
        // Predicated region
        $region21: #{upsample_conv_block3d_forward.1} parent=11 // pred_check
          %p223 = pneg %p103
        $region22: #{upsample_conv_block3d_forward.1} parent=11 // pred_check_branch
          %225 = sbr.rel (%p223) target = $region24
        $region23: #{upsample_conv_block3d_forward.1} parent=11 // pred_region
          _
        $region24: #{upsample_conv_block3d_forward.1} parent=11 // pred_fallthru
          _
        // Predicated region
        $region25: #{upsample_conv_block3d_forward.1} parent=11 // pred_check
          %p226 = pneg %p124
        $region26: #{upsample_conv_block3d_forward.1} parent=11 // pred_check_branch
          %228 = sbr.rel (%p226) target = $region28
        $region27: #{upsample_conv_block3d_forward.1} parent=11 // pred_region
          _
        $region28: #{upsample_conv_block3d_forward.1} parent=11 // pred_fallthru
          _
        // Predicated region
        $region29: #{upsample_conv_block3d_forward.1} parent=11 // pred_check
          %p229 = pneg %p145
        $region30: #{upsample_conv_block3d_forward.1} parent=11 // pred_check_branch
          %231 = sbr.rel (%p229) target = $region32
        $region31: #{upsample_conv_block3d_forward.1} parent=11 // pred_region
          _
        $region32: #{upsample_conv_block3d_forward.1} parent=11 // pred_fallthru
          _
        // Predicated region
        $region33: #{upsample_conv_block3d_forward.1} parent=11 // pred_check
          %p232 = pneg %p166
        $region34: #{upsample_conv_block3d_forward.1} parent=11 // pred_check_branch
          %234 = sbr.rel (%p232) target = $region36
        $region35: #{upsample_conv_block3d_forward.1} parent=11 // pred_region
          _
        $region36: #{upsample_conv_block3d_forward.1} parent=11 // pred_fallthru
          _
      $region12: #{upsample_conv_block3d_forward.1} parent=5 // pred_fallthru
        _
      %p235 = scmp.lt.s32.totalorder %s14, 2
      // Predicated region
      $region37: #{upsample_conv_block3d_forward.1} parent=5 // pred_check
        %p236 = pneg %p235
      $region38: #{upsample_conv_block3d_forward.1} parent=5 // pred_check_branch
        %238 = sbr.rel (%p236) target = $region40
      $region39: #{upsample_conv_block3d_forward.1} parent=5 // pred_region
        // Predicated region
        $region41: #{upsample_conv_block3d_forward.1} parent=39 // pred_check
          %p239 = pneg %p34
        $region42: #{upsample_conv_block3d_forward.1} parent=39 // pred_check_branch
          %241 = sbr.rel (%p239) target = $region44
        $region43: #{upsample_conv_block3d_forward.1} parent=39 // pred_region
          %p242 = scmp.lt.s32.totalorder %s14, 1
          %s243 = scalar_select %p242, %s14, 1
          %s244 = smul.addr %s243, 2
          %s245 = smul.addr %s244, 4
          %s246 = scalar_lea.vmem %s0, %s245
        $region44: #{upsample_conv_block3d_forward.1} parent=39 // pred_fallthru
          _
      $region40: #{upsample_conv_block3d_forward.1} parent=5 // pred_fallthru
        _
      %p247 = scmp.le.s32.totalorder 1, %s14
      %p248 = scmp.lt.s32.totalorder %s14, 3
      %p249 = pnand %p247, %p248
      %p250 = pneg %p249
      // Predicated region
      $region45: #{upsample_conv_block3d_forward.1} parent=5 // pred_check
        _
      $region46: #{upsample_conv_block3d_forward.1} parent=5 // pred_check_branch
        %252 = sbr.rel (%p249) target = $region48
      $region47: #{upsample_conv_block3d_forward.1} parent=5 // pred_region
        %s253 = ssub.s32 %s14, 1
        // Predicated region
        $region49: #{upsample_conv_block3d_forward.1} parent=47 // pred_check
          %p254 = pneg %p61
        $region50: #{upsample_conv_block3d_forward.1} parent=47 // pred_check_branch
          %256 = sbr.rel (%p254) target = $region52
        $region51: #{upsample_conv_block3d_forward.1} parent=47 // pred_region
          %257 = dma.done [#allocation3], 9216
        $region52: #{upsample_conv_block3d_forward.1} parent=47 // pred_fallthru
          _
        %p258 = scmp.lt.s32.totalorder %s19, 1
        %s259 = scalar_select %p258, %s19, 1
        %s260 = smul.addr %s259, 2
        %s261 = smul.addr %s260, 4
        %s262 = scalar_lea.vmem %s0, %s261
        %p263 = pneg %p40
        %p264 = pneg %p37
        %p265 = pneg %p61
        %p266 = pneg %p58
        %p267 = pneg %p82
        %p268 = pneg %p79
        %p269 = pneg %p103
        %p270 = pneg %p100
        %p271 = pneg %p124
        %p272 = pneg %p121
        %p273 = pneg %p145
        %p274 = pneg %p142
        %p275 = pneg %p166
        %p276 = pneg %p163
        %p277 = pneg %p192
        %p278 = pneg %p189
        %p279 = scmp.lt.s32.totalorder %s19, 1
        %s280 = scalar_select %p279, %s19, 1
        %s281 = smul.addr %s280, 6
        %s282 = smul.addr %s281, 8
        %s283 = scalar_lea.vmem %s7, %s282
        %p284 = scmp.lt.s32.totalorder %s19, 1
        %s285 = scalar_select %p284, %s19, 1
        %s286 = smul.addr %s285, 2
        %s287 = smul.addr %s286, 4
        %s288 = scalar_lea.vmem %s0, %s287
        %p289 = scmp.lt.s32.totalorder %s19, 1
        %s290 = scalar_select %p289, %s19, 1
        %s291 = smul.addr %s290, 6
        %s292 = smul.addr %s291, 8
        %s293 = scalar_lea.vmem %s7, %s292
        %v294 = vld [vmem:[%s5] sm:$0xf]
        %v295 = vld [vmem:[%s6] sm:$0xff]
        %v296 = vld [vmem:[#allocation2] sm:$0xff]
        %v297 = vld [vmem:[#allocation2 + $0x8] sm:$0xff]
        %v298 = vld [vmem:[#allocation2 + $0x10] sm:$0xff]
        %v299 = vld [vmem:[#allocation2 + $0x18] sm:$0xff]
        %v300 = vld [vmem:[#allocation2 + $0x20] sm:$0xff]
        %v301 = vld [vmem:[#allocation2 + $0x28] sm:$0xff]
        %v302 = vld [vmem:[#allocation2 + $0x30] sm:$0xff]
        %v303 = vld [vmem:[#allocation2 + $0x38] sm:$0xff]
        %v304 = vld [vmem:[#allocation2 + $0x40] sm:$0xff]
        %v305 = vld [vmem:[#allocation2 + $0x48] sm:$0xff]
        %v306 = vld [vmem:[#allocation2 + $0x50] sm:$0xff]
        %v307 = vld [vmem:[#allocation2 + $0x58] sm:$0xff]
        %v308 = vld [vmem:[#allocation2 + $0x60] sm:$0xff]
        %v309 = vld [vmem:[#allocation2 + $0x68] sm:$0xff]
        %v310 = vld [vmem:[#allocation2 + $0x70] sm:$0xff]
        %v311 = vld [vmem:[#allocation2 + $0x78] sm:$0xff]
        %v312 = vld [vmem:[#allocation2 + $0x80] sm:$0xff]
        %v313 = vld [vmem:[#allocation2 + $0x88] sm:$0xff]
        %v314 = vld [vmem:[#allocation2 + $0x90] sm:$0xff]
        %v315 = vld [vmem:[#allocation2 + $0x98] sm:$0xff]
        %v316 = vld [vmem:[#allocation2 + $0xa0] sm:$0xff]
        %v317 = vld [vmem:[#allocation2 + $0xa8] sm:$0xff]
        %v318 = vld [vmem:[#allocation2 + $0xb0] sm:$0xff]
        %v319 = vld [vmem:[#allocation2 + $0xb8] sm:$0xff]
        %v320 = vld [vmem:[#allocation2 + $0xc0] sm:$0xff]
        %v321 = vld [vmem:[#allocation2 + $0xc8] sm:$0xff]
        %v322 = vld [vmem:[#allocation2 + $0xd0] sm:$0xff]
        %v323 = vld [vmem:[#allocation2 + $0xd8] sm:$0xff]
        %v324 = vld [vmem:[#allocation2 + $0xe0] sm:$0xff]
        %v325 = vld [vmem:[#allocation2 + $0xe8] sm:$0xff]
        %v326 = vld [vmem:[#allocation2 + $0xf0] sm:$0xff]
        %v327 = vld [vmem:[#allocation2 + $0xf8] sm:$0xff]
        %v328 = vld [vmem:[#allocation2 + $0x100] sm:$0xff]
        %v329 = vld [vmem:[#allocation2 + $0x108] sm:$0xff]
        %v330 = vld [vmem:[#allocation2 + $0x110] sm:$0xff]
        %v331 = vld [vmem:[#allocation2 + $0x118] sm:$0xff]
        %v332 = vld [vmem:[#allocation2 + $0x120] sm:$0xff]
        %v333 = vld [vmem:[#allocation2 + $0x128] sm:$0xff]
        %v334 = vld [vmem:[#allocation2 + $0x130] sm:$0xff]
        %v335 = vld [vmem:[#allocation2 + $0x138] sm:$0xff]
        %v336 = vld [vmem:[#allocation2 + $0x140] sm:$0xff]
        %v337 = vld [vmem:[#allocation2 + $0x148] sm:$0xff]
        %v338 = vld [vmem:[#allocation2 + $0x150] sm:$0xff]
        %v339 = vld [vmem:[#allocation2 + $0x158] sm:$0xff]
        %v340 = vld [vmem:[#allocation2 + $0x160] sm:$0xff]
        %v341 = vld [vmem:[#allocation2 + $0x168] sm:$0xff]
        %v342 = vld [vmem:[#allocation2 + $0x170] sm:$0xff]
        %v343 = vld [vmem:[#allocation2 + $0x178] sm:$0xff]
        %v344 = vld [vmem:[#allocation2 + $0x180] sm:$0xff]
        %v345 = vld [vmem:[#allocation2 + $0x188] sm:$0xff]
        %v346 = vld [vmem:[#allocation2 + $0x190] sm:$0xff]
        %v347 = vld [vmem:[#allocation2 + $0x198] sm:$0xff]
        %v348 = vld [vmem:[#allocation2 + $0x1a0] sm:$0xff]
        %v349 = vld [vmem:[#allocation2 + $0x1a8] sm:$0xff]
        %v350 = vld [vmem:[#allocation2 + $0x1b0] sm:$0xff]
        %v351 = vld [vmem:[#allocation2 + $0x1b8] sm:$0xff]
        %v352 = vld [vmem:[#allocation2 + $0x1c0] sm:$0xff]
        %v353 = vld [vmem:[#allocation2 + $0x1c8] sm:$0xff]
        %v354 = vld [vmem:[#allocation2 + $0x1d0] sm:$0xff]
        %v355 = vld [vmem:[#allocation2 + $0x1d8] sm:$0xff]
        %v356 = vld [vmem:[#allocation2 + $0x1e0] sm:$0xff]
        %v357 = vld [vmem:[#allocation2 + $0x1e8] sm:$0xff]
        %v358 = vld [vmem:[#allocation2 + $0x1f0] sm:$0xff]
        %v359 = vld [vmem:[#allocation2 + $0x1f8] sm:$0xff]
        %v360 = vld [vmem:[#allocation2 + $0x200] sm:$0xff]
        %v361 = vld [vmem:[#allocation2 + $0x208] sm:$0xff]
        %v362 = vld [vmem:[#allocation2 + $0x210] sm:$0xff]
        %v363 = vld [vmem:[#allocation2 + $0x218] sm:$0xff]
        %v364 = vld [vmem:[#allocation2 + $0x220] sm:$0xff]
        %v365 = vld [vmem:[#allocation2 + $0x228] sm:$0xff]
        %v366 = vld [vmem:[#allocation2 + $0x230] sm:$0xff]
        %v367 = vld [vmem:[#allocation2 + $0x238] sm:$0xff]
        %v368 = vunpack.c.l.bf16 %v296
        %v369 = vunpack.c.h.bf16 %v296
        %v370 = vunpack.c.l.bf16 %v297
        %v371 = vunpack.c.h.bf16 %v297
        %v372 = vunpack.c.l.bf16 %v298
        %v373 = vunpack.c.h.bf16 %v298
        %v374 = vunpack.c.l.bf16 %v299
        %v375 = vunpack.c.h.bf16 %v299
        %v376 = vunpack.c.l.bf16 %v300
        %v377 = vunpack.c.h.bf16 %v300
        %v378 = vunpack.c.l.bf16 %v301
        %v379 = vunpack.c.h.bf16 %v301
        %v380 = vunpack.c.l.bf16 %v302
        %v381 = vunpack.c.h.bf16 %v302
        %v382 = vunpack.c.l.bf16 %v303
        %v383 = vunpack.c.h.bf16 %v303
        %v384 = vunpack.c.l.bf16 %v304
        %v385 = vunpack.c.h.bf16 %v304
        %v386 = vunpack.c.l.bf16 %v305
        %v387 = vunpack.c.h.bf16 %v305
        %v388 = vunpack.c.l.bf16 %v306
        %v389 = vunpack.c.h.bf16 %v306
        %v390 = vunpack.c.l.bf16 %v307
        %v391 = vunpack.c.h.bf16 %v307
        %v392 = vunpack.c.l.bf16 %v308
        %v393 = vunpack.c.h.bf16 %v308
        %v394 = vunpack.c.l.bf16 %v309
        %v395 = vunpack.c.h.bf16 %v309
        %v396 = vunpack.c.l.bf16 %v310
        %v397 = vunpack.c.h.bf16 %v310
        %v398 = vunpack.c.l.bf16 %v311
        %v399 = vunpack.c.h.bf16 %v311
        %v400 = vunpack.c.l.bf16 %v312
        %v401 = vunpack.c.h.bf16 %v312
        %v402 = vunpack.c.l.bf16 %v313
        %v403 = vunpack.c.h.bf16 %v313
        %v404 = vunpack.c.l.bf16 %v314
        %v405 = vunpack.c.h.bf16 %v314
        %v406 = vunpack.c.l.bf16 %v315
        %v407 = vunpack.c.h.bf16 %v315
        %v408 = vunpack.c.l.bf16 %v316
        %v409 = vunpack.c.h.bf16 %v316
        %v410 = vunpack.c.l.bf16 %v317
        %v411 = vunpack.c.h.bf16 %v317
        %v412 = vunpack.c.l.bf16 %v318
        %v413 = vunpack.c.h.bf16 %v318
        %v414 = vunpack.c.l.bf16 %v319
        %v415 = vunpack.c.h.bf16 %v319
        %v416 = vunpack.c.l.bf16 %v320
        %v417 = vunpack.c.h.bf16 %v320
        %v418 = vunpack.c.l.bf16 %v321
        %v419 = vunpack.c.h.bf16 %v321
        %v420 = vunpack.c.l.bf16 %v322
        %v421 = vunpack.c.h.bf16 %v322
        %v422 = vunpack.c.l.bf16 %v323
        %v423 = vunpack.c.h.bf16 %v323
        %v424 = vunpack.c.l.bf16 %v324
        %v425 = vunpack.c.h.bf16 %v324
        %v426 = vunpack.c.l.bf16 %v325
        %v427 = vunpack.c.h.bf16 %v325
        %v428 = vunpack.c.l.bf16 %v326
        %v429 = vunpack.c.h.bf16 %v326
        %v430 = vunpack.c.l.bf16 %v327
        %v431 = vunpack.c.h.bf16 %v327
        %v432 = vunpack.c.l.bf16 %v328
        %v433 = vunpack.c.h.bf16 %v328
        %v434 = vunpack.c.l.bf16 %v329
        %v435 = vunpack.c.h.bf16 %v329
        %v436 = vunpack.c.l.bf16 %v330
        %v437 = vunpack.c.h.bf16 %v330
        %v438 = vunpack.c.l.bf16 %v331
        %v439 = vunpack.c.h.bf16 %v331
        %v440 = vunpack.c.l.bf16 %v332
        %v441 = vunpack.c.h.bf16 %v332
        %v442 = vunpack.c.l.bf16 %v333
        %v443 = vunpack.c.h.bf16 %v333
        %v444 = vunpack.c.l.bf16 %v334
        %v445 = vunpack.c.h.bf16 %v334
        %v446 = vunpack.c.l.bf16 %v335
        %v447 = vunpack.c.h.bf16 %v335
        %v448 = vunpack.c.l.bf16 %v336
        %v449 = vunpack.c.h.bf16 %v336
        %v450 = vunpack.c.l.bf16 %v337
        %v451 = vunpack.c.h.bf16 %v337
        %v452 = vunpack.c.l.bf16 %v338
        %v453 = vunpack.c.h.bf16 %v338
        %v454 = vunpack.c.l.bf16 %v339
        %v455 = vunpack.c.h.bf16 %v339
        %v456 = vunpack.c.l.bf16 %v340
        %v457 = vunpack.c.h.bf16 %v340
        %v458 = vunpack.c.l.bf16 %v341
        %v459 = vunpack.c.h.bf16 %v341
        %v460 = vunpack.c.l.bf16 %v342
        %v461 = vunpack.c.h.bf16 %v342
        %v462 = vunpack.c.l.bf16 %v343
        %v463 = vunpack.c.h.bf16 %v343
        %v464 = vunpack.c.l.bf16 %v344
        %v465 = vunpack.c.h.bf16 %v344
        %v466 = vunpack.c.l.bf16 %v345
        %v467 = vunpack.c.h.bf16 %v345
        %v468 = vunpack.c.l.bf16 %v346
        %v469 = vunpack.c.h.bf16 %v346
        %v470 = vunpack.c.l.bf16 %v347
        %v471 = vunpack.c.h.bf16 %v347
        %v472 = vunpack.c.l.bf16 %v348
        %v473 = vunpack.c.h.bf16 %v348
        %v474 = vunpack.c.l.bf16 %v349
        %v475 = vunpack.c.h.bf16 %v349
        %v476 = vunpack.c.l.bf16 %v350
        %v477 = vunpack.c.h.bf16 %v350
        %v478 = vunpack.c.l.bf16 %v351
        %v479 = vunpack.c.h.bf16 %v351
        %v480 = vunpack.c.l.bf16 %v352
        %v481 = vunpack.c.h.bf16 %v352
        %v482 = vunpack.c.l.bf16 %v353
        %v483 = vunpack.c.h.bf16 %v353
        %v484 = vunpack.c.l.bf16 %v354
        %v485 = vunpack.c.h.bf16 %v354
        %v486 = vunpack.c.l.bf16 %v355
        %v487 = vunpack.c.h.bf16 %v355
        %v488 = vunpack.c.l.bf16 %v356
        %v489 = vunpack.c.h.bf16 %v356
        %v490 = vunpack.c.l.bf16 %v357
        %v491 = vunpack.c.h.bf16 %v357
        %v492 = vunpack.c.l.bf16 %v358
        %v493 = vunpack.c.h.bf16 %v358
        %v494 = vunpack.c.l.bf16 %v359
        %v495 = vunpack.c.h.bf16 %v359
        %v496 = vunpack.c.l.bf16 %v360
        %v497 = vunpack.c.h.bf16 %v360
        %v498 = vunpack.c.l.bf16 %v361
        %v499 = vunpack.c.h.bf16 %v361
        %v500 = vunpack.c.l.bf16 %v362
        %v501 = vunpack.c.h.bf16 %v362
        %v502 = vunpack.c.l.bf16 %v363
        %v503 = vunpack.c.h.bf16 %v363
        %v504 = vunpack.c.l.bf16 %v364
        %v505 = vunpack.c.h.bf16 %v364
        %v506 = vunpack.c.l.bf16 %v365
        %v507 = vunpack.c.h.bf16 %v365
        %v508 = vunpack.c.l.bf16 %v366
        %v509 = vunpack.c.h.bf16 %v366
        %v510 = vunpack.c.l.bf16 %v367
        %v511 = vunpack.c.h.bf16 %v367
        %v512 = vld [vmem:[%s288] sm:$0xff]
        %v514 = vcombine.high %v512, %v512
        %vm515 = vcmask 523264
        %v516 = vsel %vm515, %v514, 0
        %518 = vmatprep.subr.mxu0 %v369
        %519 = vmatpush1.msra.mxu0 %v368
        %520 = vmatprep.subr.mxu0 %v375
        %521 = vmatpush1.msra.mxu0 %v374
        %522 = vmatprep.subr.mxu0 %v381
        %523 = vmatpush1.msra.mxu0 %v380
        %524 = vmatprep.subr.mxu0 %v387
        %525 = vmatpush1.msra.mxu0 %v386
        %526 = vmatprep.subr.mxu0 %v393
        %527 = vmatpush1.msra.mxu0 %v392
        %528 = vmatprep.subr.mxu0 %v399
        %529 = vmatpush1.msra.mxu0 %v398
        %530 = vmatprep.subr.mxu0 %v405
        %531 = vmatpush1.msra.mxu0 %v404
        %532 = vmatprep.subr.mxu0 %v411
        %533 = vmatpush1.msra.mxu0 %v410
        %534 = vmatprep.subr.mxu0 %v417
        %535 = vmatpush1.msra.mxu0 %v416
        %536 = vmatprep.subr.mxu0 %v423
        %537 = vmatpush1.msra.mxu0 %v422
        %538 = vmatprep.subr.mxu0 %v429
        %539 = vmatpush1.msra.mxu0 %v428
        %540 = vmatprep.subr.mxu0 %v435
        %541 = vmatpush1.msra.mxu0 %v434
        %542 = vmatprep.subr.mxu0 %v441
        %543 = vmatpush1.msra.mxu0 %v440
        %544 = vmatprep.subr.mxu0 %v447
        %545 = vmatpush1.msra.mxu0 %v446
        %546 = vmatprep.subr.mxu0 %v453
        %547 = vmatpush1.msra.mxu0 %v452
        %548 = vmatprep.subr.mxu0 %v459
        %549 = vmatpush1.msra.mxu0 %v458
        %550 = vmatprep.subr.mxu0 %v465
        %551 = vmatpush1.msra.mxu0 %v464
        %552 = vmatprep.subr.mxu0 %v471
        %553 = vmatpush1.msra.mxu0 %v470
        %554 = vmatprep.subr.mxu0 %v477
        %555 = vmatpush1.msra.mxu0 %v476
        %556 = vmatprep.subr.mxu0 %v483
        %557 = vmatpush1.msra.mxu0 %v482
        %558 = vmatprep.subr.mxu0 %v489
        %559 = vmatpush1.msra.mxu0 %v488
        %560 = vmatprep.subr.mxu0 %v495
        %561 = vmatpush1.msra.mxu0 %v494
        %562 = vmatprep.subr.mxu0 %v501
        %563 = vmatpush1.msra.mxu0 %v500
        %564 = vmatprep.subr.mxu0 %v507
        %565 = vmatpush1.msra.mxu0 %v506
        %566 = vmatprep.subr.mxu0 0.0
        %567 = vmatpush1.msra.mxu0 0.0
        %568 = vmatprep.subr.mxu0 0.0
        %569 = vmatpush1.msra.mxu0 0.0
        %570 = vmatprep.subr.mxu0 0.0
        %571 = vmatpush1.msra.mxu0 0.0
        %572 = vmatprep.subr.mxu0 0.0
        %573 = vmatpush1.msra.mxu0 0.0
        %574 = vmatprep.subr.mxu0 0.0
        %575 = vmatpush1.msra.mxu0 0.0
        %576 = vmatprep.subr.mxu0 0.0
        %577 = vmatpush1.msra.mxu0 0.0
        %578 = vmatprep.subr.mxu0 0.0
        %579 = vmatpush1.msra.mxu0 0.0
        %580 = vmatprep.subr.mxu0 0.0
        %581 = vmatpush1.msra.mxu0 0.0
        %582 = vmatprep.mubr.f32.mxu0 %v516
        %583 = vmatmul.mubr.f32.gmra.mrb[0].mxu0 %v512
        %v584 = vpop.f32.mrb[0].mxu0
        %v585 = vadd.f32 0.0, %v584
        %v586 = vpop.f32.mrb[0].mxu0
        %v587 = vadd.f32 0.0, %v586
        %588 = vdwg.mxu0
        %589 = vmatprep.subr.mxu0 %v371
        %590 = vmatpush1.msra.mxu0 %v370
        %591 = vmatprep.subr.mxu0 %v377
        %592 = vmatpush1.msra.mxu0 %v376
        %593 = vmatprep.subr.mxu0 %v383
        %594 = vmatpush1.msra.mxu0 %v382
        %595 = vmatprep.subr.mxu0 %v389
        %596 = vmatpush1.msra.mxu0 %v388
        %597 = vmatprep.subr.mxu0 %v395
        %598 = vmatpush1.msra.mxu0 %v394
        %599 = vmatprep.subr.mxu0 %v401
        %600 = vmatpush1.msra.mxu0 %v400
        %601 = vmatprep.subr.mxu0 %v407
        %602 = vmatpush1.msra.mxu0 %v406
        %603 = vmatprep.subr.mxu0 %v413
        %604 = vmatpush1.msra.mxu0 %v412
        %605 = vmatprep.subr.mxu0 %v419
        %606 = vmatpush1.msra.mxu0 %v418
        %607 = vmatprep.subr.mxu0 %v425
        %608 = vmatpush1.msra.mxu0 %v424
        %609 = vmatprep.subr.mxu0 %v431
        %610 = vmatpush1.msra.mxu0 %v430
        %611 = vmatprep.subr.mxu0 %v437
        %612 = vmatpush1.msra.mxu0 %v436
        %613 = vmatprep.subr.mxu0 %v443
        %614 = vmatpush1.msra.mxu0 %v442
        %615 = vmatprep.subr.mxu0 %v449
        %616 = vmatpush1.msra.mxu0 %v448
        %617 = vmatprep.subr.mxu0 %v455
        %618 = vmatpush1.msra.mxu0 %v454
        %619 = vmatprep.subr.mxu0 %v461
        %620 = vmatpush1.msra.mxu0 %v460
        %621 = vmatprep.subr.mxu0 %v467
        %622 = vmatpush1.msra.mxu0 %v466
        %623 = vmatprep.subr.mxu0 %v473
        %624 = vmatpush1.msra.mxu0 %v472
        %625 = vmatprep.subr.mxu0 %v479
        %626 = vmatpush1.msra.mxu0 %v478
        %627 = vmatprep.subr.mxu0 %v485
        %628 = vmatpush1.msra.mxu0 %v484
        %629 = vmatprep.subr.mxu0 %v491
        %630 = vmatpush1.msra.mxu0 %v490
        %631 = vmatprep.subr.mxu0 %v497
        %632 = vmatpush1.msra.mxu0 %v496
        %633 = vmatprep.subr.mxu0 %v503
        %634 = vmatpush1.msra.mxu0 %v502
        %635 = vmatprep.subr.mxu0 %v509
        %636 = vmatpush1.msra.mxu0 %v508
        %637 = vmatprep.subr.mxu0 0.0
        %638 = vmatpush1.msra.mxu0 0.0
        %639 = vmatprep.subr.mxu0 0.0
        %640 = vmatpush1.msra.mxu0 0.0
        %641 = vmatprep.subr.mxu0 0.0
        %642 = vmatpush1.msra.mxu0 0.0
        %643 = vmatprep.subr.mxu0 0.0
        %644 = vmatpush1.msra.mxu0 0.0
        %645 = vmatprep.subr.mxu0 0.0
        %646 = vmatpush1.msra.mxu0 0.0
        %647 = vmatprep.subr.mxu0 0.0
        %648 = vmatpush1.msra.mxu0 0.0
        %649 = vmatprep.subr.mxu0 0.0
        %650 = vmatpush1.msra.mxu0 0.0
        %651 = vmatprep.subr.mxu0 0.0
        %652 = vmatpush1.msra.mxu0 0.0
        %653 = vmatprep.mubr.f32.mxu0 %v516
        %654 = vmatmul.mubr.f32.gmra.mrb[0].mxu0 %v512
        %v655 = vpop.f32.mrb[0].mxu0
        %v656 = vadd.f32 0.0, %v655
        %v657 = vpop.f32.mrb[0].mxu0
        %v658 = vadd.f32 0.0, %v657
        %659 = vdwg.mxu0
        %660 = vmatprep.subr.mxu0 %v373
        %661 = vmatpush1.msra.mxu0 %v372
        %662 = vmatprep.subr.mxu0 %v379
        %663 = vmatpush1.msra.mxu0 %v378
        %664 = vmatprep.subr.mxu0 %v385
        %665 = vmatpush1.msra.mxu0 %v384
        %666 = vmatprep.subr.mxu0 %v391
        %667 = vmatpush1.msra.mxu0 %v390
        %668 = vmatprep.subr.mxu0 %v397
        %669 = vmatpush1.msra.mxu0 %v396
        %670 = vmatprep.subr.mxu0 %v403
        %671 = vmatpush1.msra.mxu0 %v402
        %672 = vmatprep.subr.mxu0 %v409
        %673 = vmatpush1.msra.mxu0 %v408
        %674 = vmatprep.subr.mxu0 %v415
        %675 = vmatpush1.msra.mxu0 %v414
        %676 = vmatprep.subr.mxu0 %v421
        %677 = vmatpush1.msra.mxu0 %v420
        %678 = vmatprep.subr.mxu0 %v427
        %679 = vmatpush1.msra.mxu0 %v426
        %680 = vmatprep.subr.mxu0 %v433
        %681 = vmatpush1.msra.mxu0 %v432
        %682 = vmatprep.subr.mxu0 %v439
        %683 = vmatpush1.msra.mxu0 %v438
        %684 = vmatprep.subr.mxu0 %v445
        %685 = vmatpush1.msra.mxu0 %v444
        %686 = vmatprep.subr.mxu0 %v451
        %687 = vmatpush1.msra.mxu0 %v450
        %688 = vmatprep.subr.mxu0 %v457
        %689 = vmatpush1.msra.mxu0 %v456
        %690 = vmatprep.subr.mxu0 %v463
        %691 = vmatpush1.msra.mxu0 %v462
        %692 = vmatprep.subr.mxu0 %v469
        %693 = vmatpush1.msra.mxu0 %v468
        %694 = vmatprep.subr.mxu0 %v475
        %695 = vmatpush1.msra.mxu0 %v474
        %696 = vmatprep.subr.mxu0 %v481
        %697 = vmatpush1.msra.mxu0 %v480
        %698 = vmatprep.subr.mxu0 %v487
        %699 = vmatpush1.msra.mxu0 %v486
        %700 = vmatprep.subr.mxu0 %v493
        %701 = vmatpush1.msra.mxu0 %v492
        %702 = vmatprep.subr.mxu0 %v499
        %703 = vmatpush1.msra.mxu0 %v498
        %704 = vmatprep.subr.mxu0 %v505
        %705 = vmatpush1.msra.mxu0 %v504
        %706 = vmatprep.subr.mxu0 %v511
        %707 = vmatpush1.msra.mxu0 %v510
        %708 = vmatprep.subr.mxu0 0.0
        %709 = vmatpush1.msra.mxu0 0.0
        %710 = vmatprep.subr.mxu0 0.0
        %711 = vmatpush1.msra.mxu0 0.0
        %712 = vmatprep.subr.mxu0 0.0
        %713 = vmatpush1.msra.mxu0 0.0
        %714 = vmatprep.subr.mxu0 0.0
        %715 = vmatpush1.msra.mxu0 0.0
        %716 = vmatprep.subr.mxu0 0.0
        %717 = vmatpush1.msra.mxu0 0.0
        %718 = vmatprep.subr.mxu0 0.0
        %719 = vmatpush1.msra.mxu0 0.0
        %720 = vmatprep.subr.mxu0 0.0
        %721 = vmatpush1.msra.mxu0 0.0
        %722 = vmatprep.subr.mxu0 0.0
        %723 = vmatpush1.msra.mxu0 0.0
        %724 = vmatprep.mubr.f32.mxu0 %v516
        %725 = vmatmul.mubr.f32.gmra.mrb[0].mxu0 %v512
        %v726 = vpop.f32.mrb[0].mxu0
        %v727 = vadd.f32 0.0, %v726
        %v728 = vpop.f32.mrb[0].mxu0
        %v729 = vadd.f32 0.0, %v728
        %730 = vdwg.mxu0
        %731 = vrot.lane.b32.xlu0 %v585, 17
        %v732 = vpop.permute.xlu0 %731
        %733 = vrot.lane.b32.xlu0 %v587, 17
        %v734 = vpop.permute.xlu0 %733
        %735 = vrot.lane.b32.xlu0 %v656, 17
        %v736 = vpop.permute.xlu0 %735
        %737 = vrot.lane.b32.xlu0 %v658, 17
        %v738 = vpop.permute.xlu0 %737
        %739 = vrot.lane.b32.xlu0 %v727, 17
        %v740 = vpop.permute.xlu0 %739
        %741 = vrot.lane.b32.xlu0 %v729, 17
        %v742 = vpop.permute.xlu0 %741
        %v743 = vlaneseq
        %v744 = vand.u32 %v743, 127
        %vm745 = vcmp.lt.s32.totalorder %v744, 17
        %v746 = vsel %vm745, %v740, %v742
        %v747 = vsel %vm745, %v738, %v740
        %v748 = vsel %vm745, %v736, %v738
        %v749 = vsel %vm745, %v734, %v736
        %v750 = vsel %vm745, %v732, %v734
        %v751 = vsel %vm745, %v742, %v732
        %v752 = vld [vmem:[%s2] ss:$8 sm:$0xf]
        %v753 = vld [vmem:[%s2] ss:$8 sm:$0x30]
        %v754 = vor.u32 %v752, %v753
        %v756 = vlaneseq
        %v757 = vshrl.u32 %v756, 7
        %v758 = vsub.s32 0, %v757
        %v759 = vrot.slane %v754, %v758
        %v760 = vlaneseq
        %v761 = vshrl.u32 %v760, 7
        %v762 = vsub.s32 1, %v761
        %v763 = vrot.slane %v754, %v762
        %v764 = vlaneseq
        %v765 = vshrl.u32 %v764, 7
        %v766 = vsub.s32 2, %v765
        %v767 = vrot.slane %v754, %v766
        %v768 = vlaneseq
        %v769 = vshrl.u32 %v768, 7
        %v770 = vsub.s32 3, %v769
        %v771 = vrot.slane %v754, %v770
        %v772 = vlaneseq
        %v773 = vshrl.u32 %v772, 7
        %v774 = vsub.s32 4, %v773
        %v775 = vrot.slane %v754, %v774
        %v776 = vlaneseq
        %v777 = vshrl.u32 %v776, 7
        %v778 = vsub.s32 5, %v777
        %v779 = vrot.slane %v754, %v778
        %v786 = vmul.f32 %v751, %v759
        %v787 = vmul.f32 %v750, %v763
        %v788 = vmul.f32 %v749, %v767
        %v789 = vmul.f32 %v748, %v771
        %v790 = vmul.f32 %v747, %v775
        %v791 = vmul.f32 %v746, %v779
        %792 = vrot.lane.b32.xlu0 %v585, 16
        %v793 = vpop.permute.xlu0 %792
        %794 = vrot.lane.b32.xlu0 %v587, 16
        %v795 = vpop.permute.xlu0 %794
        %796 = vrot.lane.b32.xlu0 %v656, 16
        %v797 = vpop.permute.xlu0 %796
        %798 = vrot.lane.b32.xlu0 %v658, 16
        %v799 = vpop.permute.xlu0 %798
        %800 = vrot.lane.b32.xlu0 %v727, 16
        %v801 = vpop.permute.xlu0 %800
        %802 = vrot.lane.b32.xlu0 %v729, 16
        %v803 = vpop.permute.xlu0 %802
        %vm804 = vcmp.lt.s32.totalorder %v744, 16
        %v805 = vsel %vm804, %v801, %v803
        %v806 = vsel %vm804, %v799, %v801
        %v807 = vsel %vm804, %v797, %v799
        %v808 = vsel %vm804, %v795, %v797
        %v809 = vsel %vm804, %v793, %v795
        %v810 = vsel %vm804, %v803, %v793
        %s811 = scalar_lea.vmem %s2, 1
        %v812 = vld [vmem:[%s811] ss:$8 sm:$0xf]
        %v813 = vld [vmem:[%s811] ss:$8 sm:$0x30]
        %v814 = vor.u32 %v812, %v813
        %v816 = vlaneseq
        %v817 = vshrl.u32 %v816, 7
        %v818 = vsub.s32 0, %v817
        %v819 = vrot.slane %v814, %v818
        %v820 = vlaneseq
        %v821 = vshrl.u32 %v820, 7
        %v822 = vsub.s32 1, %v821
        %v823 = vrot.slane %v814, %v822
        %v824 = vlaneseq
        %v825 = vshrl.u32 %v824, 7
        %v826 = vsub.s32 2, %v825
        %v827 = vrot.slane %v814, %v826
        %v828 = vlaneseq
        %v829 = vshrl.u32 %v828, 7
        %v830 = vsub.s32 3, %v829
        %v831 = vrot.slane %v814, %v830
        %v832 = vlaneseq
        %v833 = vshrl.u32 %v832, 7
        %v834 = vsub.s32 4, %v833
        %v835 = vrot.slane %v814, %v834
        %v836 = vlaneseq
        %v837 = vshrl.u32 %v836, 7
        %v838 = vsub.s32 5, %v837
        %v839 = vrot.slane %v814, %v838
        %v846 = vmul.f32 %v810, %v819
        %v847 = vmul.f32 %v809, %v823
        %v848 = vmul.f32 %v808, %v827
        %v849 = vmul.f32 %v807, %v831
        %v850 = vmul.f32 %v806, %v835
        %v851 = vmul.f32 %v805, %v839
        %852 = vrot.lane.b32.xlu0 %v585, 15
        %v853 = vpop.permute.xlu0 %852
        %854 = vrot.lane.b32.xlu0 %v587, 15
        %v855 = vpop.permute.xlu0 %854
        %856 = vrot.lane.b32.xlu0 %v656, 15
        %v857 = vpop.permute.xlu0 %856
        %858 = vrot.lane.b32.xlu0 %v658, 15
        %v859 = vpop.permute.xlu0 %858
        %860 = vrot.lane.b32.xlu0 %v727, 15
        %v861 = vpop.permute.xlu0 %860
        %862 = vrot.lane.b32.xlu0 %v729, 15
        %v863 = vpop.permute.xlu0 %862
        %vm864 = vcmp.lt.s32.totalorder %v744, 15
        %v865 = vsel %vm864, %v861, %v863
        %v866 = vsel %vm864, %v859, %v861
        %v867 = vsel %vm864, %v857, %v859
        %v868 = vsel %vm864, %v855, %v857
        %v869 = vsel %vm864, %v853, %v855
        %v870 = vsel %vm864, %v863, %v853
        %s871 = scalar_lea.vmem %s2, 2
        %v872 = vld [vmem:[%s871] ss:$8 sm:$0xf]
        %v873 = vld [vmem:[%s871] ss:$8 sm:$0x30]
        %v874 = vor.u32 %v872, %v873
        %v876 = vlaneseq
        %v877 = vshrl.u32 %v876, 7
        %v878 = vsub.s32 0, %v877
        %v879 = vrot.slane %v874, %v878
        %v880 = vlaneseq
        %v881 = vshrl.u32 %v880, 7
        %v882 = vsub.s32 1, %v881
        %v883 = vrot.slane %v874, %v882
        %v884 = vlaneseq
        %v885 = vshrl.u32 %v884, 7
        %v886 = vsub.s32 2, %v885
        %v887 = vrot.slane %v874, %v886
        %v888 = vlaneseq
        %v889 = vshrl.u32 %v888, 7
        %v890 = vsub.s32 3, %v889
        %v891 = vrot.slane %v874, %v890
        %v892 = vlaneseq
        %v893 = vshrl.u32 %v892, 7
        %v894 = vsub.s32 4, %v893
        %v895 = vrot.slane %v874, %v894
        %v896 = vlaneseq
        %v897 = vshrl.u32 %v896, 7
        %v898 = vsub.s32 5, %v897
        %v899 = vrot.slane %v874, %v898
        %v906 = vmul.f32 %v870, %v879
        %v907 = vmul.f32 %v869, %v883
        %v908 = vmul.f32 %v868, %v887
        %v909 = vmul.f32 %v867, %v891
        %v910 = vmul.f32 %v866, %v895
        %v911 = vmul.f32 %v865, %v899
        %912 = vrot.lane.b32.xlu0 %v585, 1
        %v913 = vpop.permute.xlu0 %912
        %914 = vrot.lane.b32.xlu0 %v587, 1
        %v915 = vpop.permute.xlu0 %914
        %916 = vrot.lane.b32.xlu0 %v656, 1
        %v917 = vpop.permute.xlu0 %916
        %918 = vrot.lane.b32.xlu0 %v658, 1
        %v919 = vpop.permute.xlu0 %918
        %920 = vrot.lane.b32.xlu0 %v727, 1
        %v921 = vpop.permute.xlu0 %920
        %922 = vrot.lane.b32.xlu0 %v729, 1
        %v923 = vpop.permute.xlu0 %922
        %vm924 = vcmp.lt.s32.totalorder %v744, 1
        %v925 = vsel %vm924, %v921, %v923
        %v926 = vsel %vm924, %v919, %v921
        %v927 = vsel %vm924, %v917, %v919
        %v928 = vsel %vm924, %v915, %v917
        %v929 = vsel %vm924, %v913, %v915
        %v930 = vsel %vm924, %v923, %v913
        %s931 = scalar_lea.vmem %s2, 3
        %v932 = vld [vmem:[%s931] ss:$8 sm:$0xf]
        %v933 = vld [vmem:[%s931] ss:$8 sm:$0x30]
        %v934 = vor.u32 %v932, %v933
        %v936 = vlaneseq
        %v937 = vshrl.u32 %v936, 7
        %v938 = vsub.s32 0, %v937
        %v939 = vrot.slane %v934, %v938
        %v940 = vlaneseq
        %v941 = vshrl.u32 %v940, 7
        %v942 = vsub.s32 1, %v941
        %v943 = vrot.slane %v934, %v942
        %v944 = vlaneseq
        %v945 = vshrl.u32 %v944, 7
        %v946 = vsub.s32 2, %v945
        %v947 = vrot.slane %v934, %v946
        %v948 = vlaneseq
        %v949 = vshrl.u32 %v948, 7
        %v950 = vsub.s32 3, %v949
        %v951 = vrot.slane %v934, %v950
        %v952 = vlaneseq
        %v953 = vshrl.u32 %v952, 7
        %v954 = vsub.s32 4, %v953
        %v955 = vrot.slane %v934, %v954
        %v956 = vlaneseq
        %v957 = vshrl.u32 %v956, 7
        %v958 = vsub.s32 5, %v957
        %v959 = vrot.slane %v934, %v958
        %v966 = vmul.f32 %v930, %v939
        %v967 = vmul.f32 %v929, %v943
        %v968 = vmul.f32 %v928, %v947
        %v969 = vmul.f32 %v927, %v951
        %v970 = vmul.f32 %v926, %v955
        %v971 = vmul.f32 %v925, %v959
        %972 = vrot.lane.b32.xlu0 %v585, 127
        %v973 = vpop.permute.xlu0 %972
        %974 = vrot.lane.b32.xlu0 %v587, 127
        %v975 = vpop.permute.xlu0 %974
        %976 = vrot.lane.b32.xlu0 %v656, 127
        %v977 = vpop.permute.xlu0 %976
        %978 = vrot.lane.b32.xlu0 %v658, 127
        %v979 = vpop.permute.xlu0 %978
        %980 = vrot.lane.b32.xlu0 %v727, 127
        %v981 = vpop.permute.xlu0 %980
        %982 = vrot.lane.b32.xlu0 %v729, 127
        %v983 = vpop.permute.xlu0 %982
        %vm984 = vcmp.lt.s32.totalorder %v744, 127
        %v985 = vsel %vm984, %v981, %v983
        %v986 = vsel %vm984, %v979, %v981
        %v987 = vsel %vm984, %v977, %v979
        %v988 = vsel %vm984, %v975, %v977
        %v989 = vsel %vm984, %v973, %v975
        %v990 = vsel %vm984, %v983, %v973
        %s991 = scalar_lea.vmem %s2, 5
        %v992 = vld [vmem:[%s991] ss:$8 sm:$0xf]
        %v993 = vld [vmem:[%s991] ss:$8 sm:$0x30]
        %v994 = vor.u32 %v992, %v993
        %v996 = vlaneseq
        %v997 = vshrl.u32 %v996, 7
        %v998 = vsub.s32 0, %v997
        %v999 = vrot.slane %v994, %v998
        %v1000 = vlaneseq
        %v1001 = vshrl.u32 %v1000, 7
        %v1002 = vsub.s32 1, %v1001
        %v1003 = vrot.slane %v994, %v1002
        %v1004 = vlaneseq
        %v1005 = vshrl.u32 %v1004, 7
        %v1006 = vsub.s32 2, %v1005
        %v1007 = vrot.slane %v994, %v1006
        %v1008 = vlaneseq
        %v1009 = vshrl.u32 %v1008, 7
        %v1010 = vsub.s32 3, %v1009
        %v1011 = vrot.slane %v994, %v1010
        %v1012 = vlaneseq
        %v1013 = vshrl.u32 %v1012, 7
        %v1014 = vsub.s32 4, %v1013
        %v1015 = vrot.slane %v994, %v1014
        %v1016 = vlaneseq
        %v1017 = vshrl.u32 %v1016, 7
        %v1018 = vsub.s32 5, %v1017
        %v1019 = vrot.slane %v994, %v1018
        %v1026 = vmul.f32 %v989, %v999
        %v1027 = vmul.f32 %v988, %v1003
        %v1028 = vmul.f32 %v987, %v1007
        %v1029 = vmul.f32 %v986, %v1011
        %v1030 = vmul.f32 %v985, %v1015
        %v1031 = vmul.f32 %v990, %v1019
        %1032 = vrot.lane.b32.xlu0 %v585, 113
        %v1033 = vpop.permute.xlu0 %1032
        %1034 = vrot.lane.b32.xlu0 %v587, 113
        %v1035 = vpop.permute.xlu0 %1034
        %1036 = vrot.lane.b32.xlu0 %v656, 113
        %v1037 = vpop.permute.xlu0 %1036
        %1038 = vrot.lane.b32.xlu0 %v658, 113
        %v1039 = vpop.permute.xlu0 %1038
        %1040 = vrot.lane.b32.xlu0 %v727, 113
        %v1041 = vpop.permute.xlu0 %1040
        %1042 = vrot.lane.b32.xlu0 %v729, 113
        %v1043 = vpop.permute.xlu0 %1042
        %vm1044 = vcmp.lt.s32.totalorder %v744, 113
        %v1045 = vsel %vm1044, %v1041, %v1043
        %v1046 = vsel %vm1044, %v1039, %v1041
        %v1047 = vsel %vm1044, %v1037, %v1039
        %v1048 = vsel %vm1044, %v1035, %v1037
        %v1049 = vsel %vm1044, %v1033, %v1035
        %v1050 = vsel %vm1044, %v1043, %v1033
        %s1051 = scalar_lea.vmem %s2, 6
        %v1052 = vld [vmem:[%s1051] ss:$8 sm:$0xf]
        %v1053 = vld [vmem:[%s1051] ss:$8 sm:$0x30]
        %v1054 = vor.u32 %v1052, %v1053
        %v1056 = vlaneseq
        %v1057 = vshrl.u32 %v1056, 7
        %v1058 = vsub.s32 0, %v1057
        %v1059 = vrot.slane %v1054, %v1058
        %v1060 = vlaneseq
        %v1061 = vshrl.u32 %v1060, 7
        %v1062 = vsub.s32 1, %v1061
        %v1063 = vrot.slane %v1054, %v1062
        %v1064 = vlaneseq
        %v1065 = vshrl.u32 %v1064, 7
        %v1066 = vsub.s32 2, %v1065
        %v1067 = vrot.slane %v1054, %v1066
        %v1068 = vlaneseq
        %v1069 = vshrl.u32 %v1068, 7
        %v1070 = vsub.s32 3, %v1069
        %v1071 = vrot.slane %v1054, %v1070
        %v1072 = vlaneseq
        %v1073 = vshrl.u32 %v1072, 7
        %v1074 = vsub.s32 4, %v1073
        %v1075 = vrot.slane %v1054, %v1074
        %v1076 = vlaneseq
        %v1077 = vshrl.u32 %v1076, 7
        %v1078 = vsub.s32 5, %v1077
        %v1079 = vrot.slane %v1054, %v1078
        %v1086 = vmul.f32 %v1049, %v1059
        %v1087 = vmul.f32 %v1048, %v1063
        %v1088 = vmul.f32 %v1047, %v1067
        %v1089 = vmul.f32 %v1046, %v1071
        %v1090 = vmul.f32 %v1045, %v1075
        %v1091 = vmul.f32 %v1050, %v1079
        %1092 = vrot.lane.b32.xlu0 %v585, 112
        %v1093 = vpop.permute.xlu0 %1092
        %1094 = vrot.lane.b32.xlu0 %v587, 112
        %v1095 = vpop.permute.xlu0 %1094
        %1096 = vrot.lane.b32.xlu0 %v656, 112
        %v1097 = vpop.permute.xlu0 %1096
        %1098 = vrot.lane.b32.xlu0 %v658, 112
        %v1099 = vpop.permute.xlu0 %1098
        %1100 = vrot.lane.b32.xlu0 %v727, 112
        %v1101 = vpop.permute.xlu0 %1100
        %1102 = vrot.lane.b32.xlu0 %v729, 112
        %v1103 = vpop.permute.xlu0 %1102
        %vm1104 = vcmp.lt.s32.totalorder %v744, 112
        %v1105 = vsel %vm1104, %v1101, %v1103
        %v1106 = vsel %vm1104, %v1099, %v1101
        %v1107 = vsel %vm1104, %v1097, %v1099
        %v1108 = vsel %vm1104, %v1095, %v1097
        %v1109 = vsel %vm1104, %v1093, %v1095
        %v1110 = vsel %vm1104, %v1103, %v1093
        %s1111 = scalar_lea.vmem %s2, 7
        %v1112 = vld [vmem:[%s1111] ss:$8 sm:$0xf]
        %v1113 = vld [vmem:[%s1111] ss:$8 sm:$0x30]
        %v1114 = vor.u32 %v1112, %v1113
        %v1116 = vlaneseq
        %v1117 = vshrl.u32 %v1116, 7
        %v1118 = vsub.s32 0, %v1117
        %v1119 = vrot.slane %v1114, %v1118
        %v1120 = vlaneseq
        %v1121 = vshrl.u32 %v1120, 7
        %v1122 = vsub.s32 1, %v1121
        %v1123 = vrot.slane %v1114, %v1122
        %v1124 = vlaneseq
        %v1125 = vshrl.u32 %v1124, 7
        %v1126 = vsub.s32 2, %v1125
        %v1127 = vrot.slane %v1114, %v1126
        %v1128 = vlaneseq
        %v1129 = vshrl.u32 %v1128, 7
        %v1130 = vsub.s32 3, %v1129
        %v1131 = vrot.slane %v1114, %v1130
        %v1132 = vlaneseq
        %v1133 = vshrl.u32 %v1132, 7
        %v1134 = vsub.s32 4, %v1133
        %v1135 = vrot.slane %v1114, %v1134
        %v1136 = vlaneseq
        %v1137 = vshrl.u32 %v1136, 7
        %v1138 = vsub.s32 5, %v1137
        %v1139 = vrot.slane %v1114, %v1138
        %v1146 = vmul.f32 %v1109, %v1119
        %v1147 = vmul.f32 %v1108, %v1123
        %v1148 = vmul.f32 %v1107, %v1127
        %v1149 = vmul.f32 %v1106, %v1131
        %v1150 = vmul.f32 %v1105, %v1135
        %v1151 = vmul.f32 %v1110, %v1139
        %1152 = vrot.lane.b32.xlu0 %v585, 111
        %v1153 = vpop.permute.xlu0 %1152
        %1154 = vrot.lane.b32.xlu0 %v587, 111
        %v1155 = vpop.permute.xlu0 %1154
        %1156 = vrot.lane.b32.xlu0 %v656, 111
        %v1157 = vpop.permute.xlu0 %1156
        %1158 = vrot.lane.b32.xlu0 %v658, 111
        %v1159 = vpop.permute.xlu0 %1158
        %1160 = vrot.lane.b32.xlu0 %v727, 111
        %v1161 = vpop.permute.xlu0 %1160
        %1162 = vrot.lane.b32.xlu0 %v729, 111
        %v1163 = vpop.permute.xlu0 %1162
        %vm1164 = vcmp.lt.s32.totalorder %v744, 111
        %v1165 = vsel %vm1164, %v1161, %v1163
        %v1166 = vsel %vm1164, %v1159, %v1161
        %v1167 = vsel %vm1164, %v1157, %v1159
        %v1168 = vsel %vm1164, %v1155, %v1157
        %v1169 = vsel %vm1164, %v1153, %v1155
        %v1170 = vsel %vm1164, %v1163, %v1153
        %s1171 = scalar_lea.vmem %s2, 48
        %v1172 = vld [vmem:[%s1171] ss:$8 sm:$0xf]
        %v1173 = vld [vmem:[%s1171] ss:$8 sm:$0x30]
        %v1174 = vor.u32 %v1172, %v1173
        %v1176 = vlaneseq
        %v1177 = vshrl.u32 %v1176, 7
        %v1178 = vsub.s32 0, %v1177
        %v1179 = vrot.slane %v1174, %v1178
        %v1180 = vlaneseq
        %v1181 = vshrl.u32 %v1180, 7
        %v1182 = vsub.s32 1, %v1181
        %v1183 = vrot.slane %v1174, %v1182
        %v1184 = vlaneseq
        %v1185 = vshrl.u32 %v1184, 7
        %v1186 = vsub.s32 2, %v1185
        %v1187 = vrot.slane %v1174, %v1186
        %v1188 = vlaneseq
        %v1189 = vshrl.u32 %v1188, 7
        %v1190 = vsub.s32 3, %v1189
        %v1191 = vrot.slane %v1174, %v1190
        %v1192 = vlaneseq
        %v1193 = vshrl.u32 %v1192, 7
        %v1194 = vsub.s32 4, %v1193
        %v1195 = vrot.slane %v1174, %v1194
        %v1196 = vlaneseq
        %v1197 = vshrl.u32 %v1196, 7
        %v1198 = vsub.s32 5, %v1197
        %v1199 = vrot.slane %v1174, %v1198
        %v1206 = vmul.f32 %v1169, %v1179
        %v1207 = vmul.f32 %v1168, %v1183
        %v1208 = vmul.f32 %v1167, %v1187
        %v1209 = vmul.f32 %v1166, %v1191
        %v1210 = vmul.f32 %v1165, %v1195
        %v1211 = vmul.f32 %v1170, %v1199
        %v1218 = vrot.slane %v846, 4
        %v1219 = vrot.slane %v847, 4
        %v1220 = vrot.slane %v848, 4
        %v1221 = vrot.slane %v849, 4
        %v1222 = vrot.slane %v850, 4
        %v1223 = vrot.slane %v851, 4
        %v1236 = vrot.slane %v966, 4
        %v1237 = vrot.slane %v967, 4
        %v1238 = vrot.slane %v968, 4
        %v1239 = vrot.slane %v969, 4
        %v1240 = vrot.slane %v970, 4
        %v1241 = vrot.slane %v971, 4
        %v1254 = vrot.slane %v1026, 4
        %v1255 = vrot.slane %v1027, 4
        %v1256 = vrot.slane %v1028, 4
        %v1257 = vrot.slane %v1029, 4
        %v1258 = vrot.slane %v1030, 4
        %v1259 = vrot.slane %v1031, 4
        %v1272 = vrot.slane %v1146, 4
        %v1273 = vrot.slane %v1147, 4
        %v1274 = vrot.slane %v1148, 4
        %v1275 = vrot.slane %v1149, 4
        %v1276 = vrot.slane %v1150, 4
        %v1277 = vrot.slane %v1151, 4
        %vm1284 = vcmask 1043456
        %v1285 = vsel %vm1284, %v786, %v1218
        %v1286 = vsel %vm1284, %v787, %v1219
        %v1287 = vsel %vm1284, %v788, %v1220
        %v1288 = vsel %vm1284, %v789, %v1221
        %v1289 = vsel %vm1284, %v790, %v1222
        %v1290 = vsel %vm1284, %v791, %v1223
        %v1291 = vsel %vm1284, %v906, %v1236
        %v1292 = vsel %vm1284, %v907, %v1237
        %v1293 = vsel %vm1284, %v908, %v1238
        %v1294 = vsel %vm1284, %v909, %v1239
        %v1295 = vsel %vm1284, %v910, %v1240
        %v1296 = vsel %vm1284, %v911, %v1241
        %v1297 = vsel %vm1284, %v585, %v1254
        %v1298 = vsel %vm1284, %v587, %v1255
        %v1299 = vsel %vm1284, %v656, %v1256
        %v1300 = vsel %vm1284, %v658, %v1257
        %v1301 = vsel %vm1284, %v727, %v1258
        %v1302 = vsel %vm1284, %v729, %v1259
        %v1303 = vsel %vm1284, %v1086, %v1272
        %v1304 = vsel %vm1284, %v1087, %v1273
        %v1305 = vsel %vm1284, %v1088, %v1274
        %v1306 = vsel %vm1284, %v1089, %v1275
        %v1307 = vsel %vm1284, %v1090, %v1276
        %v1308 = vsel %vm1284, %v1091, %v1277
        %v1309 = vld [vmem:[%s3] sm:$0xf]
        %1311 = vset.pattern.permute.xlu0 0
        %1312 = vperm.xlu0 %1311, %v294
        %v1313 = vpop.permute.xlu0 %1312
        %vm1315 = vcmask 293888
        %v1317 = vsel %vm1315, %v1309, 0
        %v1320 = vsel %vm1284, %v1206, 0
        %v1323 = vsel %vm1284, %v1207, 0
        %v1326 = vsel %vm1284, %v1208, 0
        %v1329 = vsel %vm1284, %v1209, 0
        %v1332 = vsel %vm1284, %v1210, 0
        %v1335 = vsel %vm1284, %v1211, 0
        %1337 = vmatprep.subr.mxu0 %v1286
        %1338 = vmatpush1.msra.mxu0 %v1285
        %1339 = vmatprep.subr.mxu0 %v1292
        %1340 = vmatpush1.msra.mxu0 %v1291
        %1341 = vmatprep.subr.mxu0 %v1298
        %1342 = vmatpush1.msra.mxu0 %v1297
        %1343 = vmatprep.subr.mxu0 %v1304
        %1344 = vmatpush1.msra.mxu0 %v1303
        %1345 = vmatprep.subr.mxu0 %v1323
        %1346 = vmatpush1.msra.mxu0 %v1320
        %1347 = vmatprep.subr.mxu0 0.0
        %1348 = vmatpush1.msra.mxu0 0.0
        %1349 = vmatprep.subr.mxu0 0.0
        %1350 = vmatpush1.msra.mxu0 0.0
        %1351 = vmatprep.subr.mxu0 0.0
        %1352 = vmatpush1.msra.mxu0 0.0
        %1353 = vmatprep.subr.mxu0 0.0
        %1354 = vmatpush1.msra.mxu0 0.0
        %1355 = vmatprep.subr.mxu0 0.0
        %1356 = vmatpush1.msra.mxu0 0.0
        %1357 = vmatprep.subr.mxu0 0.0
        %1358 = vmatpush1.msra.mxu0 0.0
        %1359 = vmatprep.subr.mxu0 0.0
        %1360 = vmatpush1.msra.mxu0 0.0
        %1361 = vmatprep.subr.mxu0 0.0
        %1362 = vmatpush1.msra.mxu0 0.0
        %1363 = vmatprep.subr.mxu0 0.0
        %1364 = vmatpush1.msra.mxu0 0.0
        %1365 = vmatprep.subr.mxu0 0.0
        %1366 = vmatpush1.msra.mxu0 0.0
        %1367 = vmatprep.subr.mxu0 0.0
        %1368 = vmatpush1.msra.mxu0 0.0
        %1369 = vmatprep.subr.mxu0 0.0
        %1370 = vmatpush1.msra.mxu0 0.0
        %1371 = vmatprep.subr.mxu0 0.0
        %1372 = vmatpush1.msra.mxu0 0.0
        %1373 = vmatprep.subr.mxu0 0.0
        %1374 = vmatpush1.msra.mxu0 0.0
        %1375 = vmatprep.subr.mxu0 0.0
        %1376 = vmatpush1.msra.mxu0 0.0
        %1377 = vmatprep.subr.mxu0 0.0
        %1378 = vmatpush1.msra.mxu0 0.0
        %1379 = vmatprep.subr.mxu0 0.0
        %1380 = vmatpush1.msra.mxu0 0.0
        %1381 = vmatprep.subr.mxu0 0.0
        %1382 = vmatpush1.msra.mxu0 0.0
        %1383 = vmatprep.subr.mxu0 0.0
        %1384 = vmatpush1.msra.mxu0 0.0
        %1385 = vmatprep.subr.mxu0 0.0
        %1386 = vmatpush1.msra.mxu0 0.0
        %1387 = vmatprep.subr.mxu0 0.0
        %1388 = vmatpush1.msra.mxu0 0.0
        %1389 = vmatprep.subr.mxu0 0.0
        %1390 = vmatpush1.msra.mxu0 0.0
        %1391 = vmatprep.subr.mxu0 0.0
        %1392 = vmatpush1.msra.mxu0 0.0
        %1393 = vmatprep.subr.mxu0 0.0
        %1394 = vmatpush1.msra.mxu0 0.0
        %1395 = vmatprep.subr.mxu0 0.0
        %1396 = vmatpush1.msra.mxu0 0.0
        %1397 = vmatprep.subr.mxu0 0.0
        %1398 = vmatpush1.msra.mxu0 0.0
        %1399 = vmatprep.subr.mxu0 0.0
        %1400 = vmatpush1.msra.mxu0 0.0
        %1401 = vmatprep.mubr.f32.mxu0 0.0
        %1402 = vmatmul.mubr.f32.gmra.mrb[0].mxu0 %v1317
        %v1403 = vpop.f32.mrb[0].mxu0
        %v1404 = vadd.f32 %v1313, %v1403
        %v1405 = vpop.f32.mrb[0].mxu0
        %v1406 = vadd.f32 %v1313, %v1405
        %1407 = vdwg.mxu0
        %1408 = vmatprep.subr.mxu0 %v1288
        %1409 = vmatpush1.msra.mxu0 %v1287
        %1410 = vmatprep.subr.mxu0 %v1294
        %1411 = vmatpush1.msra.mxu0 %v1293
        %1412 = vmatprep.subr.mxu0 %v1300
        %1413 = vmatpush1.msra.mxu0 %v1299
        %1414 = vmatprep.subr.mxu0 %v1306
        %1415 = vmatpush1.msra.mxu0 %v1305
        %1416 = vmatprep.subr.mxu0 %v1329
        %1417 = vmatpush1.msra.mxu0 %v1326
        %1418 = vmatprep.subr.mxu0 0.0
        %1419 = vmatpush1.msra.mxu0 0.0
        %1420 = vmatprep.subr.mxu0 0.0
        %1421 = vmatpush1.msra.mxu0 0.0
        %1422 = vmatprep.subr.mxu0 0.0
        %1423 = vmatpush1.msra.mxu0 0.0
        %1424 = vmatprep.subr.mxu0 0.0
        %1425 = vmatpush1.msra.mxu0 0.0
        %1426 = vmatprep.subr.mxu0 0.0
        %1427 = vmatpush1.msra.mxu0 0.0
        %1428 = vmatprep.subr.mxu0 0.0
        %1429 = vmatpush1.msra.mxu0 0.0
        %1430 = vmatprep.subr.mxu0 0.0
        %1431 = vmatpush1.msra.mxu0 0.0
        %1432 = vmatprep.subr.mxu0 0.0
        %1433 = vmatpush1.msra.mxu0 0.0
        %1434 = vmatprep.subr.mxu0 0.0
        %1435 = vmatpush1.msra.mxu0 0.0
        %1436 = vmatprep.subr.mxu0 0.0
        %1437 = vmatpush1.msra.mxu0 0.0
        %1438 = vmatprep.subr.mxu0 0.0
        %1439 = vmatpush1.msra.mxu0 0.0
        %1440 = vmatprep.subr.mxu0 0.0
        %1441 = vmatpush1.msra.mxu0 0.0
        %1442 = vmatprep.subr.mxu0 0.0
        %1443 = vmatpush1.msra.mxu0 0.0
        %1444 = vmatprep.subr.mxu0 0.0
        %1445 = vmatpush1.msra.mxu0 0.0
        %1446 = vmatprep.subr.mxu0 0.0
        %1447 = vmatpush1.msra.mxu0 0.0
        %1448 = vmatprep.subr.mxu0 0.0
        %1449 = vmatpush1.msra.mxu0 0.0
        %1450 = vmatprep.subr.mxu0 0.0
        %1451 = vmatpush1.msra.mxu0 0.0
        %1452 = vmatprep.subr.mxu0 0.0
        %1453 = vmatpush1.msra.mxu0 0.0
        %1454 = vmatprep.subr.mxu0 0.0
        %1455 = vmatpush1.msra.mxu0 0.0
        %1456 = vmatprep.subr.mxu0 0.0
        %1457 = vmatpush1.msra.mxu0 0.0
        %1458 = vmatprep.subr.mxu0 0.0
        %1459 = vmatpush1.msra.mxu0 0.0
        %1460 = vmatprep.subr.mxu0 0.0
        %1461 = vmatpush1.msra.mxu0 0.0
        %1462 = vmatprep.subr.mxu0 0.0
        %1463 = vmatpush1.msra.mxu0 0.0
        %1464 = vmatprep.subr.mxu0 0.0
        %1465 = vmatpush1.msra.mxu0 0.0
        %1466 = vmatprep.subr.mxu0 0.0
        %1467 = vmatpush1.msra.mxu0 0.0
        %1468 = vmatprep.subr.mxu0 0.0
        %1469 = vmatpush1.msra.mxu0 0.0
        %1470 = vmatprep.subr.mxu0 0.0
        %1471 = vmatpush1.msra.mxu0 0.0
        %1472 = vmatprep.mubr.f32.mxu0 0.0
        %1473 = vmatmul.mubr.f32.gmra.mrb[0].mxu0 %v1317
        %v1474 = vpop.f32.mrb[0].mxu0
        %v1475 = vadd.f32 %v1313, %v1474
        %v1476 = vpop.f32.mrb[0].mxu0
        %v1477 = vadd.f32 %v1313, %v1476
        %1478 = vdwg.mxu0
        %1479 = vmatprep.subr.mxu0 %v1290
        %1480 = vmatpush1.msra.mxu0 %v1289
        %1481 = vmatprep.subr.mxu0 %v1296
        %1482 = vmatpush1.msra.mxu0 %v1295
        %1483 = vmatprep.subr.mxu0 %v1302
        %1484 = vmatpush1.msra.mxu0 %v1301
        %1485 = vmatprep.subr.mxu0 %v1308
        %1486 = vmatpush1.msra.mxu0 %v1307
        %1487 = vmatprep.subr.mxu0 %v1335
        %1488 = vmatpush1.msra.mxu0 %v1332
        %1489 = vmatprep.subr.mxu0 0.0
        %1490 = vmatpush1.msra.mxu0 0.0
        %1491 = vmatprep.subr.mxu0 0.0
        %1492 = vmatpush1.msra.mxu0 0.0
        %1493 = vmatprep.subr.mxu0 0.0
        %1494 = vmatpush1.msra.mxu0 0.0
        %1495 = vmatprep.subr.mxu0 0.0
        %1496 = vmatpush1.msra.mxu0 0.0
        %1497 = vmatprep.subr.mxu0 0.0
        %1498 = vmatpush1.msra.mxu0 0.0
        %1499 = vmatprep.subr.mxu0 0.0
        %1500 = vmatpush1.msra.mxu0 0.0
        %1501 = vmatprep.subr.mxu0 0.0
        %1502 = vmatpush1.msra.mxu0 0.0
        %1503 = vmatprep.subr.mxu0 0.0
        %1504 = vmatpush1.msra.mxu0 0.0
        %1505 = vmatprep.subr.mxu0 0.0
        %1506 = vmatpush1.msra.mxu0 0.0
        %1507 = vmatprep.subr.mxu0 0.0
        %1508 = vmatpush1.msra.mxu0 0.0
        %1509 = vmatprep.subr.mxu0 0.0
        %1510 = vmatpush1.msra.mxu0 0.0
        %1511 = vmatprep.subr.mxu0 0.0
        %1512 = vmatpush1.msra.mxu0 0.0
        %1513 = vmatprep.subr.mxu0 0.0
        %1514 = vmatpush1.msra.mxu0 0.0
        %1515 = vmatprep.subr.mxu0 0.0
        %1516 = vmatpush1.msra.mxu0 0.0
        %1517 = vmatprep.subr.mxu0 0.0
        %1518 = vmatpush1.msra.mxu0 0.0
        %1519 = vmatprep.subr.mxu0 0.0
        %1520 = vmatpush1.msra.mxu0 0.0
        %1521 = vmatprep.subr.mxu0 0.0
        %1522 = vmatpush1.msra.mxu0 0.0
        %1523 = vmatprep.subr.mxu0 0.0
        %1524 = vmatpush1.msra.mxu0 0.0
        %1525 = vmatprep.subr.mxu0 0.0
        %1526 = vmatpush1.msra.mxu0 0.0
        %1527 = vmatprep.subr.mxu0 0.0
        %1528 = vmatpush1.msra.mxu0 0.0
        %1529 = vmatprep.subr.mxu0 0.0
        %1530 = vmatpush1.msra.mxu0 0.0
        %1531 = vmatprep.subr.mxu0 0.0
        %1532 = vmatpush1.msra.mxu0 0.0
        %1533 = vmatprep.subr.mxu0 0.0
        %1534 = vmatpush1.msra.mxu0 0.0
        %1535 = vmatprep.subr.mxu0 0.0
        %1536 = vmatpush1.msra.mxu0 0.0
        %1537 = vmatprep.subr.mxu0 0.0
        %1538 = vmatpush1.msra.mxu0 0.0
        %1539 = vmatprep.subr.mxu0 0.0
        %1540 = vmatpush1.msra.mxu0 0.0
        %1541 = vmatprep.subr.mxu0 0.0
        %1542 = vmatpush1.msra.mxu0 0.0
        %1543 = vmatprep.mubr.f32.mxu0 0.0
        %1544 = vmatmul.mubr.f32.gmra.mrb[0].mxu0 %v1317
        %v1545 = vpop.f32.mrb[0].mxu0
        %v1546 = vadd.f32 %v1313, %v1545
        %v1547 = vpop.f32.mrb[0].mxu0
        %v1548 = vadd.f32 %v1313, %v1547
        %1549 = vdwg.mxu0
        %vm1550 = vcmp.gt.f32.partialorder %v1404, 0.0
        %vm1551 = vcmp.gt.f32.partialorder %v1406, 0.0
        %vm1552 = vcmp.gt.f32.partialorder %v1475, 0.0
        %vm1553 = vcmp.gt.f32.partialorder %v1477, 0.0
        %vm1554 = vcmp.gt.f32.partialorder %v1546, 0.0
        %vm1555 = vcmp.gt.f32.partialorder %v1548, 0.0
        %v1556 = vmul.f32 %v1404, 1.442695
        %v1557 = vpow.pop %v1556
        %v1558 = vmul.f32 %v1406, 1.442695
        %v1559 = vpow.pop %v1558
        %v1560 = vmul.f32 %v1475, 1.442695
        %v1561 = vpow.pop %v1560
        %v1562 = vmul.f32 %v1477, 1.442695
        %v1563 = vpow.pop %v1562
        %v1564 = vmul.f32 %v1546, 1.442695
        %v1565 = vpow.pop %v1564
        %v1566 = vmul.f32 %v1548, 1.442695
        %v1567 = vpow.pop %v1566
        %v1568 = vsub.f32 %v1557, 1.0
        %v1569 = vsub.f32 %v1559, 1.0
        %v1570 = vsub.f32 %v1561, 1.0
        %v1571 = vsub.f32 %v1563, 1.0
        %v1572 = vsub.f32 %v1565, 1.0
        %v1573 = vsub.f32 %v1567, 1.0
        %v1574 = vmul.f32 %v1568, 1.6732632
        %v1575 = vmul.f32 %v1569, 1.6732632
        %v1576 = vmul.f32 %v1570, 1.6732632
        %v1577 = vmul.f32 %v1571, 1.6732632
        %v1578 = vmul.f32 %v1572, 1.6732632
        %v1579 = vmul.f32 %v1573, 1.6732632
        %v1580 = vsel %vm1550, %v1404, %v1574
        %v1581 = vsel %vm1551, %v1406, %v1575
        %v1582 = vsel %vm1552, %v1475, %v1576
        %v1583 = vsel %vm1553, %v1477, %v1577
        %v1584 = vsel %vm1554, %v1546, %v1578
        %v1585 = vsel %vm1555, %v1548, %v1579
        %v1586 = vmul.f32 %v1580, 1.050701
        %v1587 = vmul.f32 %v1581, 1.050701
        %v1588 = vmul.f32 %v1582, 1.050701
        %v1589 = vmul.f32 %v1583, 1.050701
        %v1590 = vmul.f32 %v1584, 1.050701
        %v1591 = vmul.f32 %v1585, 1.050701
        %1592 = vset.pattern.permute.xlu0 1
        %1593 = vperm.xlu0 %1592, %v294
        %v1594 = vpop.permute.xlu0 %1593
        %v1596 = vmul.f32 %v1586, %v1594
        %v1597 = vmul.f32 %v1587, %v1594
        %v1598 = vmul.f32 %v1588, %v1594
        %v1599 = vmul.f32 %v1589, %v1594
        %v1600 = vmul.f32 %v1590, %v1594
        %v1601 = vmul.f32 %v1591, %v1594
        %1602 = vset.pattern.permute.xlu0 2
        %1603 = vperm.xlu0 %1602, %v294
        %v1604 = vpop.permute.xlu0 %1603
        %v1606 = vadd.f32 %v1596, %v1604
        %v1607 = vadd.f32 %v1597, %v1604
        %v1608 = vadd.f32 %v1598, %v1604
        %v1609 = vadd.f32 %v1599, %v1604
        %v1610 = vadd.f32 %v1600, %v1604
        %v1611 = vadd.f32 %v1601, %v1604
        %vm1612 = vcmp.gt.f32.partialorder %v1606, 0.0
        %vm1613 = vcmp.gt.f32.partialorder %v1607, 0.0
        %vm1614 = vcmp.gt.f32.partialorder %v1608, 0.0
        %vm1615 = vcmp.gt.f32.partialorder %v1609, 0.0
        %vm1616 = vcmp.gt.f32.partialorder %v1610, 0.0
        %vm1617 = vcmp.gt.f32.partialorder %v1611, 0.0
        %v1618 = vmul.f32 %v1606, 1.442695
        %v1619 = vpow.pop %v1618
        %v1620 = vmul.f32 %v1607, 1.442695
        %v1621 = vpow.pop %v1620
        %v1622 = vmul.f32 %v1608, 1.442695
        %v1623 = vpow.pop %v1622
        %v1624 = vmul.f32 %v1609, 1.442695
        %v1625 = vpow.pop %v1624
        %v1626 = vmul.f32 %v1610, 1.442695
        %v1627 = vpow.pop %v1626
        %v1628 = vmul.f32 %v1611, 1.442695
        %v1629 = vpow.pop %v1628
        %v1630 = vsub.f32 %v1619, 1.0
        %v1631 = vsub.f32 %v1621, 1.0
        %v1632 = vsub.f32 %v1623, 1.0
        %v1633 = vsub.f32 %v1625, 1.0
        %v1634 = vsub.f32 %v1627, 1.0
        %v1635 = vsub.f32 %v1629, 1.0
        %v1636 = vmul.f32 %v1630, 1.6732632
        %v1637 = vmul.f32 %v1631, 1.6732632
        %v1638 = vmul.f32 %v1632, 1.6732632
        %v1639 = vmul.f32 %v1633, 1.6732632
        %v1640 = vmul.f32 %v1634, 1.6732632
        %v1641 = vmul.f32 %v1635, 1.6732632
        %v1642 = vsel %vm1612, %v1606, %v1636
        %v1643 = vsel %vm1613, %v1607, %v1637
        %v1644 = vsel %vm1614, %v1608, %v1638
        %v1645 = vsel %vm1615, %v1609, %v1639
        %v1646 = vsel %vm1616, %v1610, %v1640
        %v1647 = vsel %vm1617, %v1611, %v1641
        %v1648 = vmul.f32 %v1642, 1.050701
        %v1649 = vmul.f32 %v1643, 1.050701
        %v1650 = vmul.f32 %v1644, 1.050701
        %v1651 = vmul.f32 %v1645, 1.050701
        %v1652 = vmul.f32 %v1646, 1.050701
        %v1653 = vmul.f32 %v1647, 1.050701
        %1654 = vrot.lane.b32.xlu0 %v1648, 17
        %v1655 = vpop.permute.xlu0 %1654
        %1656 = vrot.lane.b32.xlu0 %v1649, 17
        %v1657 = vpop.permute.xlu0 %1656
        %1658 = vrot.lane.b32.xlu0 %v1650, 17
        %v1659 = vpop.permute.xlu0 %1658
        %1660 = vrot.lane.b32.xlu0 %v1651, 17
        %v1661 = vpop.permute.xlu0 %1660
        %1662 = vrot.lane.b32.xlu0 %v1652, 17
        %v1663 = vpop.permute.xlu0 %1662
        %1664 = vrot.lane.b32.xlu0 %v1653, 17
        %v1665 = vpop.permute.xlu0 %1664
        %v1666 = vsel %vm745, %v1663, %v1665
        %v1667 = vsel %vm745, %v1661, %v1663
        %v1668 = vsel %vm745, %v1659, %v1661
        %v1669 = vsel %vm745, %v1657, %v1659
        %v1670 = vsel %vm745, %v1655, %v1657
        %v1671 = vsel %vm745, %v1665, %v1655
        %v1672 = vmul.f32 %v1671, %v759
        %v1673 = vmul.f32 %v1670, %v763
        %v1674 = vmul.f32 %v1669, %v767
        %v1675 = vmul.f32 %v1668, %v771
        %v1676 = vmul.f32 %v1667, %v775
        %v1677 = vmul.f32 %v1666, %v779
        %1678 = vrot.lane.b32.xlu0 %v1648, 16
        %v1679 = vpop.permute.xlu0 %1678
        %1680 = vrot.lane.b32.xlu0 %v1649, 16
        %v1681 = vpop.permute.xlu0 %1680
        %1682 = vrot.lane.b32.xlu0 %v1650, 16
        %v1683 = vpop.permute.xlu0 %1682
        %1684 = vrot.lane.b32.xlu0 %v1651, 16
        %v1685 = vpop.permute.xlu0 %1684
        %1686 = vrot.lane.b32.xlu0 %v1652, 16
        %v1687 = vpop.permute.xlu0 %1686
        %1688 = vrot.lane.b32.xlu0 %v1653, 16
        %v1689 = vpop.permute.xlu0 %1688
        %v1690 = vsel %vm804, %v1687, %v1689
        %v1691 = vsel %vm804, %v1685, %v1687
        %v1692 = vsel %vm804, %v1683, %v1685
        %v1693 = vsel %vm804, %v1681, %v1683
        %v1694 = vsel %vm804, %v1679, %v1681
        %v1695 = vsel %vm804, %v1689, %v1679
        %v1696 = vmul.f32 %v1695, %v819
        %v1697 = vmul.f32 %v1694, %v823
        %v1698 = vmul.f32 %v1693, %v827
        %v1699 = vmul.f32 %v1692, %v831
        %v1700 = vmul.f32 %v1691, %v835
        %v1701 = vmul.f32 %v1690, %v839
        %1702 = vrot.lane.b32.xlu0 %v1648, 15
        %v1703 = vpop.permute.xlu0 %1702
        %1704 = vrot.lane.b32.xlu0 %v1649, 15
        %v1705 = vpop.permute.xlu0 %1704
        %1706 = vrot.lane.b32.xlu0 %v1650, 15
        %v1707 = vpop.permute.xlu0 %1706
        %1708 = vrot.lane.b32.xlu0 %v1651, 15
        %v1709 = vpop.permute.xlu0 %1708
        %1710 = vrot.lane.b32.xlu0 %v1652, 15
        %v1711 = vpop.permute.xlu0 %1710
        %1712 = vrot.lane.b32.xlu0 %v1653, 15
        %v1713 = vpop.permute.xlu0 %1712
        %v1714 = vsel %vm864, %v1711, %v1713
        %v1715 = vsel %vm864, %v1709, %v1711
        %v1716 = vsel %vm864, %v1707, %v1709
        %v1717 = vsel %vm864, %v1705, %v1707
        %v1718 = vsel %vm864, %v1703, %v1705
        %v1719 = vsel %vm864, %v1713, %v1703
        %v1720 = vmul.f32 %v1719, %v879
        %v1721 = vmul.f32 %v1718, %v883
        %v1722 = vmul.f32 %v1717, %v887
        %v1723 = vmul.f32 %v1716, %v891
        %v1724 = vmul.f32 %v1715, %v895
        %v1725 = vmul.f32 %v1714, %v899
        %1726 = vrot.lane.b32.xlu0 %v1648, 1
        %v1727 = vpop.permute.xlu0 %1726
        %1728 = vrot.lane.b32.xlu0 %v1649, 1
        %v1729 = vpop.permute.xlu0 %1728
        %1730 = vrot.lane.b32.xlu0 %v1650, 1
        %v1731 = vpop.permute.xlu0 %1730
        %1732 = vrot.lane.b32.xlu0 %v1651, 1
        %v1733 = vpop.permute.xlu0 %1732
        %1734 = vrot.lane.b32.xlu0 %v1652, 1
        %v1735 = vpop.permute.xlu0 %1734
        %1736 = vrot.lane.b32.xlu0 %v1653, 1
        %v1737 = vpop.permute.xlu0 %1736
        %v1738 = vsel %vm924, %v1735, %v1737
        %v1739 = vsel %vm924, %v1733, %v1735
        %v1740 = vsel %vm924, %v1731, %v1733
        %v1741 = vsel %vm924, %v1729, %v1731
        %v1742 = vsel %vm924, %v1727, %v1729
        %v1743 = vsel %vm924, %v1737, %v1727
        %v1744 = vmul.f32 %v1743, %v939
        %v1745 = vmul.f32 %v1742, %v943
        %v1746 = vmul.f32 %v1741, %v947
        %v1747 = vmul.f32 %v1740, %v951
        %v1748 = vmul.f32 %v1739, %v955
        %v1749 = vmul.f32 %v1738, %v959
        %1750 = vrot.lane.b32.xlu0 %v1648, 127
        %v1751 = vpop.permute.xlu0 %1750
        %1752 = vrot.lane.b32.xlu0 %v1649, 127
        %v1753 = vpop.permute.xlu0 %1752
        %1754 = vrot.lane.b32.xlu0 %v1650, 127
        %v1755 = vpop.permute.xlu0 %1754
        %1756 = vrot.lane.b32.xlu0 %v1651, 127
        %v1757 = vpop.permute.xlu0 %1756
        %1758 = vrot.lane.b32.xlu0 %v1652, 127
        %v1759 = vpop.permute.xlu0 %1758
        %1760 = vrot.lane.b32.xlu0 %v1653, 127
        %v1761 = vpop.permute.xlu0 %1760
        %v1762 = vsel %vm984, %v1759, %v1761
        %v1763 = vsel %vm984, %v1757, %v1759
        %v1764 = vsel %vm984, %v1755, %v1757
        %v1765 = vsel %vm984, %v1753, %v1755
        %v1766 = vsel %vm984, %v1751, %v1753
        %v1767 = vsel %vm984, %v1761, %v1751
        %v1768 = vmul.f32 %v1766, %v999
        %v1769 = vmul.f32 %v1765, %v1003
        %v1770 = vmul.f32 %v1764, %v1007
        %v1771 = vmul.f32 %v1763, %v1011
        %v1772 = vmul.f32 %v1762, %v1015
        %v1773 = vmul.f32 %v1767, %v1019
        %1774 = vrot.lane.b32.xlu0 %v1648, 113
        %v1775 = vpop.permute.xlu0 %1774
        %1776 = vrot.lane.b32.xlu0 %v1649, 113
        %v1777 = vpop.permute.xlu0 %1776
        %1778 = vrot.lane.b32.xlu0 %v1650, 113
        %v1779 = vpop.permute.xlu0 %1778
        %1780 = vrot.lane.b32.xlu0 %v1651, 113
        %v1781 = vpop.permute.xlu0 %1780
        %1782 = vrot.lane.b32.xlu0 %v1652, 113
        %v1783 = vpop.permute.xlu0 %1782
        %1784 = vrot.lane.b32.xlu0 %v1653, 113
        %v1785 = vpop.permute.xlu0 %1784
        %v1786 = vsel %vm1044, %v1783, %v1785
        %v1787 = vsel %vm1044, %v1781, %v1783
        %v1788 = vsel %vm1044, %v1779, %v1781
        %v1789 = vsel %vm1044, %v1777, %v1779
        %v1790 = vsel %vm1044, %v1775, %v1777
        %v1791 = vsel %vm1044, %v1785, %v1775
        %v1792 = vmul.f32 %v1790, %v1059
        %v1793 = vmul.f32 %v1789, %v1063
        %v1794 = vmul.f32 %v1788, %v1067
        %v1795 = vmul.f32 %v1787, %v1071
        %v1796 = vmul.f32 %v1786, %v1075
        %v1797 = vmul.f32 %v1791, %v1079
        %1798 = vrot.lane.b32.xlu0 %v1648, 112
        %v1799 = vpop.permute.xlu0 %1798
        %1800 = vrot.lane.b32.xlu0 %v1649, 112
        %v1801 = vpop.permute.xlu0 %1800
        %1802 = vrot.lane.b32.xlu0 %v1650, 112
        %v1803 = vpop.permute.xlu0 %1802
        %1804 = vrot.lane.b32.xlu0 %v1651, 112
        %v1805 = vpop.permute.xlu0 %1804
        %1806 = vrot.lane.b32.xlu0 %v1652, 112
        %v1807 = vpop.permute.xlu0 %1806
        %1808 = vrot.lane.b32.xlu0 %v1653, 112
        %v1809 = vpop.permute.xlu0 %1808
        %v1810 = vsel %vm1104, %v1807, %v1809
        %v1811 = vsel %vm1104, %v1805, %v1807
        %v1812 = vsel %vm1104, %v1803, %v1805
        %v1813 = vsel %vm1104, %v1801, %v1803
        %v1814 = vsel %vm1104, %v1799, %v1801
        %v1815 = vsel %vm1104, %v1809, %v1799
        %v1816 = vmul.f32 %v1814, %v1119
        %v1817 = vmul.f32 %v1813, %v1123
        %v1818 = vmul.f32 %v1812, %v1127
        %v1819 = vmul.f32 %v1811, %v1131
        %v1820 = vmul.f32 %v1810, %v1135
        %v1821 = vmul.f32 %v1815, %v1139
        %1822 = vrot.lane.b32.xlu0 %v1648, 111
        %v1823 = vpop.permute.xlu0 %1822
        %1824 = vrot.lane.b32.xlu0 %v1649, 111
        %v1825 = vpop.permute.xlu0 %1824
        %1826 = vrot.lane.b32.xlu0 %v1650, 111
        %v1827 = vpop.permute.xlu0 %1826
        %1828 = vrot.lane.b32.xlu0 %v1651, 111
        %v1829 = vpop.permute.xlu0 %1828
        %1830 = vrot.lane.b32.xlu0 %v1652, 111
        %v1831 = vpop.permute.xlu0 %1830
        %1832 = vrot.lane.b32.xlu0 %v1653, 111
        %v1833 = vpop.permute.xlu0 %1832
        %v1834 = vsel %vm1164, %v1831, %v1833
        %v1835 = vsel %vm1164, %v1829, %v1831
        %v1836 = vsel %vm1164, %v1827, %v1829
        %v1837 = vsel %vm1164, %v1825, %v1827
        %v1838 = vsel %vm1164, %v1823, %v1825
        %v1839 = vsel %vm1164, %v1833, %v1823
        %v1840 = vmul.f32 %v1838, %v1179
        %v1841 = vmul.f32 %v1837, %v1183
        %v1842 = vmul.f32 %v1836, %v1187
        %v1843 = vmul.f32 %v1835, %v1191
        %v1844 = vmul.f32 %v1834, %v1195
        %v1845 = vmul.f32 %v1839, %v1199
        %v1852 = vrot.slane %v1696, 4
        %v1853 = vrot.slane %v1697, 4
        %v1854 = vrot.slane %v1698, 4
        %v1855 = vrot.slane %v1699, 4
        %v1856 = vrot.slane %v1700, 4
        %v1857 = vrot.slane %v1701, 4
        %v1870 = vrot.slane %v1744, 4
        %v1871 = vrot.slane %v1745, 4
        %v1872 = vrot.slane %v1746, 4
        %v1873 = vrot.slane %v1747, 4
        %v1874 = vrot.slane %v1748, 4
        %v1875 = vrot.slane %v1749, 4
        %v1888 = vrot.slane %v1768, 4
        %v1889 = vrot.slane %v1769, 4
        %v1890 = vrot.slane %v1770, 4
        %v1891 = vrot.slane %v1771, 4
        %v1892 = vrot.slane %v1772, 4
        %v1893 = vrot.slane %v1773, 4
        %v1906 = vrot.slane %v1816, 4
        %v1907 = vrot.slane %v1817, 4
        %v1908 = vrot.slane %v1818, 4
        %v1909 = vrot.slane %v1819, 4
        %v1910 = vrot.slane %v1820, 4
        %v1911 = vrot.slane %v1821, 4
        %v1918 = vsel %vm1284, %v1672, %v1852
        %v1919 = vsel %vm1284, %v1673, %v1853
        %v1920 = vsel %vm1284, %v1674, %v1854
        %v1921 = vsel %vm1284, %v1675, %v1855
        %v1922 = vsel %vm1284, %v1676, %v1856
        %v1923 = vsel %vm1284, %v1677, %v1857
        %v1924 = vsel %vm1284, %v1720, %v1870
        %v1925 = vsel %vm1284, %v1721, %v1871
        %v1926 = vsel %vm1284, %v1722, %v1872
        %v1927 = vsel %vm1284, %v1723, %v1873
        %v1928 = vsel %vm1284, %v1724, %v1874
        %v1929 = vsel %vm1284, %v1725, %v1875
        %v1930 = vsel %vm1284, %v1648, %v1888
        %v1931 = vsel %vm1284, %v1649, %v1889
        %v1932 = vsel %vm1284, %v1650, %v1890
        %v1933 = vsel %vm1284, %v1651, %v1891
        %v1934 = vsel %vm1284, %v1652, %v1892
        %v1935 = vsel %vm1284, %v1653, %v1893
        %v1936 = vsel %vm1284, %v1792, %v1906
        %v1937 = vsel %vm1284, %v1793, %v1907
        %v1938 = vsel %vm1284, %v1794, %v1908
        %v1939 = vsel %vm1284, %v1795, %v1909
        %v1940 = vsel %vm1284, %v1796, %v1910
        %v1941 = vsel %vm1284, %v1797, %v1911
        %s1942 = scalar_lea.vmem %s3, 4
        %v1943 = vld [vmem:[%s1942] sm:$0xf]
        %v1945 = vsel %vm1315, %v1943, 0
        %v1948 = vsel %vm1284, %v1840, 0
        %v1951 = vsel %vm1284, %v1841, 0
        %v1954 = vsel %vm1284, %v1842, 0
        %v1957 = vsel %vm1284, %v1843, 0
        %v1960 = vsel %vm1284, %v1844, 0
        %v1963 = vsel %vm1284, %v1845, 0
        %1965 = vmatprep.subr.mxu0 %v1919
        %1966 = vmatpush1.msra.mxu0 %v1918
        %1967 = vmatprep.subr.mxu0 %v1925
        %1968 = vmatpush1.msra.mxu0 %v1924
        %1969 = vmatprep.subr.mxu0 %v1931
        %1970 = vmatpush1.msra.mxu0 %v1930
        %1971 = vmatprep.subr.mxu0 %v1937
        %1972 = vmatpush1.msra.mxu0 %v1936
        %1973 = vmatprep.subr.mxu0 %v1951
        %1974 = vmatpush1.msra.mxu0 %v1948
        %1975 = vmatprep.subr.mxu0 0.0
        %1976 = vmatpush1.msra.mxu0 0.0
        %1977 = vmatprep.subr.mxu0 0.0
        %1978 = vmatpush1.msra.mxu0 0.0
        %1979 = vmatprep.subr.mxu0 0.0
        %1980 = vmatpush1.msra.mxu0 0.0
        %1981 = vmatprep.subr.mxu0 0.0
        %1982 = vmatpush1.msra.mxu0 0.0
        %1983 = vmatprep.subr.mxu0 0.0
        %1984 = vmatpush1.msra.mxu0 0.0
        %1985 = vmatprep.subr.mxu0 0.0
        %1986 = vmatpush1.msra.mxu0 0.0
        %1987 = vmatprep.subr.mxu0 0.0
        %1988 = vmatpush1.msra.mxu0 0.0
        %1989 = vmatprep.subr.mxu0 0.0
        %1990 = vmatpush1.msra.mxu0 0.0
        %1991 = vmatprep.subr.mxu0 0.0
        %1992 = vmatpush1.msra.mxu0 0.0
        %1993 = vmatprep.subr.mxu0 0.0
        %1994 = vmatpush1.msra.mxu0 0.0
        %1995 = vmatprep.subr.mxu0 0.0
        %1996 = vmatpush1.msra.mxu0 0.0
        %1997 = vmatprep.subr.mxu0 0.0
        %1998 = vmatpush1.msra.mxu0 0.0
        %1999 = vmatprep.subr.mxu0 0.0
        %2000 = vmatpush1.msra.mxu0 0.0
        %2001 = vmatprep.subr.mxu0 0.0
        %2002 = vmatpush1.msra.mxu0 0.0
        %2003 = vmatprep.subr.mxu0 0.0
        %2004 = vmatpush1.msra.mxu0 0.0
        %2005 = vmatprep.subr.mxu0 0.0
        %2006 = vmatpush1.msra.mxu0 0.0
        %2007 = vmatprep.subr.mxu0 0.0
        %2008 = vmatpush1.msra.mxu0 0.0
        %2009 = vmatprep.subr.mxu0 0.0
        %2010 = vmatpush1.msra.mxu0 0.0
        %2011 = vmatprep.subr.mxu0 0.0
        %2012 = vmatpush1.msra.mxu0 0.0
        %2013 = vmatprep.subr.mxu0 0.0
        %2014 = vmatpush1.msra.mxu0 0.0
        %2015 = vmatprep.subr.mxu0 0.0
        %2016 = vmatpush1.msra.mxu0 0.0
        %2017 = vmatprep.subr.mxu0 0.0
        %2018 = vmatpush1.msra.mxu0 0.0
        %2019 = vmatprep.subr.mxu0 0.0
        %2020 = vmatpush1.msra.mxu0 0.0
        %2021 = vmatprep.subr.mxu0 0.0
        %2022 = vmatpush1.msra.mxu0 0.0
        %2023 = vmatprep.subr.mxu0 0.0
        %2024 = vmatpush1.msra.mxu0 0.0
        %2025 = vmatprep.subr.mxu0 0.0
        %2026 = vmatpush1.msra.mxu0 0.0
        %2027 = vmatprep.subr.mxu0 0.0
        %2028 = vmatpush1.msra.mxu0 0.0
        %2029 = vmatprep.mubr.f32.mxu0 0.0
        %2030 = vmatmul.mubr.f32.gmra.mrb[0].mxu0 %v1945
        %v2031 = vpop.f32.mrb[0].mxu0
        %v2032 = vadd.f32 0.0, %v2031
        %v2033 = vpop.f32.mrb[0].mxu0
        %v2034 = vadd.f32 0.0, %v2033
        %2035 = vdwg.mxu0
        %2036 = vmatprep.subr.mxu0 %v1921
        %2037 = vmatpush1.msra.mxu0 %v1920
        %2038 = vmatprep.subr.mxu0 %v1927
        %2039 = vmatpush1.msra.mxu0 %v1926
        %2040 = vmatprep.subr.mxu0 %v1933
        %2041 = vmatpush1.msra.mxu0 %v1932
        %2042 = vmatprep.subr.mxu0 %v1939
        %2043 = vmatpush1.msra.mxu0 %v1938
        %2044 = vmatprep.subr.mxu0 %v1957
        %2045 = vmatpush1.msra.mxu0 %v1954
        %2046 = vmatprep.subr.mxu0 0.0
        %2047 = vmatpush1.msra.mxu0 0.0
        %2048 = vmatprep.subr.mxu0 0.0
        %2049 = vmatpush1.msra.mxu0 0.0
        %2050 = vmatprep.subr.mxu0 0.0
        %2051 = vmatpush1.msra.mxu0 0.0
        %2052 = vmatprep.subr.mxu0 0.0
        %2053 = vmatpush1.msra.mxu0 0.0
        %2054 = vmatprep.subr.mxu0 0.0
        %2055 = vmatpush1.msra.mxu0 0.0
        %2056 = vmatprep.subr.mxu0 0.0
        %2057 = vmatpush1.msra.mxu0 0.0
        %2058 = vmatprep.subr.mxu0 0.0
        %2059 = vmatpush1.msra.mxu0 0.0
        %2060 = vmatprep.subr.mxu0 0.0
        %2061 = vmatpush1.msra.mxu0 0.0
        %2062 = vmatprep.subr.mxu0 0.0
        %2063 = vmatpush1.msra.mxu0 0.0
        %2064 = vmatprep.subr.mxu0 0.0
        %2065 = vmatpush1.msra.mxu0 0.0
        %2066 = vmatprep.subr.mxu0 0.0
        %2067 = vmatpush1.msra.mxu0 0.0
        %2068 = vmatprep.subr.mxu0 0.0
        %2069 = vmatpush1.msra.mxu0 0.0
        %2070 = vmatprep.subr.mxu0 0.0
        %2071 = vmatpush1.msra.mxu0 0.0
        %2072 = vmatprep.subr.mxu0 0.0
        %2073 = vmatpush1.msra.mxu0 0.0
        %2074 = vmatprep.subr.mxu0 0.0
        %2075 = vmatpush1.msra.mxu0 0.0
        %2076 = vmatprep.subr.mxu0 0.0
        %2077 = vmatpush1.msra.mxu0 0.0
        %2078 = vmatprep.subr.mxu0 0.0
        %2079 = vmatpush1.msra.mxu0 0.0
        %2080 = vmatprep.subr.mxu0 0.0
        %2081 = vmatpush1.msra.mxu0 0.0
        %2082 = vmatprep.subr.mxu0 0.0
        %2083 = vmatpush1.msra.mxu0 0.0
        %2084 = vmatprep.subr.mxu0 0.0
        %2085 = vmatpush1.msra.mxu0 0.0
        %2086 = vmatprep.subr.mxu0 0.0
        %2087 = vmatpush1.msra.mxu0 0.0
        %2088 = vmatprep.subr.mxu0 0.0
        %2089 = vmatpush1.msra.mxu0 0.0
        %2090 = vmatprep.subr.mxu0 0.0
        %2091 = vmatpush1.msra.mxu0 0.0
        %2092 = vmatprep.subr.mxu0 0.0
        %2093 = vmatpush1.msra.mxu0 0.0
        %2094 = vmatprep.subr.mxu0 0.0
        %2095 = vmatpush1.msra.mxu0 0.0
        %2096 = vmatprep.subr.mxu0 0.0
        %2097 = vmatpush1.msra.mxu0 0.0
        %2098 = vmatprep.subr.mxu0 0.0
        %2099 = vmatpush1.msra.mxu0 0.0
        %2100 = vmatprep.mubr.f32.mxu0 0.0
        %2101 = vmatmul.mubr.f32.gmra.mrb[0].mxu0 %v1945
        %v2102 = vpop.f32.mrb[0].mxu0
        %v2103 = vadd.f32 0.0, %v2102
        %v2104 = vpop.f32.mrb[0].mxu0
        %v2105 = vadd.f32 0.0, %v2104
        %2106 = vdwg.mxu0
        %2107 = vmatprep.subr.mxu0 %v1923
        %2108 = vmatpush1.msra.mxu0 %v1922
        %2109 = vmatprep.subr.mxu0 %v1929
        %2110 = vmatpush1.msra.mxu0 %v1928
        %2111 = vmatprep.subr.mxu0 %v1935
        %2112 = vmatpush1.msra.mxu0 %v1934
        %2113 = vmatprep.subr.mxu0 %v1941
        %2114 = vmatpush1.msra.mxu0 %v1940
        %2115 = vmatprep.subr.mxu0 %v1963
        %2116 = vmatpush1.msra.mxu0 %v1960
        %2117 = vmatprep.subr.mxu0 0.0
        %2118 = vmatpush1.msra.mxu0 0.0
        %2119 = vmatprep.subr.mxu0 0.0
        %2120 = vmatpush1.msra.mxu0 0.0
        %2121 = vmatprep.subr.mxu0 0.0
        %2122 = vmatpush1.msra.mxu0 0.0
        %2123 = vmatprep.subr.mxu0 0.0
        %2124 = vmatpush1.msra.mxu0 0.0
        %2125 = vmatprep.subr.mxu0 0.0
        %2126 = vmatpush1.msra.mxu0 0.0
        %2127 = vmatprep.subr.mxu0 0.0
        %2128 = vmatpush1.msra.mxu0 0.0
        %2129 = vmatprep.subr.mxu0 0.0
        %2130 = vmatpush1.msra.mxu0 0.0
        %2131 = vmatprep.subr.mxu0 0.0
        %2132 = vmatpush1.msra.mxu0 0.0
        %2133 = vmatprep.subr.mxu0 0.0
        %2134 = vmatpush1.msra.mxu0 0.0
        %2135 = vmatprep.subr.mxu0 0.0
        %2136 = vmatpush1.msra.mxu0 0.0
        %2137 = vmatprep.subr.mxu0 0.0
        %2138 = vmatpush1.msra.mxu0 0.0
        %2139 = vmatprep.subr.mxu0 0.0
        %2140 = vmatpush1.msra.mxu0 0.0
        %2141 = vmatprep.subr.mxu0 0.0
        %2142 = vmatpush1.msra.mxu0 0.0
        %2143 = vmatprep.subr.mxu0 0.0
        %2144 = vmatpush1.msra.mxu0 0.0
        %2145 = vmatprep.subr.mxu0 0.0
        %2146 = vmatpush1.msra.mxu0 0.0
        %2147 = vmatprep.subr.mxu0 0.0
        %2148 = vmatpush1.msra.mxu0 0.0
        %2149 = vmatprep.subr.mxu0 0.0
        %2150 = vmatpush1.msra.mxu0 0.0
        %2151 = vmatprep.subr.mxu0 0.0
        %2152 = vmatpush1.msra.mxu0 0.0
        %2153 = vmatprep.subr.mxu0 0.0
        %2154 = vmatpush1.msra.mxu0 0.0
        %2155 = vmatprep.subr.mxu0 0.0
        %2156 = vmatpush1.msra.mxu0 0.0
        %2157 = vmatprep.subr.mxu0 0.0
        %2158 = vmatpush1.msra.mxu0 0.0
        %2159 = vmatprep.subr.mxu0 0.0
        %2160 = vmatpush1.msra.mxu0 0.0
        %2161 = vmatprep.subr.mxu0 0.0
        %2162 = vmatpush1.msra.mxu0 0.0
        %2163 = vmatprep.subr.mxu0 0.0
        %2164 = vmatpush1.msra.mxu0 0.0
        %2165 = vmatprep.subr.mxu0 0.0
        %2166 = vmatpush1.msra.mxu0 0.0
        %2167 = vmatprep.subr.mxu0 0.0
        %2168 = vmatpush1.msra.mxu0 0.0
        %2169 = vmatprep.subr.mxu0 0.0
        %2170 = vmatpush1.msra.mxu0 0.0
        %2171 = vmatprep.mubr.f32.mxu0 0.0
        %2172 = vmatmul.mubr.f32.gmra.mrb[0].mxu0 %v1945
        %v2173 = vpop.f32.mrb[0].mxu0
        %v2174 = vadd.f32 0.0, %v2173
        %v2175 = vpop.f32.mrb[0].mxu0
        %v2176 = vadd.f32 0.0, %v2175
        %2177 = vdwg.mxu0
        %2178 = vset.pattern.permute.xlu0 3
        %2179 = vperm.xlu0 %2178, %v294
        %v2180 = vpop.permute.xlu0 %2179
        %v2182 = vmul.f32 %v2032, %v2180
        %v2183 = vmul.f32 %v2034, %v2180
        %v2184 = vmul.f32 %v2103, %v2180
        %v2185 = vmul.f32 %v2105, %v2180
        %v2186 = vmul.f32 %v2174, %v2180
        %v2187 = vmul.f32 %v2176, %v2180
        %2188 = vset.pattern.permute.xlu0 4
        %2189 = vperm.xlu0 %2188, %v294
        %v2190 = vpop.permute.xlu0 %2189
        %v2192 = vadd.f32 %v2182, %v2190
        %v2193 = vadd.f32 %v2183, %v2190
        %v2194 = vadd.f32 %v2184, %v2190
        %v2195 = vadd.f32 %v2185, %v2190
        %v2196 = vadd.f32 %v2186, %v2190
        %v2197 = vadd.f32 %v2187, %v2190
        %vm2198 = vcmp.gt.f32.partialorder %v2192, 0.0
        %vm2199 = vcmp.gt.f32.partialorder %v2193, 0.0
        %vm2200 = vcmp.gt.f32.partialorder %v2194, 0.0
        %vm2201 = vcmp.gt.f32.partialorder %v2195, 0.0
        %vm2202 = vcmp.gt.f32.partialorder %v2196, 0.0
        %vm2203 = vcmp.gt.f32.partialorder %v2197, 0.0
        %v2204 = vmul.f32 %v2192, 1.442695
        %v2205 = vpow.pop %v2204
        %v2206 = vmul.f32 %v2193, 1.442695
        %v2207 = vpow.pop %v2206
        %v2208 = vmul.f32 %v2194, 1.442695
        %v2209 = vpow.pop %v2208
        %v2210 = vmul.f32 %v2195, 1.442695
        %v2211 = vpow.pop %v2210
        %v2212 = vmul.f32 %v2196, 1.442695
        %v2213 = vpow.pop %v2212
        %v2214 = vmul.f32 %v2197, 1.442695
        %v2215 = vpow.pop %v2214
        %v2216 = vsub.f32 %v2205, 1.0
        %v2217 = vsub.f32 %v2207, 1.0
        %v2218 = vsub.f32 %v2209, 1.0
        %v2219 = vsub.f32 %v2211, 1.0
        %v2220 = vsub.f32 %v2213, 1.0
        %v2221 = vsub.f32 %v2215, 1.0
        %v2222 = vmul.f32 %v2216, 1.6732632
        %v2223 = vmul.f32 %v2217, 1.6732632
        %v2224 = vmul.f32 %v2218, 1.6732632
        %v2225 = vmul.f32 %v2219, 1.6732632
        %v2226 = vmul.f32 %v2220, 1.6732632
        %v2227 = vmul.f32 %v2221, 1.6732632
        %v2228 = vsel %vm2198, %v2192, %v2222
        %v2229 = vsel %vm2199, %v2193, %v2223
        %v2230 = vsel %vm2200, %v2194, %v2224
        %v2231 = vsel %vm2201, %v2195, %v2225
        %v2232 = vsel %vm2202, %v2196, %v2226
        %v2233 = vsel %vm2203, %v2197, %v2227
        %v2234 = vmul.f32 %v2228, 1.050701
        %v2235 = vmul.f32 %v2229, 1.050701
        %v2236 = vmul.f32 %v2230, 1.050701
        %v2237 = vmul.f32 %v2231, 1.050701
        %v2238 = vmul.f32 %v2232, 1.050701
        %v2239 = vmul.f32 %v2233, 1.050701
        %2240 = vrot.lane.b32.xlu0 %v2234, 17
        %v2241 = vpop.permute.xlu0 %2240
        %2242 = vrot.lane.b32.xlu0 %v2235, 17
        %v2243 = vpop.permute.xlu0 %2242
        %2244 = vrot.lane.b32.xlu0 %v2236, 17
        %v2245 = vpop.permute.xlu0 %2244
        %2246 = vrot.lane.b32.xlu0 %v2237, 17
        %v2247 = vpop.permute.xlu0 %2246
        %2248 = vrot.lane.b32.xlu0 %v2238, 17
        %v2249 = vpop.permute.xlu0 %2248
        %2250 = vrot.lane.b32.xlu0 %v2239, 17
        %v2251 = vpop.permute.xlu0 %2250
        %v2252 = vsel %vm745, %v2249, %v2251
        %v2253 = vsel %vm745, %v2247, %v2249
        %v2254 = vsel %vm745, %v2245, %v2247
        %v2255 = vsel %vm745, %v2243, %v2245
        %v2256 = vsel %vm745, %v2241, %v2243
        %v2257 = vsel %vm745, %v2251, %v2241
        %v2258 = vmul.f32 %v2257, %v759
        %v2259 = vmul.f32 %v2256, %v763
        %v2260 = vmul.f32 %v2255, %v767
        %v2261 = vmul.f32 %v2254, %v771
        %v2262 = vmul.f32 %v2253, %v775
        %v2263 = vmul.f32 %v2252, %v779
        %2264 = vrot.lane.b32.xlu0 %v2234, 16
        %v2265 = vpop.permute.xlu0 %2264
        %2266 = vrot.lane.b32.xlu0 %v2235, 16
        %v2267 = vpop.permute.xlu0 %2266
        %2268 = vrot.lane.b32.xlu0 %v2236, 16
        %v2269 = vpop.permute.xlu0 %2268
        %2270 = vrot.lane.b32.xlu0 %v2237, 16
        %v2271 = vpop.permute.xlu0 %2270
        %2272 = vrot.lane.b32.xlu0 %v2238, 16
        %v2273 = vpop.permute.xlu0 %2272
        %2274 = vrot.lane.b32.xlu0 %v2239, 16
        %v2275 = vpop.permute.xlu0 %2274
        %v2276 = vsel %vm804, %v2273, %v2275
        %v2277 = vsel %vm804, %v2271, %v2273
        %v2278 = vsel %vm804, %v2269, %v2271
        %v2279 = vsel %vm804, %v2267, %v2269
        %v2280 = vsel %vm804, %v2265, %v2267
        %v2281 = vsel %vm804, %v2275, %v2265
        %v2282 = vmul.f32 %v2281, %v819
        %v2283 = vmul.f32 %v2280, %v823
        %v2284 = vmul.f32 %v2279, %v827
        %v2285 = vmul.f32 %v2278, %v831
        %v2286 = vmul.f32 %v2277, %v835
        %v2287 = vmul.f32 %v2276, %v839
        %2288 = vrot.lane.b32.xlu0 %v2234, 15
        %v2289 = vpop.permute.xlu0 %2288
        %2290 = vrot.lane.b32.xlu0 %v2235, 15
        %v2291 = vpop.permute.xlu0 %2290
        %2292 = vrot.lane.b32.xlu0 %v2236, 15
        %v2293 = vpop.permute.xlu0 %2292
        %2294 = vrot.lane.b32.xlu0 %v2237, 15
        %v2295 = vpop.permute.xlu0 %2294
        %2296 = vrot.lane.b32.xlu0 %v2238, 15
        %v2297 = vpop.permute.xlu0 %2296
        %2298 = vrot.lane.b32.xlu0 %v2239, 15
        %v2299 = vpop.permute.xlu0 %2298
        %v2300 = vsel %vm864, %v2297, %v2299
        %v2301 = vsel %vm864, %v2295, %v2297
        %v2302 = vsel %vm864, %v2293, %v2295
        %v2303 = vsel %vm864, %v2291, %v2293
        %v2304 = vsel %vm864, %v2289, %v2291
        %v2305 = vsel %vm864, %v2299, %v2289
        %v2306 = vmul.f32 %v2305, %v879
        %v2307 = vmul.f32 %v2304, %v883
        %v2308 = vmul.f32 %v2303, %v887
        %v2309 = vmul.f32 %v2302, %v891
        %v2310 = vmul.f32 %v2301, %v895
        %v2311 = vmul.f32 %v2300, %v899
        %2312 = vrot.lane.b32.xlu0 %v2234, 1
        %v2313 = vpop.permute.xlu0 %2312
        %2314 = vrot.lane.b32.xlu0 %v2235, 1
        %v2315 = vpop.permute.xlu0 %2314
        %2316 = vrot.lane.b32.xlu0 %v2236, 1
        %v2317 = vpop.permute.xlu0 %2316
        %2318 = vrot.lane.b32.xlu0 %v2237, 1
        %v2319 = vpop.permute.xlu0 %2318
        %2320 = vrot.lane.b32.xlu0 %v2238, 1
        %v2321 = vpop.permute.xlu0 %2320
        %2322 = vrot.lane.b32.xlu0 %v2239, 1
        %v2323 = vpop.permute.xlu0 %2322
        %v2324 = vsel %vm924, %v2321, %v2323
        %v2325 = vsel %vm924, %v2319, %v2321
        %v2326 = vsel %vm924, %v2317, %v2319
        %v2327 = vsel %vm924, %v2315, %v2317
        %v2328 = vsel %vm924, %v2313, %v2315
        %v2329 = vsel %vm924, %v2323, %v2313
        %v2330 = vmul.f32 %v2329, %v939
        %v2331 = vmul.f32 %v2328, %v943
        %v2332 = vmul.f32 %v2327, %v947
        %v2333 = vmul.f32 %v2326, %v951
        %v2334 = vmul.f32 %v2325, %v955
        %v2335 = vmul.f32 %v2324, %v959
        %2336 = vrot.lane.b32.xlu0 %v2234, 127
        %v2337 = vpop.permute.xlu0 %2336
        %2338 = vrot.lane.b32.xlu0 %v2235, 127
        %v2339 = vpop.permute.xlu0 %2338
        %2340 = vrot.lane.b32.xlu0 %v2236, 127
        %v2341 = vpop.permute.xlu0 %2340
        %2342 = vrot.lane.b32.xlu0 %v2237, 127
        %v2343 = vpop.permute.xlu0 %2342
        %2344 = vrot.lane.b32.xlu0 %v2238, 127
        %v2345 = vpop.permute.xlu0 %2344
        %2346 = vrot.lane.b32.xlu0 %v2239, 127
        %v2347 = vpop.permute.xlu0 %2346
        %v2348 = vsel %vm984, %v2345, %v2347
        %v2349 = vsel %vm984, %v2343, %v2345
        %v2350 = vsel %vm984, %v2341, %v2343
        %v2351 = vsel %vm984, %v2339, %v2341
        %v2352 = vsel %vm984, %v2337, %v2339
        %v2353 = vsel %vm984, %v2347, %v2337
        %v2354 = vmul.f32 %v2352, %v999
        %v2355 = vmul.f32 %v2351, %v1003
        %v2356 = vmul.f32 %v2350, %v1007
        %v2357 = vmul.f32 %v2349, %v1011
        %v2358 = vmul.f32 %v2348, %v1015
        %v2359 = vmul.f32 %v2353, %v1019
        %2360 = vrot.lane.b32.xlu0 %v2234, 113
        %v2361 = vpop.permute.xlu0 %2360
        %2362 = vrot.lane.b32.xlu0 %v2235, 113
        %v2363 = vpop.permute.xlu0 %2362
        %2364 = vrot.lane.b32.xlu0 %v2236, 113
        %v2365 = vpop.permute.xlu0 %2364
        %2366 = vrot.lane.b32.xlu0 %v2237, 113
        %v2367 = vpop.permute.xlu0 %2366
        %2368 = vrot.lane.b32.xlu0 %v2238, 113
        %v2369 = vpop.permute.xlu0 %2368
        %2370 = vrot.lane.b32.xlu0 %v2239, 113
        %v2371 = vpop.permute.xlu0 %2370
        %v2372 = vsel %vm1044, %v2369, %v2371
        %v2373 = vsel %vm1044, %v2367, %v2369
        %v2374 = vsel %vm1044, %v2365, %v2367
        %v2375 = vsel %vm1044, %v2363, %v2365
        %v2376 = vsel %vm1044, %v2361, %v2363
        %v2377 = vsel %vm1044, %v2371, %v2361
        %v2378 = vmul.f32 %v2376, %v1059
        %v2379 = vmul.f32 %v2375, %v1063
        %v2380 = vmul.f32 %v2374, %v1067
        %v2381 = vmul.f32 %v2373, %v1071
        %v2382 = vmul.f32 %v2372, %v1075
        %v2383 = vmul.f32 %v2377, %v1079
        %2384 = vrot.lane.b32.xlu0 %v2234, 112
        %v2385 = vpop.permute.xlu0 %2384
        %2386 = vrot.lane.b32.xlu0 %v2235, 112
        %v2387 = vpop.permute.xlu0 %2386
        %2388 = vrot.lane.b32.xlu0 %v2236, 112
        %v2389 = vpop.permute.xlu0 %2388
        %2390 = vrot.lane.b32.xlu0 %v2237, 112
        %v2391 = vpop.permute.xlu0 %2390
        %2392 = vrot.lane.b32.xlu0 %v2238, 112
        %v2393 = vpop.permute.xlu0 %2392
        %2394 = vrot.lane.b32.xlu0 %v2239, 112
        %v2395 = vpop.permute.xlu0 %2394
        %v2396 = vsel %vm1104, %v2393, %v2395
        %v2397 = vsel %vm1104, %v2391, %v2393
        %v2398 = vsel %vm1104, %v2389, %v2391
        %v2399 = vsel %vm1104, %v2387, %v2389
        %v2400 = vsel %vm1104, %v2385, %v2387
        %v2401 = vsel %vm1104, %v2395, %v2385
        %v2402 = vmul.f32 %v2400, %v1119
        %v2403 = vmul.f32 %v2399, %v1123
        %v2404 = vmul.f32 %v2398, %v1127
        %v2405 = vmul.f32 %v2397, %v1131
        %v2406 = vmul.f32 %v2396, %v1135
        %v2407 = vmul.f32 %v2401, %v1139
        %2408 = vrot.lane.b32.xlu0 %v2234, 111
        %v2409 = vpop.permute.xlu0 %2408
        %2410 = vrot.lane.b32.xlu0 %v2235, 111
        %v2411 = vpop.permute.xlu0 %2410
        %2412 = vrot.lane.b32.xlu0 %v2236, 111
        %v2413 = vpop.permute.xlu0 %2412
        %2414 = vrot.lane.b32.xlu0 %v2237, 111
        %v2415 = vpop.permute.xlu0 %2414
        %2416 = vrot.lane.b32.xlu0 %v2238, 111
        %v2417 = vpop.permute.xlu0 %2416
        %2418 = vrot.lane.b32.xlu0 %v2239, 111
        %v2419 = vpop.permute.xlu0 %2418
        %v2420 = vsel %vm1164, %v2417, %v2419
        %v2421 = vsel %vm1164, %v2415, %v2417
        %v2422 = vsel %vm1164, %v2413, %v2415
        %v2423 = vsel %vm1164, %v2411, %v2413
        %v2424 = vsel %vm1164, %v2409, %v2411
        %v2425 = vsel %vm1164, %v2419, %v2409
        %v2426 = vmul.f32 %v2424, %v1179
        %v2427 = vmul.f32 %v2423, %v1183
        %v2428 = vmul.f32 %v2422, %v1187
        %v2429 = vmul.f32 %v2421, %v1191
        %v2430 = vmul.f32 %v2420, %v1195
        %v2431 = vmul.f32 %v2425, %v1199
        %v2438 = vrot.slane %v2282, 4
        %v2439 = vrot.slane %v2283, 4
        %v2440 = vrot.slane %v2284, 4
        %v2441 = vrot.slane %v2285, 4
        %v2442 = vrot.slane %v2286, 4
        %v2443 = vrot.slane %v2287, 4
        %v2456 = vrot.slane %v2330, 4
        %v2457 = vrot.slane %v2331, 4
        %v2458 = vrot.slane %v2332, 4
        %v2459 = vrot.slane %v2333, 4
        %v2460 = vrot.slane %v2334, 4
        %v2461 = vrot.slane %v2335, 4
        %v2474 = vrot.slane %v2354, 4
        %v2475 = vrot.slane %v2355, 4
        %v2476 = vrot.slane %v2356, 4
        %v2477 = vrot.slane %v2357, 4
        %v2478 = vrot.slane %v2358, 4
        %v2479 = vrot.slane %v2359, 4
        %v2492 = vrot.slane %v2402, 4
        %v2493 = vrot.slane %v2403, 4
        %v2494 = vrot.slane %v2404, 4
        %v2495 = vrot.slane %v2405, 4
        %v2496 = vrot.slane %v2406, 4
        %v2497 = vrot.slane %v2407, 4
        %v2504 = vsel %vm1284, %v2258, %v2438
        %v2505 = vsel %vm1284, %v2259, %v2439
        %v2506 = vsel %vm1284, %v2260, %v2440
        %v2507 = vsel %vm1284, %v2261, %v2441
        %v2508 = vsel %vm1284, %v2262, %v2442
        %v2509 = vsel %vm1284, %v2263, %v2443
        %v2510 = vsel %vm1284, %v2306, %v2456
        %v2511 = vsel %vm1284, %v2307, %v2457
        %v2512 = vsel %vm1284, %v2308, %v2458
        %v2513 = vsel %vm1284, %v2309, %v2459
        %v2514 = vsel %vm1284, %v2310, %v2460
        %v2515 = vsel %vm1284, %v2311, %v2461
        %v2516 = vsel %vm1284, %v2234, %v2474
        %v2517 = vsel %vm1284, %v2235, %v2475
        %v2518 = vsel %vm1284, %v2236, %v2476
        %v2519 = vsel %vm1284, %v2237, %v2477
        %v2520 = vsel %vm1284, %v2238, %v2478
        %v2521 = vsel %vm1284, %v2239, %v2479
        %v2522 = vsel %vm1284, %v2378, %v2492
        %v2523 = vsel %vm1284, %v2379, %v2493
        %v2524 = vsel %vm1284, %v2380, %v2494
        %v2525 = vsel %vm1284, %v2381, %v2495
        %v2526 = vsel %vm1284, %v2382, %v2496
        %v2527 = vsel %vm1284, %v2383, %v2497
        %s2528 = scalar_lea.vmem %s3, 8
        %v2529 = vld [vmem:[%s2528] sm:$0xf]
        %2530 = vset.pattern.permute.xlu0 5
        %2531 = vperm.xlu0 %2530, %v294
        %v2532 = vpop.permute.xlu0 %2531
        %v2535 = vsel %vm1315, %v2529, 0
        %v2538 = vsel %vm1284, %v2426, 0
        %v2541 = vsel %vm1284, %v2427, 0
        %v2544 = vsel %vm1284, %v2428, 0
        %v2547 = vsel %vm1284, %v2429, 0
        %v2550 = vsel %vm1284, %v2430, 0
        %v2553 = vsel %vm1284, %v2431, 0
        %2555 = vmatprep.subr.mxu0 %v2505
        %2556 = vmatpush1.msra.mxu0 %v2504
        %2557 = vmatprep.subr.mxu0 %v2511
        %2558 = vmatpush1.msra.mxu0 %v2510
        %2559 = vmatprep.subr.mxu0 %v2517
        %2560 = vmatpush1.msra.mxu0 %v2516
        %2561 = vmatprep.subr.mxu0 %v2523
        %2562 = vmatpush1.msra.mxu0 %v2522
        %2563 = vmatprep.subr.mxu0 %v2541
        %2564 = vmatpush1.msra.mxu0 %v2538
        %2565 = vmatprep.subr.mxu0 0.0
        %2566 = vmatpush1.msra.mxu0 0.0
        %2567 = vmatprep.subr.mxu0 0.0
        %2568 = vmatpush1.msra.mxu0 0.0
        %2569 = vmatprep.subr.mxu0 0.0
        %2570 = vmatpush1.msra.mxu0 0.0
        %2571 = vmatprep.subr.mxu0 0.0
        %2572 = vmatpush1.msra.mxu0 0.0
        %2573 = vmatprep.subr.mxu0 0.0
        %2574 = vmatpush1.msra.mxu0 0.0
        %2575 = vmatprep.subr.mxu0 0.0
        %2576 = vmatpush1.msra.mxu0 0.0
        %2577 = vmatprep.subr.mxu0 0.0
        %2578 = vmatpush1.msra.mxu0 0.0
        %2579 = vmatprep.subr.mxu0 0.0
        %2580 = vmatpush1.msra.mxu0 0.0
        %2581 = vmatprep.subr.mxu0 0.0
        %2582 = vmatpush1.msra.mxu0 0.0
        %2583 = vmatprep.subr.mxu0 0.0
        %2584 = vmatpush1.msra.mxu0 0.0
        %2585 = vmatprep.subr.mxu0 0.0
        %2586 = vmatpush1.msra.mxu0 0.0
        %2587 = vmatprep.subr.mxu0 0.0
        %2588 = vmatpush1.msra.mxu0 0.0
        %2589 = vmatprep.subr.mxu0 0.0
        %2590 = vmatpush1.msra.mxu0 0.0
        %2591 = vmatprep.subr.mxu0 0.0
        %2592 = vmatpush1.msra.mxu0 0.0
        %2593 = vmatprep.subr.mxu0 0.0
        %2594 = vmatpush1.msra.mxu0 0.0
        %2595 = vmatprep.subr.mxu0 0.0
        %2596 = vmatpush1.msra.mxu0 0.0
        %2597 = vmatprep.subr.mxu0 0.0
        %2598 = vmatpush1.msra.mxu0 0.0
        %2599 = vmatprep.subr.mxu0 0.0
        %2600 = vmatpush1.msra.mxu0 0.0
        %2601 = vmatprep.subr.mxu0 0.0
        %2602 = vmatpush1.msra.mxu0 0.0
        %2603 = vmatprep.subr.mxu0 0.0
        %2604 = vmatpush1.msra.mxu0 0.0
        %2605 = vmatprep.subr.mxu0 0.0
        %2606 = vmatpush1.msra.mxu0 0.0
        %2607 = vmatprep.subr.mxu0 0.0
        %2608 = vmatpush1.msra.mxu0 0.0
        %2609 = vmatprep.subr.mxu0 0.0
        %2610 = vmatpush1.msra.mxu0 0.0
        %2611 = vmatprep.subr.mxu0 0.0
        %2612 = vmatpush1.msra.mxu0 0.0
        %2613 = vmatprep.subr.mxu0 0.0
        %2614 = vmatpush1.msra.mxu0 0.0
        %2615 = vmatprep.subr.mxu0 0.0
        %2616 = vmatpush1.msra.mxu0 0.0
        %2617 = vmatprep.subr.mxu0 0.0
        %2618 = vmatpush1.msra.mxu0 0.0
        %2619 = vmatprep.mubr.f32.mxu0 0.0
        %2620 = vmatmul.mubr.f32.gmra.mrb[0].mxu0 %v2535
        %v2621 = vpop.f32.mrb[0].mxu0
        %v2622 = vadd.f32 %v2532, %v2621
        %v2623 = vpop.f32.mrb[0].mxu0
        %v2624 = vadd.f32 %v2532, %v2623
        %2625 = vdwg.mxu0
        %2626 = vmatprep.subr.mxu0 %v2507
        %2627 = vmatpush1.msra.mxu0 %v2506
        %2628 = vmatprep.subr.mxu0 %v2513
        %2629 = vmatpush1.msra.mxu0 %v2512
        %2630 = vmatprep.subr.mxu0 %v2519
        %2631 = vmatpush1.msra.mxu0 %v2518
        %2632 = vmatprep.subr.mxu0 %v2525
        %2633 = vmatpush1.msra.mxu0 %v2524
        %2634 = vmatprep.subr.mxu0 %v2547
        %2635 = vmatpush1.msra.mxu0 %v2544
        %2636 = vmatprep.subr.mxu0 0.0
        %2637 = vmatpush1.msra.mxu0 0.0
        %2638 = vmatprep.subr.mxu0 0.0
        %2639 = vmatpush1.msra.mxu0 0.0
        %2640 = vmatprep.subr.mxu0 0.0
        %2641 = vmatpush1.msra.mxu0 0.0
        %2642 = vmatprep.subr.mxu0 0.0
        %2643 = vmatpush1.msra.mxu0 0.0
        %2644 = vmatprep.subr.mxu0 0.0
        %2645 = vmatpush1.msra.mxu0 0.0
        %2646 = vmatprep.subr.mxu0 0.0
        %2647 = vmatpush1.msra.mxu0 0.0
        %2648 = vmatprep.subr.mxu0 0.0
        %2649 = vmatpush1.msra.mxu0 0.0
        %2650 = vmatprep.subr.mxu0 0.0
        %2651 = vmatpush1.msra.mxu0 0.0
        %2652 = vmatprep.subr.mxu0 0.0
        %2653 = vmatpush1.msra.mxu0 0.0
        %2654 = vmatprep.subr.mxu0 0.0
        %2655 = vmatpush1.msra.mxu0 0.0
        %2656 = vmatprep.subr.mxu0 0.0
        %2657 = vmatpush1.msra.mxu0 0.0
        %2658 = vmatprep.subr.mxu0 0.0
        %2659 = vmatpush1.msra.mxu0 0.0
        %2660 = vmatprep.subr.mxu0 0.0
        %2661 = vmatpush1.msra.mxu0 0.0
        %2662 = vmatprep.subr.mxu0 0.0
        %2663 = vmatpush1.msra.mxu0 0.0
        %2664 = vmatprep.subr.mxu0 0.0
        %2665 = vmatpush1.msra.mxu0 0.0
        %2666 = vmatprep.subr.mxu0 0.0
        %2667 = vmatpush1.msra.mxu0 0.0
        %2668 = vmatprep.subr.mxu0 0.0
        %2669 = vmatpush1.msra.mxu0 0.0
        %2670 = vmatprep.subr.mxu0 0.0
        %2671 = vmatpush1.msra.mxu0 0.0
        %2672 = vmatprep.subr.mxu0 0.0
        %2673 = vmatpush1.msra.mxu0 0.0
        %2674 = vmatprep.subr.mxu0 0.0
        %2675 = vmatpush1.msra.mxu0 0.0
        %2676 = vmatprep.subr.mxu0 0.0
        %2677 = vmatpush1.msra.mxu0 0.0
        %2678 = vmatprep.subr.mxu0 0.0
        %2679 = vmatpush1.msra.mxu0 0.0
        %2680 = vmatprep.subr.mxu0 0.0
        %2681 = vmatpush1.msra.mxu0 0.0
        %2682 = vmatprep.subr.mxu0 0.0
        %2683 = vmatpush1.msra.mxu0 0.0
        %2684 = vmatprep.subr.mxu0 0.0
        %2685 = vmatpush1.msra.mxu0 0.0
        %2686 = vmatprep.subr.mxu0 0.0
        %2687 = vmatpush1.msra.mxu0 0.0
        %2688 = vmatprep.subr.mxu0 0.0
        %2689 = vmatpush1.msra.mxu0 0.0
        %2690 = vmatprep.mubr.f32.mxu0 0.0
        %2691 = vmatmul.mubr.f32.gmra.mrb[0].mxu0 %v2535
        %v2692 = vpop.f32.mrb[0].mxu0
        %v2693 = vadd.f32 %v2532, %v2692
        %v2694 = vpop.f32.mrb[0].mxu0
        %v2695 = vadd.f32 %v2532, %v2694
        %2696 = vdwg.mxu0
        %2697 = vmatprep.subr.mxu0 %v2509
        %2698 = vmatpush1.msra.mxu0 %v2508
        %2699 = vmatprep.subr.mxu0 %v2515
        %2700 = vmatpush1.msra.mxu0 %v2514
        %2701 = vmatprep.subr.mxu0 %v2521
        %2702 = vmatpush1.msra.mxu0 %v2520
        %2703 = vmatprep.subr.mxu0 %v2527
        %2704 = vmatpush1.msra.mxu0 %v2526
        %2705 = vmatprep.subr.mxu0 %v2553
        %2706 = vmatpush1.msra.mxu0 %v2550
        %2707 = vmatprep.subr.mxu0 0.0
        %2708 = vmatpush1.msra.mxu0 0.0
        %2709 = vmatprep.subr.mxu0 0.0
        %2710 = vmatpush1.msra.mxu0 0.0
        %2711 = vmatprep.subr.mxu0 0.0
        %2712 = vmatpush1.msra.mxu0 0.0
        %2713 = vmatprep.subr.mxu0 0.0
        %2714 = vmatpush1.msra.mxu0 0.0
        %2715 = vmatprep.subr.mxu0 0.0
        %2716 = vmatpush1.msra.mxu0 0.0
        %2717 = vmatprep.subr.mxu0 0.0
        %2718 = vmatpush1.msra.mxu0 0.0
        %2719 = vmatprep.subr.mxu0 0.0
        %2720 = vmatpush1.msra.mxu0 0.0
        %2721 = vmatprep.subr.mxu0 0.0
        %2722 = vmatpush1.msra.mxu0 0.0
        %2723 = vmatprep.subr.mxu0 0.0
        %2724 = vmatpush1.msra.mxu0 0.0
        %2725 = vmatprep.subr.mxu0 0.0
        %2726 = vmatpush1.msra.mxu0 0.0
        %2727 = vmatprep.subr.mxu0 0.0
        %2728 = vmatpush1.msra.mxu0 0.0
        %2729 = vmatprep.subr.mxu0 0.0
        %2730 = vmatpush1.msra.mxu0 0.0
        %2731 = vmatprep.subr.mxu0 0.0
        %2732 = vmatpush1.msra.mxu0 0.0
        %2733 = vmatprep.subr.mxu0 0.0
        %2734 = vmatpush1.msra.mxu0 0.0
        %2735 = vmatprep.subr.mxu0 0.0
        %2736 = vmatpush1.msra.mxu0 0.0
        %2737 = vmatprep.subr.mxu0 0.0
        %2738 = vmatpush1.msra.mxu0 0.0
        %2739 = vmatprep.subr.mxu0 0.0
        %2740 = vmatpush1.msra.mxu0 0.0
        %2741 = vmatprep.subr.mxu0 0.0
        %2742 = vmatpush1.msra.mxu0 0.0
        %2743 = vmatprep.subr.mxu0 0.0
        %2744 = vmatpush1.msra.mxu0 0.0
        %2745 = vmatprep.subr.mxu0 0.0
        %2746 = vmatpush1.msra.mxu0 0.0
        %2747 = vmatprep.subr.mxu0 0.0
        %2748 = vmatpush1.msra.mxu0 0.0
        %2749 = vmatprep.subr.mxu0 0.0
        %2750 = vmatpush1.msra.mxu0 0.0
        %2751 = vmatprep.subr.mxu0 0.0
        %2752 = vmatpush1.msra.mxu0 0.0
        %2753 = vmatprep.subr.mxu0 0.0
        %2754 = vmatpush1.msra.mxu0 0.0
        %2755 = vmatprep.subr.mxu0 0.0
        %2756 = vmatpush1.msra.mxu0 0.0
        %2757 = vmatprep.subr.mxu0 0.0
        %2758 = vmatpush1.msra.mxu0 0.0
        %2759 = vmatprep.subr.mxu0 0.0
        %2760 = vmatpush1.msra.mxu0 0.0
        %2761 = vmatprep.mubr.f32.mxu0 0.0
        %2762 = vmatmul.mubr.f32.gmra.mrb[0].mxu0 %v2535
        %v2763 = vpop.f32.mrb[0].mxu0
        %v2764 = vadd.f32 %v2532, %v2763
        %v2765 = vpop.f32.mrb[0].mxu0
        %v2766 = vadd.f32 %v2532, %v2765
        %2767 = vdwg.mxu0
        %2768 = vrot.lane.b32.xlu0 %v2622, 17
        %v2769 = vpop.permute.xlu0 %2768
        %2770 = vrot.lane.b32.xlu0 %v2624, 17
        %v2771 = vpop.permute.xlu0 %2770
        %2772 = vrot.lane.b32.xlu0 %v2693, 17
        %v2773 = vpop.permute.xlu0 %2772
        %2774 = vrot.lane.b32.xlu0 %v2695, 17
        %v2775 = vpop.permute.xlu0 %2774
        %2776 = vrot.lane.b32.xlu0 %v2764, 17
        %v2777 = vpop.permute.xlu0 %2776
        %2778 = vrot.lane.b32.xlu0 %v2766, 17
        %v2779 = vpop.permute.xlu0 %2778
        %v2780 = vsel %vm745, %v2777, %v2779
        %v2781 = vsel %vm745, %v2775, %v2777
        %v2782 = vsel %vm745, %v2773, %v2775
        %v2783 = vsel %vm745, %v2771, %v2773
        %v2784 = vsel %vm745, %v2769, %v2771
        %v2785 = vsel %vm745, %v2779, %v2769
        %v2786 = vmul.f32 %v2785, %v759
        %v2787 = vmul.f32 %v2784, %v763
        %v2788 = vmul.f32 %v2783, %v767
        %v2789 = vmul.f32 %v2782, %v771
        %v2790 = vmul.f32 %v2781, %v775
        %v2791 = vmul.f32 %v2780, %v779
        %2792 = vrot.lane.b32.xlu0 %v2622, 16
        %v2793 = vpop.permute.xlu0 %2792
        %2794 = vrot.lane.b32.xlu0 %v2624, 16
        %v2795 = vpop.permute.xlu0 %2794
        %2796 = vrot.lane.b32.xlu0 %v2693, 16
        %v2797 = vpop.permute.xlu0 %2796
        %2798 = vrot.lane.b32.xlu0 %v2695, 16
        %v2799 = vpop.permute.xlu0 %2798
        %2800 = vrot.lane.b32.xlu0 %v2764, 16
        %v2801 = vpop.permute.xlu0 %2800
        %2802 = vrot.lane.b32.xlu0 %v2766, 16
        %v2803 = vpop.permute.xlu0 %2802
        %v2804 = vsel %vm804, %v2801, %v2803
        %v2805 = vsel %vm804, %v2799, %v2801
        %v2806 = vsel %vm804, %v2797, %v2799
        %v2807 = vsel %vm804, %v2795, %v2797
        %v2808 = vsel %vm804, %v2793, %v2795
        %v2809 = vsel %vm804, %v2803, %v2793
        %v2810 = vmul.f32 %v2809, %v819
        %v2811 = vmul.f32 %v2808, %v823
        %v2812 = vmul.f32 %v2807, %v827
        %v2813 = vmul.f32 %v2806, %v831
        %v2814 = vmul.f32 %v2805, %v835
        %v2815 = vmul.f32 %v2804, %v839
        %2816 = vrot.lane.b32.xlu0 %v2622, 15
        %v2817 = vpop.permute.xlu0 %2816
        %2818 = vrot.lane.b32.xlu0 %v2624, 15
        %v2819 = vpop.permute.xlu0 %2818
        %2820 = vrot.lane.b32.xlu0 %v2693, 15
        %v2821 = vpop.permute.xlu0 %2820
        %2822 = vrot.lane.b32.xlu0 %v2695, 15
        %v2823 = vpop.permute.xlu0 %2822
        %2824 = vrot.lane.b32.xlu0 %v2764, 15
        %v2825 = vpop.permute.xlu0 %2824
        %2826 = vrot.lane.b32.xlu0 %v2766, 15
        %v2827 = vpop.permute.xlu0 %2826
        %v2828 = vsel %vm864, %v2825, %v2827
        %v2829 = vsel %vm864, %v2823, %v2825
        %v2830 = vsel %vm864, %v2821, %v2823
        %v2831 = vsel %vm864, %v2819, %v2821
        %v2832 = vsel %vm864, %v2817, %v2819
        %v2833 = vsel %vm864, %v2827, %v2817
        %v2834 = vmul.f32 %v2833, %v879
        %v2835 = vmul.f32 %v2832, %v883
        %v2836 = vmul.f32 %v2831, %v887
        %v2837 = vmul.f32 %v2830, %v891
        %v2838 = vmul.f32 %v2829, %v895
        %v2839 = vmul.f32 %v2828, %v899
        %2840 = vrot.lane.b32.xlu0 %v2622, 1
        %v2841 = vpop.permute.xlu0 %2840
        %2842 = vrot.lane.b32.xlu0 %v2624, 1
        %v2843 = vpop.permute.xlu0 %2842
        %2844 = vrot.lane.b32.xlu0 %v2693, 1
        %v2845 = vpop.permute.xlu0 %2844
        %2846 = vrot.lane.b32.xlu0 %v2695, 1
        %v2847 = vpop.permute.xlu0 %2846
        %2848 = vrot.lane.b32.xlu0 %v2764, 1
        %v2849 = vpop.permute.xlu0 %2848
        %2850 = vrot.lane.b32.xlu0 %v2766, 1
        %v2851 = vpop.permute.xlu0 %2850
        %v2852 = vsel %vm924, %v2849, %v2851
        %v2853 = vsel %vm924, %v2847, %v2849
        %v2854 = vsel %vm924, %v2845, %v2847
        %v2855 = vsel %vm924, %v2843, %v2845
        %v2856 = vsel %vm924, %v2841, %v2843
        %v2857 = vsel %vm924, %v2851, %v2841
        %v2858 = vmul.f32 %v2857, %v939
        %v2859 = vmul.f32 %v2856, %v943
        %v2860 = vmul.f32 %v2855, %v947
        %v2861 = vmul.f32 %v2854, %v951
        %v2862 = vmul.f32 %v2853, %v955
        %v2863 = vmul.f32 %v2852, %v959
        %2864 = vrot.lane.b32.xlu0 %v2622, 127
        %v2865 = vpop.permute.xlu0 %2864
        %2866 = vrot.lane.b32.xlu0 %v2624, 127
        %v2867 = vpop.permute.xlu0 %2866
        %2868 = vrot.lane.b32.xlu0 %v2693, 127
        %v2869 = vpop.permute.xlu0 %2868
        %2870 = vrot.lane.b32.xlu0 %v2695, 127
        %v2871 = vpop.permute.xlu0 %2870
        %2872 = vrot.lane.b32.xlu0 %v2764, 127
        %v2873 = vpop.permute.xlu0 %2872
        %2874 = vrot.lane.b32.xlu0 %v2766, 127
        %v2875 = vpop.permute.xlu0 %2874
        %v2876 = vsel %vm984, %v2873, %v2875
        %v2877 = vsel %vm984, %v2871, %v2873
        %v2878 = vsel %vm984, %v2869, %v2871
        %v2879 = vsel %vm984, %v2867, %v2869
        %v2880 = vsel %vm984, %v2865, %v2867
        %v2881 = vsel %vm984, %v2875, %v2865
        %v2882 = vmul.f32 %v2880, %v999
        %v2883 = vmul.f32 %v2879, %v1003
        %v2884 = vmul.f32 %v2878, %v1007
        %v2885 = vmul.f32 %v2877, %v1011
        %v2886 = vmul.f32 %v2876, %v1015
        %v2887 = vmul.f32 %v2881, %v1019
        %2888 = vrot.lane.b32.xlu0 %v2622, 113
        %v2889 = vpop.permute.xlu0 %2888
        %2890 = vrot.lane.b32.xlu0 %v2624, 113
        %v2891 = vpop.permute.xlu0 %2890
        %2892 = vrot.lane.b32.xlu0 %v2693, 113
        %v2893 = vpop.permute.xlu0 %2892
        %2894 = vrot.lane.b32.xlu0 %v2695, 113
        %v2895 = vpop.permute.xlu0 %2894
        %2896 = vrot.lane.b32.xlu0 %v2764, 113
        %v2897 = vpop.permute.xlu0 %2896
        %2898 = vrot.lane.b32.xlu0 %v2766, 113
        %v2899 = vpop.permute.xlu0 %2898
        %v2900 = vsel %vm1044, %v2897, %v2899
        %v2901 = vsel %vm1044, %v2895, %v2897
        %v2902 = vsel %vm1044, %v2893, %v2895
        %v2903 = vsel %vm1044, %v2891, %v2893
        %v2904 = vsel %vm1044, %v2889, %v2891
        %v2905 = vsel %vm1044, %v2899, %v2889
        %v2906 = vmul.f32 %v2904, %v1059
        %v2907 = vmul.f32 %v2903, %v1063
        %v2908 = vmul.f32 %v2902, %v1067
        %v2909 = vmul.f32 %v2901, %v1071
        %v2910 = vmul.f32 %v2900, %v1075
        %v2911 = vmul.f32 %v2905, %v1079
        %2912 = vrot.lane.b32.xlu0 %v2622, 112
        %v2913 = vpop.permute.xlu0 %2912
        %2914 = vrot.lane.b32.xlu0 %v2624, 112
        %v2915 = vpop.permute.xlu0 %2914
        %2916 = vrot.lane.b32.xlu0 %v2693, 112
        %v2917 = vpop.permute.xlu0 %2916
        %2918 = vrot.lane.b32.xlu0 %v2695, 112
        %v2919 = vpop.permute.xlu0 %2918
        %2920 = vrot.lane.b32.xlu0 %v2764, 112
        %v2921 = vpop.permute.xlu0 %2920
        %2922 = vrot.lane.b32.xlu0 %v2766, 112
        %v2923 = vpop.permute.xlu0 %2922
        %v2924 = vsel %vm1104, %v2921, %v2923
        %v2925 = vsel %vm1104, %v2919, %v2921
        %v2926 = vsel %vm1104, %v2917, %v2919
        %v2927 = vsel %vm1104, %v2915, %v2917
        %v2928 = vsel %vm1104, %v2913, %v2915
        %v2929 = vsel %vm1104, %v2923, %v2913
        %v2930 = vmul.f32 %v2928, %v1119
        %v2931 = vmul.f32 %v2927, %v1123
        %v2932 = vmul.f32 %v2926, %v1127
        %v2933 = vmul.f32 %v2925, %v1131
        %v2934 = vmul.f32 %v2924, %v1135
        %v2935 = vmul.f32 %v2929, %v1139
        %2936 = vrot.lane.b32.xlu0 %v2622, 111
        %v2937 = vpop.permute.xlu0 %2936
        %2938 = vrot.lane.b32.xlu0 %v2624, 111
        %v2939 = vpop.permute.xlu0 %2938
        %2940 = vrot.lane.b32.xlu0 %v2693, 111
        %v2941 = vpop.permute.xlu0 %2940
        %2942 = vrot.lane.b32.xlu0 %v2695, 111
        %v2943 = vpop.permute.xlu0 %2942
        %2944 = vrot.lane.b32.xlu0 %v2764, 111
        %v2945 = vpop.permute.xlu0 %2944
        %2946 = vrot.lane.b32.xlu0 %v2766, 111
        %v2947 = vpop.permute.xlu0 %2946
        %v2948 = vsel %vm1164, %v2945, %v2947
        %v2949 = vsel %vm1164, %v2943, %v2945
        %v2950 = vsel %vm1164, %v2941, %v2943
        %v2951 = vsel %vm1164, %v2939, %v2941
        %v2952 = vsel %vm1164, %v2937, %v2939
        %v2953 = vsel %vm1164, %v2947, %v2937
        %v2954 = vmul.f32 %v2952, %v1179
        %v2955 = vmul.f32 %v2951, %v1183
        %v2956 = vmul.f32 %v2950, %v1187
        %v2957 = vmul.f32 %v2949, %v1191
        %v2958 = vmul.f32 %v2948, %v1195
        %v2959 = vmul.f32 %v2953, %v1199
        %v2966 = vrot.slane %v2810, 4
        %v2967 = vrot.slane %v2811, 4
        %v2968 = vrot.slane %v2812, 4
        %v2969 = vrot.slane %v2813, 4
        %v2970 = vrot.slane %v2814, 4
        %v2971 = vrot.slane %v2815, 4
        %v2984 = vrot.slane %v2858, 4
        %v2985 = vrot.slane %v2859, 4
        %v2986 = vrot.slane %v2860, 4
        %v2987 = vrot.slane %v2861, 4
        %v2988 = vrot.slane %v2862, 4
        %v2989 = vrot.slane %v2863, 4
        %v3002 = vrot.slane %v2882, 4
        %v3003 = vrot.slane %v2883, 4
        %v3004 = vrot.slane %v2884, 4
        %v3005 = vrot.slane %v2885, 4
        %v3006 = vrot.slane %v2886, 4
        %v3007 = vrot.slane %v2887, 4
        %v3020 = vrot.slane %v2930, 4
        %v3021 = vrot.slane %v2931, 4
        %v3022 = vrot.slane %v2932, 4
        %v3023 = vrot.slane %v2933, 4
        %v3024 = vrot.slane %v2934, 4
        %v3025 = vrot.slane %v2935, 4
        %v3032 = vsel %vm1284, %v2786, %v2966
        %v3033 = vsel %vm1284, %v2787, %v2967
        %v3034 = vsel %vm1284, %v2788, %v2968
        %v3035 = vsel %vm1284, %v2789, %v2969
        %v3036 = vsel %vm1284, %v2790, %v2970
        %v3037 = vsel %vm1284, %v2791, %v2971
        %v3038 = vsel %vm1284, %v2834, %v2984
        %v3039 = vsel %vm1284, %v2835, %v2985
        %v3040 = vsel %vm1284, %v2836, %v2986
        %v3041 = vsel %vm1284, %v2837, %v2987
        %v3042 = vsel %vm1284, %v2838, %v2988
        %v3043 = vsel %vm1284, %v2839, %v2989
        %v3044 = vsel %vm1284, %v2622, %v3002
        %v3045 = vsel %vm1284, %v2624, %v3003
        %v3046 = vsel %vm1284, %v2693, %v3004
        %v3047 = vsel %vm1284, %v2695, %v3005
        %v3048 = vsel %vm1284, %v2764, %v3006
        %v3049 = vsel %vm1284, %v2766, %v3007
        %v3050 = vsel %vm1284, %v2906, %v3020
        %v3051 = vsel %vm1284, %v2907, %v3021
        %v3052 = vsel %vm1284, %v2908, %v3022
        %v3053 = vsel %vm1284, %v2909, %v3023
        %v3054 = vsel %vm1284, %v2910, %v3024
        %v3055 = vsel %vm1284, %v2911, %v3025
        %s3056 = scalar_lea.vmem %s3, 12
        %v3057 = vld [vmem:[%s3056] sm:$0xf]
        %3058 = vset.pattern.permute.xlu0 6
        %3059 = vperm.xlu0 %3058, %v294
        %v3060 = vpop.permute.xlu0 %3059
        %v3063 = vsel %vm1315, %v3057, 0
        %v3066 = vsel %vm1284, %v2954, 0
        %v3069 = vsel %vm1284, %v2955, 0
        %v3072 = vsel %vm1284, %v2956, 0
        %v3075 = vsel %vm1284, %v2957, 0
        %v3078 = vsel %vm1284, %v2958, 0
        %v3081 = vsel %vm1284, %v2959, 0
        %3083 = vmatprep.subr.mxu0 %v3033
        %3084 = vmatpush1.msra.mxu0 %v3032
        %3085 = vmatprep.subr.mxu0 %v3039
        %3086 = vmatpush1.msra.mxu0 %v3038
        %3087 = vmatprep.subr.mxu0 %v3045
        %3088 = vmatpush1.msra.mxu0 %v3044
        %3089 = vmatprep.subr.mxu0 %v3051
        %3090 = vmatpush1.msra.mxu0 %v3050
        %3091 = vmatprep.subr.mxu0 %v3069
        %3092 = vmatpush1.msra.mxu0 %v3066
        %3093 = vmatprep.subr.mxu0 0.0
        %3094 = vmatpush1.msra.mxu0 0.0
        %3095 = vmatprep.subr.mxu0 0.0
        %3096 = vmatpush1.msra.mxu0 0.0
        %3097 = vmatprep.subr.mxu0 0.0
        %3098 = vmatpush1.msra.mxu0 0.0
        %3099 = vmatprep.subr.mxu0 0.0
        %3100 = vmatpush1.msra.mxu0 0.0
        %3101 = vmatprep.subr.mxu0 0.0
        %3102 = vmatpush1.msra.mxu0 0.0
        %3103 = vmatprep.subr.mxu0 0.0
        %3104 = vmatpush1.msra.mxu0 0.0
        %3105 = vmatprep.subr.mxu0 0.0
        %3106 = vmatpush1.msra.mxu0 0.0
        %3107 = vmatprep.subr.mxu0 0.0
        %3108 = vmatpush1.msra.mxu0 0.0
        %3109 = vmatprep.subr.mxu0 0.0
        %3110 = vmatpush1.msra.mxu0 0.0
        %3111 = vmatprep.subr.mxu0 0.0
        %3112 = vmatpush1.msra.mxu0 0.0
        %3113 = vmatprep.subr.mxu0 0.0
        %3114 = vmatpush1.msra.mxu0 0.0
        %3115 = vmatprep.subr.mxu0 0.0
        %3116 = vmatpush1.msra.mxu0 0.0
        %3117 = vmatprep.subr.mxu0 0.0
        %3118 = vmatpush1.msra.mxu0 0.0
        %3119 = vmatprep.subr.mxu0 0.0
        %3120 = vmatpush1.msra.mxu0 0.0
        %3121 = vmatprep.subr.mxu0 0.0
        %3122 = vmatpush1.msra.mxu0 0.0
        %3123 = vmatprep.subr.mxu0 0.0
        %3124 = vmatpush1.msra.mxu0 0.0
        %3125 = vmatprep.subr.mxu0 0.0
        %3126 = vmatpush1.msra.mxu0 0.0
        %3127 = vmatprep.subr.mxu0 0.0
        %3128 = vmatpush1.msra.mxu0 0.0
        %3129 = vmatprep.subr.mxu0 0.0
        %3130 = vmatpush1.msra.mxu0 0.0
        %3131 = vmatprep.subr.mxu0 0.0
        %3132 = vmatpush1.msra.mxu0 0.0
        %3133 = vmatprep.subr.mxu0 0.0
        %3134 = vmatpush1.msra.mxu0 0.0
        %3135 = vmatprep.subr.mxu0 0.0
        %3136 = vmatpush1.msra.mxu0 0.0
        %3137 = vmatprep.subr.mxu0 0.0
        %3138 = vmatpush1.msra.mxu0 0.0
        %3139 = vmatprep.subr.mxu0 0.0
        %3140 = vmatpush1.msra.mxu0 0.0
        %3141 = vmatprep.subr.mxu0 0.0
        %3142 = vmatpush1.msra.mxu0 0.0
        %3143 = vmatprep.subr.mxu0 0.0
        %3144 = vmatpush1.msra.mxu0 0.0
        %3145 = vmatprep.subr.mxu0 0.0
        %3146 = vmatpush1.msra.mxu0 0.0
        %3147 = vmatprep.mubr.f32.mxu0 0.0
        %3148 = vmatmul.mubr.f32.gmra.mrb[0].mxu0 %v3063
        %v3149 = vpop.f32.mrb[0].mxu0
        %v3150 = vadd.f32 %v3060, %v3149
        %v3151 = vpop.f32.mrb[0].mxu0
        %v3152 = vadd.f32 %v3060, %v3151
        %3153 = vdwg.mxu0
        %3154 = vmatprep.subr.mxu0 %v3035
        %3155 = vmatpush1.msra.mxu0 %v3034
        %3156 = vmatprep.subr.mxu0 %v3041
        %3157 = vmatpush1.msra.mxu0 %v3040
        %3158 = vmatprep.subr.mxu0 %v3047
        %3159 = vmatpush1.msra.mxu0 %v3046
        %3160 = vmatprep.subr.mxu0 %v3053
        %3161 = vmatpush1.msra.mxu0 %v3052
        %3162 = vmatprep.subr.mxu0 %v3075
        %3163 = vmatpush1.msra.mxu0 %v3072
        %3164 = vmatprep.subr.mxu0 0.0
        %3165 = vmatpush1.msra.mxu0 0.0
        %3166 = vmatprep.subr.mxu0 0.0
        %3167 = vmatpush1.msra.mxu0 0.0
        %3168 = vmatprep.subr.mxu0 0.0
        %3169 = vmatpush1.msra.mxu0 0.0
        %3170 = vmatprep.subr.mxu0 0.0
        %3171 = vmatpush1.msra.mxu0 0.0
        %3172 = vmatprep.subr.mxu0 0.0
        %3173 = vmatpush1.msra.mxu0 0.0
        %3174 = vmatprep.subr.mxu0 0.0
        %3175 = vmatpush1.msra.mxu0 0.0
        %3176 = vmatprep.subr.mxu0 0.0
        %3177 = vmatpush1.msra.mxu0 0.0
        %3178 = vmatprep.subr.mxu0 0.0
        %3179 = vmatpush1.msra.mxu0 0.0
        %3180 = vmatprep.subr.mxu0 0.0
        %3181 = vmatpush1.msra.mxu0 0.0
        %3182 = vmatprep.subr.mxu0 0.0
        %3183 = vmatpush1.msra.mxu0 0.0
        %3184 = vmatprep.subr.mxu0 0.0
        %3185 = vmatpush1.msra.mxu0 0.0
        %3186 = vmatprep.subr.mxu0 0.0
        %3187 = vmatpush1.msra.mxu0 0.0
        %3188 = vmatprep.subr.mxu0 0.0
        %3189 = vmatpush1.msra.mxu0 0.0
        %3190 = vmatprep.subr.mxu0 0.0
        %3191 = vmatpush1.msra.mxu0 0.0
        %3192 = vmatprep.subr.mxu0 0.0
        %3193 = vmatpush1.msra.mxu0 0.0
        %3194 = vmatprep.subr.mxu0 0.0
        %3195 = vmatpush1.msra.mxu0 0.0
        %3196 = vmatprep.subr.mxu0 0.0
        %3197 = vmatpush1.msra.mxu0 0.0
        %3198 = vmatprep.subr.mxu0 0.0
        %3199 = vmatpush1.msra.mxu0 0.0
        %3200 = vmatprep.subr.mxu0 0.0
        %3201 = vmatpush1.msra.mxu0 0.0
        %3202 = vmatprep.subr.mxu0 0.0
        %3203 = vmatpush1.msra.mxu0 0.0
        %3204 = vmatprep.subr.mxu0 0.0
        %3205 = vmatpush1.msra.mxu0 0.0
        %3206 = vmatprep.subr.mxu0 0.0
        %3207 = vmatpush1.msra.mxu0 0.0
        %3208 = vmatprep.subr.mxu0 0.0
        %3209 = vmatpush1.msra.mxu0 0.0
        %3210 = vmatprep.subr.mxu0 0.0
        %3211 = vmatpush1.msra.mxu0 0.0
        %3212 = vmatprep.subr.mxu0 0.0
        %3213 = vmatpush1.msra.mxu0 0.0
        %3214 = vmatprep.subr.mxu0 0.0
        %3215 = vmatpush1.msra.mxu0 0.0
        %3216 = vmatprep.subr.mxu0 0.0
        %3217 = vmatpush1.msra.mxu0 0.0
        %3218 = vmatprep.mubr.f32.mxu0 0.0
        %3219 = vmatmul.mubr.f32.gmra.mrb[0].mxu0 %v3063
        %v3220 = vpop.f32.mrb[0].mxu0
        %v3221 = vadd.f32 %v3060, %v3220
        %v3222 = vpop.f32.mrb[0].mxu0
        %v3223 = vadd.f32 %v3060, %v3222
        %3224 = vdwg.mxu0
        %3225 = vmatprep.subr.mxu0 %v3037
        %3226 = vmatpush1.msra.mxu0 %v3036
        %3227 = vmatprep.subr.mxu0 %v3043
        %3228 = vmatpush1.msra.mxu0 %v3042
        %3229 = vmatprep.subr.mxu0 %v3049
        %3230 = vmatpush1.msra.mxu0 %v3048
        %3231 = vmatprep.subr.mxu0 %v3055
        %3232 = vmatpush1.msra.mxu0 %v3054
        %3233 = vmatprep.subr.mxu0 %v3081
        %3234 = vmatpush1.msra.mxu0 %v3078
        %3235 = vmatprep.subr.mxu0 0.0
        %3236 = vmatpush1.msra.mxu0 0.0
        %3237 = vmatprep.subr.mxu0 0.0
        %3238 = vmatpush1.msra.mxu0 0.0
        %3239 = vmatprep.subr.mxu0 0.0
        %3240 = vmatpush1.msra.mxu0 0.0
        %3241 = vmatprep.subr.mxu0 0.0
        %3242 = vmatpush1.msra.mxu0 0.0
        %3243 = vmatprep.subr.mxu0 0.0
        %3244 = vmatpush1.msra.mxu0 0.0
        %3245 = vmatprep.subr.mxu0 0.0
        %3246 = vmatpush1.msra.mxu0 0.0
        %3247 = vmatprep.subr.mxu0 0.0
        %3248 = vmatpush1.msra.mxu0 0.0
        %3249 = vmatprep.subr.mxu0 0.0
        %3250 = vmatpush1.msra.mxu0 0.0
        %3251 = vmatprep.subr.mxu0 0.0
        %3252 = vmatpush1.msra.mxu0 0.0
        %3253 = vmatprep.subr.mxu0 0.0
        %3254 = vmatpush1.msra.mxu0 0.0
        %3255 = vmatprep.subr.mxu0 0.0
        %3256 = vmatpush1.msra.mxu0 0.0
        %3257 = vmatprep.subr.mxu0 0.0
        %3258 = vmatpush1.msra.mxu0 0.0
        %3259 = vmatprep.subr.mxu0 0.0
        %3260 = vmatpush1.msra.mxu0 0.0
        %3261 = vmatprep.subr.mxu0 0.0
        %3262 = vmatpush1.msra.mxu0 0.0
        %3263 = vmatprep.subr.mxu0 0.0
        %3264 = vmatpush1.msra.mxu0 0.0
        %3265 = vmatprep.subr.mxu0 0.0
        %3266 = vmatpush1.msra.mxu0 0.0
        %3267 = vmatprep.subr.mxu0 0.0
        %3268 = vmatpush1.msra.mxu0 0.0
        %3269 = vmatprep.subr.mxu0 0.0
        %3270 = vmatpush1.msra.mxu0 0.0
        %3271 = vmatprep.subr.mxu0 0.0
        %3272 = vmatpush1.msra.mxu0 0.0
        %3273 = vmatprep.subr.mxu0 0.0
        %3274 = vmatpush1.msra.mxu0 0.0
        %3275 = vmatprep.subr.mxu0 0.0
        %3276 = vmatpush1.msra.mxu0 0.0
        %3277 = vmatprep.subr.mxu0 0.0
        %3278 = vmatpush1.msra.mxu0 0.0
        %3279 = vmatprep.subr.mxu0 0.0
        %3280 = vmatpush1.msra.mxu0 0.0
        %3281 = vmatprep.subr.mxu0 0.0
        %3282 = vmatpush1.msra.mxu0 0.0
        %3283 = vmatprep.subr.mxu0 0.0
        %3284 = vmatpush1.msra.mxu0 0.0
        %3285 = vmatprep.subr.mxu0 0.0
        %3286 = vmatpush1.msra.mxu0 0.0
        %3287 = vmatprep.subr.mxu0 0.0
        %3288 = vmatpush1.msra.mxu0 0.0
        %3289 = vmatprep.mubr.f32.mxu0 0.0
        %3290 = vmatmul.mubr.f32.gmra.mrb[0].mxu0 %v3063
        %v3291 = vpop.f32.mrb[0].mxu0
        %v3292 = vadd.f32 %v3060, %v3291
        %v3293 = vpop.f32.mrb[0].mxu0
        %v3294 = vadd.f32 %v3060, %v3293
        %3295 = vdwg.mxu0
        %vm3296 = vcmp.gt.f32.partialorder %v3150, 0.0
        %vm3297 = vcmp.gt.f32.partialorder %v3152, 0.0
        %vm3298 = vcmp.gt.f32.partialorder %v3221, 0.0
        %vm3299 = vcmp.gt.f32.partialorder %v3223, 0.0
        %vm3300 = vcmp.gt.f32.partialorder %v3292, 0.0
        %vm3301 = vcmp.gt.f32.partialorder %v3294, 0.0
        %v3302 = vmul.f32 %v3150, 1.442695
        %v3303 = vpow.pop %v3302
        %v3304 = vmul.f32 %v3152, 1.442695
        %v3305 = vpow.pop %v3304
        %v3306 = vmul.f32 %v3221, 1.442695
        %v3307 = vpow.pop %v3306
        %v3308 = vmul.f32 %v3223, 1.442695
        %v3309 = vpow.pop %v3308
        %v3310 = vmul.f32 %v3292, 1.442695
        %v3311 = vpow.pop %v3310
        %v3312 = vmul.f32 %v3294, 1.442695
        %v3313 = vpow.pop %v3312
        %v3314 = vsub.f32 %v3303, 1.0
        %v3315 = vsub.f32 %v3305, 1.0
        %v3316 = vsub.f32 %v3307, 1.0
        %v3317 = vsub.f32 %v3309, 1.0
        %v3318 = vsub.f32 %v3311, 1.0
        %v3319 = vsub.f32 %v3313, 1.0
        %v3320 = vmul.f32 %v3314, 1.6732632
        %v3321 = vmul.f32 %v3315, 1.6732632
        %v3322 = vmul.f32 %v3316, 1.6732632
        %v3323 = vmul.f32 %v3317, 1.6732632
        %v3324 = vmul.f32 %v3318, 1.6732632
        %v3325 = vmul.f32 %v3319, 1.6732632
        %v3326 = vsel %vm3296, %v3150, %v3320
        %v3327 = vsel %vm3297, %v3152, %v3321
        %v3328 = vsel %vm3298, %v3221, %v3322
        %v3329 = vsel %vm3299, %v3223, %v3323
        %v3330 = vsel %vm3300, %v3292, %v3324
        %v3331 = vsel %vm3301, %v3294, %v3325
        %v3332 = vmul.f32 %v3326, 1.050701
        %v3333 = vmul.f32 %v3327, 1.050701
        %v3334 = vmul.f32 %v3328, 1.050701
        %v3335 = vmul.f32 %v3329, 1.050701
        %v3336 = vmul.f32 %v3330, 1.050701
        %v3337 = vmul.f32 %v3331, 1.050701
        %v3338 = vld [vmem:[%s4] sm:$0xff]
        %3340 = vset.pattern.permute.xlu0 0
        %3341 = vperm.xlu0 %3340, %v295
        %v3342 = vpop.permute.xlu0 %3341
        %vm3344 = vcmask 31744
        %v3346 = vsel %vm3344, %v3338, 0
        %v3349 = vsel %vm1284, %v3332, 0
        %v3352 = vsel %vm1284, %v3333, 0
        %v3355 = vsel %vm1284, %v3334, 0
        %v3358 = vsel %vm1284, %v3335, 0
        %v3361 = vsel %vm1284, %v3336, 0
        %v3364 = vsel %vm1284, %v3337, 0
        %3366 = vmatprep.subr.mxu0 %v3352
        %3367 = vmatpush1.msra.mxu0 %v3349
        %3368 = vmatprep.subr.mxu0 0.0
        %3369 = vmatpush1.msra.mxu0 0.0
        %3370 = vmatprep.subr.mxu0 0.0
        %3371 = vmatpush1.msra.mxu0 0.0
        %3372 = vmatprep.subr.mxu0 0.0
        %3373 = vmatpush1.msra.mxu0 0.0
        %3374 = vmatprep.subr.mxu0 0.0
        %3375 = vmatpush1.msra.mxu0 0.0
        %3376 = vmatprep.subr.mxu0 0.0
        %3377 = vmatpush1.msra.mxu0 0.0
        %3378 = vmatprep.subr.mxu0 0.0
        %3379 = vmatpush1.msra.mxu0 0.0
        %3380 = vmatprep.subr.mxu0 0.0
        %3381 = vmatpush1.msra.mxu0 0.0
        %3382 = vmatprep.subr.mxu0 0.0
        %3383 = vmatpush1.msra.mxu0 0.0
        %3384 = vmatprep.subr.mxu0 0.0
        %3385 = vmatpush1.msra.mxu0 0.0
        %3386 = vmatprep.subr.mxu0 0.0
        %3387 = vmatpush1.msra.mxu0 0.0
        %3388 = vmatprep.subr.mxu0 0.0
        %3389 = vmatpush1.msra.mxu0 0.0
        %3390 = vmatprep.subr.mxu0 0.0
        %3391 = vmatpush1.msra.mxu0 0.0
        %3392 = vmatprep.subr.mxu0 0.0
        %3393 = vmatpush1.msra.mxu0 0.0
        %3394 = vmatprep.subr.mxu0 0.0
        %3395 = vmatpush1.msra.mxu0 0.0
        %3396 = vmatprep.subr.mxu0 0.0
        %3397 = vmatpush1.msra.mxu0 0.0
        %3398 = vmatprep.subr.mxu0 0.0
        %3399 = vmatpush1.msra.mxu0 0.0
        %3400 = vmatprep.subr.mxu0 0.0
        %3401 = vmatpush1.msra.mxu0 0.0
        %3402 = vmatprep.subr.mxu0 0.0
        %3403 = vmatpush1.msra.mxu0 0.0
        %3404 = vmatprep.subr.mxu0 0.0
        %3405 = vmatpush1.msra.mxu0 0.0
        %3406 = vmatprep.subr.mxu0 0.0
        %3407 = vmatpush1.msra.mxu0 0.0
        %3408 = vmatprep.subr.mxu0 0.0
        %3409 = vmatpush1.msra.mxu0 0.0
        %3410 = vmatprep.subr.mxu0 0.0
        %3411 = vmatpush1.msra.mxu0 0.0
        %3412 = vmatprep.subr.mxu0 0.0
        %3413 = vmatpush1.msra.mxu0 0.0
        %3414 = vmatprep.subr.mxu0 0.0
        %3415 = vmatpush1.msra.mxu0 0.0
        %3416 = vmatprep.subr.mxu0 0.0
        %3417 = vmatpush1.msra.mxu0 0.0
        %3418 = vmatprep.subr.mxu0 0.0
        %3419 = vmatpush1.msra.mxu0 0.0
        %3420 = vmatprep.subr.mxu0 0.0
        %3421 = vmatpush1.msra.mxu0 0.0
        %3422 = vmatprep.subr.mxu0 0.0
        %3423 = vmatpush1.msra.mxu0 0.0
        %3424 = vmatprep.subr.mxu0 0.0
        %3425 = vmatpush1.msra.mxu0 0.0
        %3426 = vmatprep.subr.mxu0 0.0
        %3427 = vmatpush1.msra.mxu0 0.0
        %3428 = vmatprep.subr.mxu0 0.0
        %3429 = vmatpush1.msra.mxu0 0.0
        %3430 = vmatprep.mubr.f32.mxu0 0.0
        %3431 = vmatmul.mubr.f32.gmra.mrb[0].mxu0 %v3346
        %v3432 = vpop.f32.mrb[0].mxu0
        %v3433 = vadd.f32 %v3342, %v3432
        %v3434 = vpop.f32.mrb[0].mxu0
        %v3435 = vadd.f32 %v3342, %v3434
        %3436 = vdwg.mxu0
        %3437 = vmatprep.subr.mxu0 %v3358
        %3438 = vmatpush1.msra.mxu0 %v3355
        %3439 = vmatprep.subr.mxu0 0.0
        %3440 = vmatpush1.msra.mxu0 0.0
        %3441 = vmatprep.subr.mxu0 0.0
        %3442 = vmatpush1.msra.mxu0 0.0
        %3443 = vmatprep.subr.mxu0 0.0
        %3444 = vmatpush1.msra.mxu0 0.0
        %3445 = vmatprep.subr.mxu0 0.0
        %3446 = vmatpush1.msra.mxu0 0.0
        %3447 = vmatprep.subr.mxu0 0.0
        %3448 = vmatpush1.msra.mxu0 0.0
        %3449 = vmatprep.subr.mxu0 0.0
        %3450 = vmatpush1.msra.mxu0 0.0
        %3451 = vmatprep.subr.mxu0 0.0
        %3452 = vmatpush1.msra.mxu0 0.0
        %3453 = vmatprep.subr.mxu0 0.0
        %3454 = vmatpush1.msra.mxu0 0.0
        %3455 = vmatprep.subr.mxu0 0.0
        %3456 = vmatpush1.msra.mxu0 0.0
        %3457 = vmatprep.subr.mxu0 0.0
        %3458 = vmatpush1.msra.mxu0 0.0
        %3459 = vmatprep.subr.mxu0 0.0
        %3460 = vmatpush1.msra.mxu0 0.0
        %3461 = vmatprep.subr.mxu0 0.0
        %3462 = vmatpush1.msra.mxu0 0.0
        %3463 = vmatprep.subr.mxu0 0.0
        %3464 = vmatpush1.msra.mxu0 0.0
        %3465 = vmatprep.subr.mxu0 0.0
        %3466 = vmatpush1.msra.mxu0 0.0
        %3467 = vmatprep.subr.mxu0 0.0
        %3468 = vmatpush1.msra.mxu0 0.0
        %3469 = vmatprep.subr.mxu0 0.0
        %3470 = vmatpush1.msra.mxu0 0.0
        %3471 = vmatprep.subr.mxu0 0.0
        %3472 = vmatpush1.msra.mxu0 0.0
        %3473 = vmatprep.subr.mxu0 0.0
        %3474 = vmatpush1.msra.mxu0 0.0
        %3475 = vmatprep.subr.mxu0 0.0
        %3476 = vmatpush1.msra.mxu0 0.0
        %3477 = vmatprep.subr.mxu0 0.0
        %3478 = vmatpush1.msra.mxu0 0.0
        %3479 = vmatprep.subr.mxu0 0.0
        %3480 = vmatpush1.msra.mxu0 0.0
        %3481 = vmatprep.subr.mxu0 0.0
        %3482 = vmatpush1.msra.mxu0 0.0
        %3483 = vmatprep.subr.mxu0 0.0
        %3484 = vmatpush1.msra.mxu0 0.0
        %3485 = vmatprep.subr.mxu0 0.0
        %3486 = vmatpush1.msra.mxu0 0.0
        %3487 = vmatprep.subr.mxu0 0.0
        %3488 = vmatpush1.msra.mxu0 0.0
        %3489 = vmatprep.subr.mxu0 0.0
        %3490 = vmatpush1.msra.mxu0 0.0
        %3491 = vmatprep.subr.mxu0 0.0
        %3492 = vmatpush1.msra.mxu0 0.0
        %3493 = vmatprep.subr.mxu0 0.0
        %3494 = vmatpush1.msra.mxu0 0.0
        %3495 = vmatprep.subr.mxu0 0.0
        %3496 = vmatpush1.msra.mxu0 0.0
        %3497 = vmatprep.subr.mxu0 0.0
        %3498 = vmatpush1.msra.mxu0 0.0
        %3499 = vmatprep.subr.mxu0 0.0
        %3500 = vmatpush1.msra.mxu0 0.0
        %3501 = vmatprep.mubr.f32.mxu0 0.0
        %3502 = vmatmul.mubr.f32.gmra.mrb[0].mxu0 %v3346
        %v3503 = vpop.f32.mrb[0].mxu0
        %v3504 = vadd.f32 %v3342, %v3503
        %v3505 = vpop.f32.mrb[0].mxu0
        %v3506 = vadd.f32 %v3342, %v3505
        %3507 = vdwg.mxu0
        %3508 = vmatprep.subr.mxu0 %v3364
        %3509 = vmatpush1.msra.mxu0 %v3361
        %3510 = vmatprep.subr.mxu0 0.0
        %3511 = vmatpush1.msra.mxu0 0.0
        %3512 = vmatprep.subr.mxu0 0.0
        %3513 = vmatpush1.msra.mxu0 0.0
        %3514 = vmatprep.subr.mxu0 0.0
        %3515 = vmatpush1.msra.mxu0 0.0
        %3516 = vmatprep.subr.mxu0 0.0
        %3517 = vmatpush1.msra.mxu0 0.0
        %3518 = vmatprep.subr.mxu0 0.0
        %3519 = vmatpush1.msra.mxu0 0.0
        %3520 = vmatprep.subr.mxu0 0.0
        %3521 = vmatpush1.msra.mxu0 0.0
        %3522 = vmatprep.subr.mxu0 0.0
        %3523 = vmatpush1.msra.mxu0 0.0
        %3524 = vmatprep.subr.mxu0 0.0
        %3525 = vmatpush1.msra.mxu0 0.0
        %3526 = vmatprep.subr.mxu0 0.0
        %3527 = vmatpush1.msra.mxu0 0.0
        %3528 = vmatprep.subr.mxu0 0.0
        %3529 = vmatpush1.msra.mxu0 0.0
        %3530 = vmatprep.subr.mxu0 0.0
        %3531 = vmatpush1.msra.mxu0 0.0
        %3532 = vmatprep.subr.mxu0 0.0
        %3533 = vmatpush1.msra.mxu0 0.0
        %3534 = vmatprep.subr.mxu0 0.0
        %3535 = vmatpush1.msra.mxu0 0.0
        %3536 = vmatprep.subr.mxu0 0.0
        %3537 = vmatpush1.msra.mxu0 0.0
        %3538 = vmatprep.subr.mxu0 0.0
        %3539 = vmatpush1.msra.mxu0 0.0
        %3540 = vmatprep.subr.mxu0 0.0
        %3541 = vmatpush1.msra.mxu0 0.0
        %3542 = vmatprep.subr.mxu0 0.0
        %3543 = vmatpush1.msra.mxu0 0.0
        %3544 = vmatprep.subr.mxu0 0.0
        %3545 = vmatpush1.msra.mxu0 0.0
        %3546 = vmatprep.subr.mxu0 0.0
        %3547 = vmatpush1.msra.mxu0 0.0
        %3548 = vmatprep.subr.mxu0 0.0
        %3549 = vmatpush1.msra.mxu0 0.0
        %3550 = vmatprep.subr.mxu0 0.0
        %3551 = vmatpush1.msra.mxu0 0.0
        %3552 = vmatprep.subr.mxu0 0.0
        %3553 = vmatpush1.msra.mxu0 0.0
        %3554 = vmatprep.subr.mxu0 0.0
        %3555 = vmatpush1.msra.mxu0 0.0
        %3556 = vmatprep.subr.mxu0 0.0
        %3557 = vmatpush1.msra.mxu0 0.0
        %3558 = vmatprep.subr.mxu0 0.0
        %3559 = vmatpush1.msra.mxu0 0.0
        %3560 = vmatprep.subr.mxu0 0.0
        %3561 = vmatpush1.msra.mxu0 0.0
        %3562 = vmatprep.subr.mxu0 0.0
        %3563 = vmatpush1.msra.mxu0 0.0
        %3564 = vmatprep.subr.mxu0 0.0
        %3565 = vmatpush1.msra.mxu0 0.0
        %3566 = vmatprep.subr.mxu0 0.0
        %3567 = vmatpush1.msra.mxu0 0.0
        %3568 = vmatprep.subr.mxu0 0.0
        %3569 = vmatpush1.msra.mxu0 0.0
        %3570 = vmatprep.subr.mxu0 0.0
        %3571 = vmatpush1.msra.mxu0 0.0
        %3572 = vmatprep.mubr.f32.mxu0 0.0
        %3573 = vmatmul.mubr.f32.gmra.mrb[0].mxu0 %v3346
        %v3574 = vpop.f32.mrb[0].mxu0
        %v3575 = vadd.f32 %v3342, %v3574
        %v3576 = vpop.f32.mrb[0].mxu0
        %v3577 = vadd.f32 %v3342, %v3576
        %3578 = vdwg.mxu0
        %vm3579 = vcmp.gt.f32.partialorder %v3433, 0.0
        %vm3580 = vcmp.gt.f32.partialorder %v3435, 0.0
        %vm3581 = vcmp.gt.f32.partialorder %v3504, 0.0
        %vm3582 = vcmp.gt.f32.partialorder %v3506, 0.0
        %vm3583 = vcmp.gt.f32.partialorder %v3575, 0.0
        %vm3584 = vcmp.gt.f32.partialorder %v3577, 0.0
        %v3585 = vmul.f32 %v3433, 1.442695
        %v3586 = vpow.pop %v3585
        %v3587 = vmul.f32 %v3435, 1.442695
        %v3588 = vpow.pop %v3587
        %v3589 = vmul.f32 %v3504, 1.442695
        %v3590 = vpow.pop %v3589
        %v3591 = vmul.f32 %v3506, 1.442695
        %v3592 = vpow.pop %v3591
        %v3593 = vmul.f32 %v3575, 1.442695
        %v3594 = vpow.pop %v3593
        %v3595 = vmul.f32 %v3577, 1.442695
        %v3596 = vpow.pop %v3595
        %v3597 = vsub.f32 %v3586, 1.0
        %v3598 = vsub.f32 %v3588, 1.0
        %v3599 = vsub.f32 %v3590, 1.0
        %v3600 = vsub.f32 %v3592, 1.0
        %v3601 = vsub.f32 %v3594, 1.0
        %v3602 = vsub.f32 %v3596, 1.0
        %v3603 = vmul.f32 %v3597, 1.6732632
        %v3604 = vmul.f32 %v3598, 1.6732632
        %v3605 = vmul.f32 %v3599, 1.6732632
        %v3606 = vmul.f32 %v3600, 1.6732632
        %v3607 = vmul.f32 %v3601, 1.6732632
        %v3608 = vmul.f32 %v3602, 1.6732632
        %v3609 = vsel %vm3579, %v3433, %v3603
        %v3610 = vsel %vm3580, %v3435, %v3604
        %v3611 = vsel %vm3581, %v3504, %v3605
        %v3612 = vsel %vm3582, %v3506, %v3606
        %v3613 = vsel %vm3583, %v3575, %v3607
        %v3614 = vsel %vm3584, %v3577, %v3608
        %v3615 = vmul.f32 %v3609, 1.050701
        %v3616 = vmul.f32 %v3610, 1.050701
        %v3617 = vmul.f32 %v3611, 1.050701
        %v3618 = vmul.f32 %v3612, 1.050701
        %v3619 = vmul.f32 %v3613, 1.050701
        %v3620 = vmul.f32 %v3614, 1.050701
        %3621 = vset.pattern.permute.xlu0 1
        %3622 = vperm.xlu0 %3621, %v295
        %v3623 = vpop.permute.xlu0 %3622
        %v3625 = vmul.f32 %v3615, %v3623
        %v3626 = vmul.f32 %v3616, %v3623
        %v3627 = vmul.f32 %v3617, %v3623
        %v3628 = vmul.f32 %v3618, %v3623
        %v3629 = vmul.f32 %v3619, %v3623
        %v3630 = vmul.f32 %v3620, %v3623
        %3631 = vset.pattern.permute.xlu0 2
        %3632 = vperm.xlu0 %3631, %v295
        %v3633 = vpop.permute.xlu0 %3632
        %v3635 = vadd.f32 %v3625, %v3633
        %v3636 = vadd.f32 %v3626, %v3633
        %v3637 = vadd.f32 %v3627, %v3633
        %v3638 = vadd.f32 %v3628, %v3633
        %v3639 = vadd.f32 %v3629, %v3633
        %v3640 = vadd.f32 %v3630, %v3633
        %3641 = vst [vmem:[%s293] sm:$0xff] %v3635
        %3642 = vst [vmem:[%s293 + $0x8] sm:$0xff] %v3636
        %3643 = vst [vmem:[%s293 + $0x10] sm:$0xff] %v3637
        %3644 = vst [vmem:[%s293 + $0x18] sm:$0xff] %v3638
        %3645 = vst [vmem:[%s293 + $0x20] sm:$0xff] %v3639
        %3646 = vst [vmem:[%s293 + $0x28] sm:$0xff] %v3640
        %p3647 = scmp.lt.s32.totalorder %s19, 1
        %s3648 = scalar_select %p3647, %s19, 1
        %s3649 = smul.addr %s3648, 6
        %s3650 = smul.addr %s3649, 8
        %s3651 = scalar_lea.vmem %s7, %s3650
        // Predicated region
        $region53: #{upsample_conv_block3d_forward.1} parent=47 // pred_check
          %p3652 = pneg %p189
        $region54: #{upsample_conv_block3d_forward.1} parent=47 // pred_check_branch
          %3654 = sbr.rel (%p3652) target = $region56
        $region55: #{upsample_conv_block3d_forward.1} parent=47 // pred_region
          _
        $region56: #{upsample_conv_block3d_forward.1} parent=47 // pred_fallthru
          _
      $region48: #{upsample_conv_block3d_forward.1} parent=5 // pred_fallthru
        _
      %p3655 = scmp.le.s32.totalorder 2, %s14
      // Predicated region
      $region57: #{upsample_conv_block3d_forward.1} parent=5 // pred_check
        %p3656 = pneg %p3655
      $region58: #{upsample_conv_block3d_forward.1} parent=5 // pred_check_branch
        %3658 = sbr.rel (%p3656) target = $region60
      $region59: #{upsample_conv_block3d_forward.1} parent=5 // pred_region
        %s3659 = ssub.s32 %s14, 2
        // Predicated region
        $region61: #{upsample_conv_block3d_forward.1} parent=59 // pred_check
          %p3660 = pneg %p195
        $region62: #{upsample_conv_block3d_forward.1} parent=59 // pred_check_branch
          %3662 = sbr.rel (%p3660) target = $region64
        $region63: #{upsample_conv_block3d_forward.1} parent=59 // pred_region
          %p3663 = scmp.lt.s32.totalorder %s20, 1
          %s3664 = scalar_select %p3663, %s20, 1
          %s3665 = smul.addr %s3664, 6
          %s3666 = smul.addr %s3665, 8
          %s3667 = scalar_lea.vmem %s7, %s3666
        $region64: #{upsample_conv_block3d_forward.1} parent=59 // pred_fallthru
          _
      $region60: #{upsample_conv_block3d_forward.1} parent=5 // pred_fallthru
        _
    $region6: #{upsample_conv_block3d_forward.1} parent=1 // loop_footer
      %s18 = sadd.s32 1, %s14
    $region7: #{upsample_conv_block3d_forward.1} parent=1 // loop_footer_branch
      %13 = sbr.rel target = $region3
    $region8: #{upsample_conv_block3d_forward.1} parent=1 // loop_exit
      _
    %3668 = vsyncpa [#allocation3], 1
    %s3669 = scalar_lea.sflag [#allocation3], 1
    %3670 = vsyncpa %s3669, 1

</llo_original>
